<compile_context>
chip_gen: v7x
topology: tpu7x:2x2x1
jax: 0.10.0
libtpu: 0.0.40
codegen_flags: <defaults>
</compile_context>

<pallas_src>
import jax
import jax.numpy as jnp
from jax.experimental import pallas as pl
from jax.experimental.pallas import tpu as pltpu

_REFS_PER_LAYER = 10  # w_n, w_e, w_fn_a, w_fn_b, w_fe_a, w_fe_b, b_fn, b_fe, bn_scale, bn_shift
_LANE = 128


def _round_up(v, m):
    return ((v + m - 1) // m) * m


def _make_fused_kernel(num_layers, edge_tile):
    """Kernel body: statically unrolls `num_layers` layers; per layer the
    gather/scatter is an in-kernel loop over `edge_tile`-sized edge blocks."""
    f32 = jnp.float32
    bf16 = jnp.bfloat16
    TE = edge_tile

    def kernel(dstt_ref, eit_ref, x_ref, ea_ref, *rest):
        nlr = _REFS_PER_LAYER * num_layers
        lrefs = rest[:nlr]
        out_ref = rest[nlr]
        aggr_scr = rest[nlr + 1]     # [N, h2e_max]  f32  scatter accumulator
        eanxt_scr = rest[nlr + 2]    # [E, out_e_max] bf16 next-layer edge feats

        N = x_ref.shape[0]
        E = ea_ref.shape[0]
        n_tiles = E // TE

        # node-id iotas, built once and reused by every layer / edge tile
        iota_ne = jax.lax.broadcasted_iota(jnp.int32, (N, TE), 0)
        iota_en = jax.lax.broadcasted_iota(jnp.int32, (TE, N), 1)

        x = x_ref[...]                                       # [N, in_p] f32

        for l in range(num_layers):
            (wn_ref, we_ref, wfna_ref, wfnb_ref, wfea_ref, wfeb_ref,
             bfn_ref, bfe_ref, bns_ref, bnb_ref) = lrefs[
                 _REFS_PER_LAYER * l:_REFS_PER_LAYER * (l + 1)]
            h2n_p = wn_ref.shape[1]      # node_lin output width (padded)
            h2e_p = we_ref.shape[1]      # edge_lin output width (padded)
            oute_p = wfea_ref.shape[1]   # final_edge_lin output width (padded)
            ein_p = we_ref.shape[0]      # this layer's edge input width (padded)
            last = l == num_layers - 1

            # node_lin (bias-free) + ReLU; bf16 operands, f32 MXU accumulation.
            n1 = jnp.maximum(
                jnp.dot(x.astype(bf16), wn_ref[...],
                        preferred_element_type=f32), 0.0)    # [N, h2n_p]
            n1_bf = n1.astype(bf16)

            aggr_scr[...] = jnp.zeros_like(aggr_scr)

            def tile_step(t, carry):
                e0 = pl.multiple_of(t * TE, TE)

                # edge_lin + ReLU on this edge tile.
                if l == 0:
                    ea_blk = ea_ref[pl.ds(e0, TE), :].astype(bf16)
                else:
                    ea_blk = eanxt_scr[pl.ds(e0, TE), 0:ein_p]       # bf16
                e1 = jnp.maximum(
                    jnp.dot(ea_blk, we_ref[...],
                            preferred_element_type=f32), 0.0)        # [TE, h2e_p]
                e1_bf = e1.astype(bf16)

                # scatter-sum (aggr='sum'): dst one-hot in [N, TE] orientation
                # so the contraction over the tile is a lane contraction.
                dst_row = dstt_ref[pl.ds(t, 1), :]                   # [1, TE]
                dst_oh = (iota_ne == dst_row).astype(f32).astype(bf16)
                aggr_scr[:, 0:h2e_p] += jnp.dot(
                    dst_oh, e1_bf, preferred_element_type=f32)

                if not last:
                    # (src + dst) incidence in [TE, N] orientation -> standard
                    # lane contraction against n1 (no dim-0 dot_general).
                    src_col = eit_ref[pl.ds(e0, TE), 0:1]            # [TE, 1]
                    dst_col = eit_ref[pl.ds(e0, TE), 1:2]            # [TE, 1]
                    inc = ((iota_en == src_col).astype(f32)
                           + (iota_en == dst_col).astype(f32)).astype(bf16)
                    gsum = jnp.dot(inc, n1_bf,
                                   preferred_element_type=f32)       # [TE, h2n_p]
                    # cat([n1[src]+n1[dst], e1]) @ Wfe == gsum@Wfe_a + e1@Wfe_b
                    edge2 = (jnp.dot(gsum.astype(bf16), wfea_ref[...],
                                     preferred_element_type=f32)
                             + jnp.dot(e1_bf, wfeb_ref[...],
                                       preferred_element_type=f32)
                             + bfe_ref[...])
                    eanxt_scr[pl.ds(e0, TE), 0:oute_p] = jnp.maximum(
                        edge2, 0.0).astype(bf16)
                return carry

            jax.lax.fori_loop(0, n_tiles, tile_step, 0)

            # cat([aggr, n1]) @ Wfn == aggr @ Wfn_a + n1 @ Wfn_b
            aggr_bf = aggr_scr[:, 0:h2e_p].astype(bf16)
            node2 = (jnp.dot(aggr_bf, wfna_ref[...], preferred_element_type=f32)
                     + jnp.dot(n1_bf, wfnb_ref[...], preferred_element_type=f32)
                     + bfn_ref[...])
            node2 = jnp.maximum(node2, 0.0)
            # BatchNorm1d (eval), pre-reduced to per-channel scale/shift.
            x = node2 * bns_ref[...] + bnb_ref[...]

        out_ref[...] = x

    return kernel


@jax.jit
def gnn_encoder_forward(x, edge_index, edge_attr, layer_params):
    num_layers = len(layer_params)
    N, in_n = x.shape
    E, in_e = edge_attr.shape
    eps = 1e-5

    # ---- row padding (lane/sublane alignment) and edge tile choice ----
    N_pad = _round_up(N, _LANE)
    E_pad = _round_up(E, _LANE)
    TE = 512 if E_pad % 512 == 0 else (256 if E_pad % 256 == 0 else _LANE)
    n_tiles = E_pad // TE

    in_n_p = _round_up(in_n, _LANE)
    in_e_p = _round_up(in_e, _LANE)

    x_p = jnp.zeros((N_pad, in_n_p), jnp.float32).at[:N, :in_n].set(
        x.astype(jnp.float32))
    ea_p = jnp.zeros((E_pad, in_e_p), jnp.float32).at[:E, :in_e].set(
        edge_attr.astype(jnp.float32))
    # padded edges get src = dst = N_pad (out of range -> all-zero one-hot).
    ei = jnp.full((2, E_pad), N_pad, jnp.int32).at[:, :E].set(
        edge_index.astype(jnp.int32))
    dst_tiles = ei[1].reshape(n_tiles, TE)   # row-oriented dst ids, per tile
    ei_t = jnp.transpose(ei)                 # [E_pad, 2] column-oriented ids

    def pad2(a, r, c, fill=0.0, dtype=jnp.float32):
        out = jnp.full((r, c), fill, jnp.float32)
        out = out.at[:a.shape[0], :a.shape[1]].set(a.astype(jnp.float32))
        return out.astype(dtype)

    flat = []
    cur_in_n, cur_in_e = in_n_p, in_e_p
    aggr_w, eanxt_w = _LANE, _LANE
    flops = 0
    for li, p in enumerate(layer_params):
        h2n, h2e = p["w_n"].shape[1], p["w_e"].shape[1]
        out_n, out_e = p["w_fn"].shape[1], p["w_fe"].shape[1]
        h2n_p, h2e_p = _round_up(h2n, _LANE), _round_up(h2e, _LANE)
        out_n_p, out_e_p = _round_up(out_n, _LANE), _round_up(out_e, _LANE)
        aggr_w = max(aggr_w, h2e_p)
        if li < num_layers - 1:
            eanxt_w = max(eanxt_w, out_e_p)

        scale = p["bn_gamma"].reshape(1, -1) * jax.lax.rsqrt(
            p["bn_var"].reshape(1, -1) + eps)
        shift = p["bn_beta"].reshape(1, -1) - p["bn_mean"].reshape(1, -1) * scale

        flat += [
            pad2(p["w_n"], cur_in_n, h2n_p, dtype=jnp.bfloat16),
            pad2(p["w_e"], cur_in_e, h2e_p, dtype=jnp.bfloat16),
            pad2(p["w_fn"][:h2e, :], h2e_p, out_n_p, dtype=jnp.bfloat16),  # aggr part
            pad2(p["w_fn"][h2e:, :], h2n_p, out_n_p, dtype=jnp.bfloat16),  # n1 part
            pad2(p["w_fe"][:h2n, :], h2n_p, out_e_p, dtype=jnp.bfloat16),  # gsum part
            pad2(p["w_fe"][h2n:, :], h2e_p, out_e_p, dtype=jnp.bfloat16),  # e1 part
            pad2(p["b_fn"].reshape(1, -1), 1, out_n_p),
            pad2(p["b_fe"].reshape(1, -1), 1, out_e_p),
            pad2(scale, 1, out_n_p, fill=1.0),
            pad2(shift, 1, out_n_p),
        ]
        flops += (2 * N_pad * cur_in_n * h2n_p + 2 * E_pad * cur_in_e * h2e_p
                  + 2 * N_pad * E_pad * h2e_p + 4 * N_pad * h2n_p * out_n_p)
        if li < num_layers - 1:
            flops += 2 * E_pad * N_pad * h2n_p + 4 * E_pad * h2n_p * out_e_p
        cur_in_n, cur_in_e = out_n_p, out_e_p

    out_n_last = layer_params[-1]["w_fn"].shape[1]
    out_last_p = _round_up(out_n_last, _LANE)

    args = (dst_tiles, ei_t, x_p, ea_p, *flat)

    # VMEM budget sized from the actual resident set (+ per-tile transients).
    def nbytes(a):
        return int(a.size) * jnp.dtype(a.dtype).itemsize

    arg_bytes = sum(nbytes(a) for a in args)
    out_bytes = N_pad * out_last_p * 4
    scratch_bytes = N_pad * aggr_w * 4 + E_pad * eanxt_w * 2
    transient = (2 * N_pad * TE * 6                      # incidence blocks (f32+bf16)
                 + 4 * TE * max(aggr_w, eanxt_w) * 4     # e1/gsum/edge2 tiles
                 + 4 * N_pad * aggr_w * 4                # n1/node2/x values
                 + E_pad * _LANE * 4)                    # ei_t lane padding
    est = arg_bytes + out_bytes + scratch_bytes + transient
    vmem_limit = int(min(64 * 2 ** 20, max(32 * 2 ** 20, 2 * est)))

    cost = pl.CostEstimate(flops=int(flops), transcendentals=0,
                           bytes_accessed=int(arg_bytes + out_bytes))

    vmem = pl.BlockSpec(memory_space=pltpu.MemorySpace.VMEM)
    out = pl.pallas_call(
        _make_fused_kernel(num_layers, TE),
        out_shape=jax.ShapeDtypeStruct((N_pad, out_last_p), jnp.float32),
        in_specs=[vmem] * len(args),
        out_specs=vmem,
        scratch_shapes=[pltpu.VMEM((N_pad, aggr_w), jnp.float32),
                        pltpu.VMEM((E_pad, eanxt_w), jnp.bfloat16)],
        compiler_params=pltpu.CompilerParams(vmem_limit_bytes=vmem_limit),
        cost_estimate=cost,
    )(*args)
    return out[:N, :out_n_last]


# ---------- pure-JAX reference (correctness sanity check) ----------
def _ref_layer(x, edge_attr, edge_index, p):
    n1 = jax.nn.relu(x @ p["w_n"])
    e1 = jax.nn.relu(edge_attr @ p["w_e"])
    src, dst = edge_index[0], edge_index[1]
    aggr = jnp.zeros((x.shape[0], e1.shape[1]), jnp.float32).at[dst].add(e1)
    node2 = jnp.concatenate([aggr, n1], -1)
    edge2 = jnp.concatenate([n1[src] + n1[dst], e1], -1)
    node2 = jax.nn.relu(node2 @ p["w_fn"] + p["b_fn"])
    edge2 = jax.nn.relu(edge2 @ p["w_fe"] + p["b_fe"])
    node2 = (node2 - p["bn_mean"]) / jnp.sqrt(p["bn_var"] + 1e-5) * p["bn_gamma"] + p["bn_beta"]
    return node2, edge2


def _ref_forward(x, edge_index, edge_attr, layer_params):
    for p in layer_params:
        x, edge_attr = _ref_layer(x, edge_attr, edge_index, p)
    return x


# ---------- deterministic parameter construction ----------
def make_layer_params(key, in_node, in_edge, out_node, out_edge):
    assert out_node == out_edge, "module's cat semantics require equal out dims"
    h2 = out_node // 2
    ks = jax.random.split(key, 10)
    scale = 0.2
    return {
        "w_n":  scale * jax.random.normal(ks[0], (in_node, h2), jnp.float32),
        "w_e":  scale * jax.random.normal(ks[1], (in_edge, h2), jnp.float32),
        "w_fn": scale * jax.random.normal(ks[2], (out_node, out_node), jnp.float32),
        "b_fn": scale * jax.random.normal(ks[3], (1, out_node), jnp.float32),
        "w_fe": scale * jax.random.normal(ks[4], (out_edge, out_edge), jnp.float32),
        "b_fe": scale * jax.random.normal(ks[5], (1, out_edge), jnp.float32),
        # BatchNorm1d running stats / affine params (eval mode).
        "bn_gamma": 1.0 + 0.1 * jax.random.normal(ks[6], (1, out_node), jnp.float32),
        "bn_beta":  0.1 * jax.random.normal(ks[7], (1, out_node), jnp.float32),
        "bn_mean":  0.1 * jax.random.normal(ks[8], (1, out_node), jnp.float32),
        "bn_var":   jnp.abs(1.0 + 0.1 * jax.random.normal(ks[9], (1, out_node), jnp.float32)),
    }


if __name__ == "__main__":
    key = jax.random.PRNGKey(0)
    k_x, k_ea, k_ei, k_p0, k_p1 = jax.random.split(key, 5)

    # small shapes consistent with the module
    N, E = 8, 16                  # nodes, edges
    in_node, in_edge = 8, 8
    hidden = [16]
    out_node = out_edge = 16

    x = jax.random.normal(k_x, (N, in_node), jnp.float32)
    edge_attr = jax.random.normal(k_ea, (E, in_edge), jnp.float32)
    edge_index = jax.random.randint(k_ei, (2, E), 0, N, jnp.int32)

    # GNNEncoder.__init__ layer dims for num_layers=2, hidden_channels=[16]
    layer_params = [
        make_layer_params(k_p0, in_node, in_edge, hidden[0], hidden[0]),
        make_layer_params(k_p1, hidden[-1], hidden[-1], out_node, out_edge),
    ]

    out = gnn_encoder_forward(x, edge_index, edge_attr, layer_params)
    out = jax.block_until_ready(out)

    ref = _ref_forward(x, edge_index, edge_attr, layer_params)
    assert out.shape == (N, out_node)
    # bf16 matmul operands (f32 accumulation) => slightly looser tolerance vs f32 ref
    err = float(jnp.max(jnp.abs(out - ref)))
    assert jnp.allclose(out, ref, atol=3e-2, rtol=3e-2), f"kernel mismatch, max|d|={err}"

    print("KERNEL_OK")
</pallas_src>

<mosaic_0001>
module attributes {stable_mosaic.version = 11 : i64} {
  func.func @kernel(%arg0: memref<1x128xi32, #tpu.memory_space<vmem>>, %arg1: memref<128x2xi32, #tpu.memory_space<vmem>>, %arg2: memref<128x128xf32, #tpu.memory_space<vmem>>, %arg3: memref<128x128xf32, #tpu.memory_space<vmem>>, %arg4: memref<128x128xbf16, #tpu.memory_space<vmem>>, %arg5: memref<128x128xbf16, #tpu.memory_space<vmem>>, %arg6: memref<128x128xbf16, #tpu.memory_space<vmem>>, %arg7: memref<128x128xbf16, #tpu.memory_space<vmem>>, %arg8: memref<128x128xbf16, #tpu.memory_space<vmem>>, %arg9: memref<128x128xbf16, #tpu.memory_space<vmem>>, %arg10: memref<1x128xf32, #tpu.memory_space<vmem>>, %arg11: memref<1x128xf32, #tpu.memory_space<vmem>>, %arg12: memref<1x128xf32, #tpu.memory_space<vmem>>, %arg13: memref<1x128xf32, #tpu.memory_space<vmem>>, %arg14: memref<128x128xbf16, #tpu.memory_space<vmem>>, %arg15: memref<128x128xbf16, #tpu.memory_space<vmem>>, %arg16: memref<128x128xbf16, #tpu.memory_space<vmem>>, %arg17: memref<128x128xbf16, #tpu.memory_space<vmem>>, %arg18: memref<128x128xbf16, #tpu.memory_space<vmem>>, %arg19: memref<128x128xbf16, #tpu.memory_space<vmem>>, %arg20: memref<1x128xf32, #tpu.memory_space<vmem>>, %arg21: memref<1x128xf32, #tpu.memory_space<vmem>>, %arg22: memref<1x128xf32, #tpu.memory_space<vmem>>, %arg23: memref<1x128xf32, #tpu.memory_space<vmem>>, %arg24: memref<128x128xf32, #tpu.memory_space<vmem>>, %arg25: memref<128x128xf32, #tpu.memory_space<vmem>>, %arg26: memref<128x128xbf16, #tpu.memory_space<vmem>>) attributes {dimension_semantics = [], scalar_prefetch = 0 : i64, scratch_operands = 2 : i64, tpu.core_type = #tpu.core_type<tc>} {
    %0 = tpu.iota {dimensions = array<i32: 0>} : vector<128x128xi32>
    %1 = tpu.iota {dimensions = array<i32: 1>} : vector<128x128xi32>
    %c0 = arith.constant 0 : index
    %c0_0 = arith.constant 0 : index
    %2 = vector.load %arg2[%c0, %c0_0] : memref<128x128xf32, #tpu.memory_space<vmem>>, vector<128x128xf32>
    %3 = arith.truncf %2 : vector<128x128xf32> to vector<128x128xbf16>
    %c0_1 = arith.constant 0 : index
    %c0_2 = arith.constant 0 : index
    %4 = vector.load %arg4[%c0_1, %c0_2] : memref<128x128xbf16, #tpu.memory_space<vmem>>, vector<128x128xbf16>
    %cst = arith.constant dense<0.000000e+00> : vector<128x128xf32>
    %5 = tpu.matmul %3, %4, %cst {dimension_numbers = #tpu.dot_dimension_numbers<[1], [0], [0], [1], [0, 0, 1, 1], [], []>} : vector<128x128xbf16>, vector<128x128xbf16>, vector<128x128xf32> -> vector<128x128xf32>
    %cst_3 = arith.constant 0.000000e+00 : f32
    %6 = vector.broadcast %cst_3 : f32 to vector<128x128xf32>
    %7 = arith.maximumf %5, %6 : vector<128x128xf32>
    %8 = arith.truncf %7 : vector<128x128xf32> to vector<128x128xbf16>
    %cst_4 = arith.constant 0.000000e+00 : f32
    %9 = vector.broadcast %cst_4 : f32 to vector<128x128xf32>
    %c0_5 = arith.constant 0 : index
    %c0_6 = arith.constant 0 : index
    %10 = vector.load %arg25[%c0_5, %c0_6] : memref<128x128xf32, #tpu.memory_space<vmem>>, vector<128x128xf32>
    tpu.vector_store %arg25[%c0_5, %c0_6], %9 {strides = array<i32>} : memref<128x128xf32, #tpu.memory_space<vmem>>, vector<128x128xf32>,
    %c0_i32 = arith.constant 0 : i32
    %c128_i32 = arith.constant 128 : i32
    %11 = arith.muli %c0_i32, %c128_i32 : i32
    %12 = tpu.assume_multiple %11, 128 : i32
    %13 = arith.index_cast %12 : i32 to index
    %c0_7 = arith.constant 0 : index
    %14 = vector.load %arg3[%13, %c0_7] : memref<128x128xf32, #tpu.memory_space<vmem>>, vector<128x128xf32>
    %15 = arith.truncf %14 : vector<128x128xf32> to vector<128x128xbf16>
    %c0_8 = arith.constant 0 : index
    %c0_9 = arith.constant 0 : index
    %16 = vector.load %arg5[%c0_8, %c0_9] : memref<128x128xbf16, #tpu.memory_space<vmem>>, vector<128x128xbf16>
    %cst_10 = arith.constant dense<0.000000e+00> : vector<128x128xf32>
    %17 = tpu.matmul %15, %16, %cst_10 {dimension_numbers = #tpu.dot_dimension_numbers<[1], [0], [0], [1], [0, 0, 1, 1], [], []>} : vector<128x128xbf16>, vector<128x128xbf16>, vector<128x128xf32> -> vector<128x128xf32>
    %cst_11 = arith.constant 0.000000e+00 : f32
    %18 = vector.broadcast %cst_11 : f32 to vector<128x128xf32>
    %19 = arith.maximumf %17, %18 : vector<128x128xf32>
    %20 = arith.truncf %19 : vector<128x128xf32> to vector<128x128xbf16>
    %21 = arith.index_cast %c0_i32 : i32 to index
    %c0_12 = arith.constant 0 : index
    %22 = vector.load %arg0[%21, %c0_12] : memref<1x128xi32, #tpu.memory_space<vmem>>, vector<1x128xi32>
    %23 = vector.broadcast %22 : vector<1x128xi32> to vector<128x128xi32>
    %24 = arith.cmpi eq, %0, %23 : vector<128x128xi32>
    %25 = arith.extui %24 : vector<128x128xi1> to vector<128x128xi32>
    %26 = arith.sitofp %25 : vector<128x128xi32> to vector<128x128xf32>
    %27 = arith.truncf %26 : vector<128x128xf32> to vector<128x128xbf16>
    %c0_13 = arith.constant 0 : index
    %c0_14 = arith.constant 0 : index
    %28 = vector.load %arg25[%c0_13, %c0_14] : memref<128x128xf32, #tpu.memory_space<vmem>>, vector<128x128xf32>
    %cst_15 = arith.constant dense<0.000000e+00> : vector<128x128xf32>
    %29 = tpu.matmul %27, %20, %cst_15 {dimension_numbers = #tpu.dot_dimension_numbers<[1], [0], [0], [1], [0, 0, 1, 1], [], []>} : vector<128x128xbf16>, vector<128x128xbf16>, vector<128x128xf32> -> vector<128x128xf32>
    %30 = arith.addf %28, %29 : vector<128x128xf32>
    %c0_16 = arith.constant 0 : index
    %c0_17 = arith.constant 0 : index
    %31 = vector.load %arg25[%c0_16, %c0_17] : memref<128x128xf32, #tpu.memory_space<vmem>>, vector<128x128xf32>
    tpu.vector_store %arg25[%c0_16, %c0_17], %30 {strides = array<i32>} : memref<128x128xf32, #tpu.memory_space<vmem>>, vector<128x128xf32>,
    %32 = arith.index_cast %12 : i32 to index
    %c0_18 = arith.constant 0 : index
    %33 = vector.load %arg1[%32, %c0_18] : memref<128x2xi32, #tpu.memory_space<vmem>>, vector<128x1xi32>
    %34 = arith.index_cast %12 : i32 to index
    %c1 = arith.constant 1 : index
    %35 = vector.load %arg1[%34, %c1] : memref<128x2xi32, #tpu.memory_space<vmem>>, vector<128x1xi32>
    %36 = vector.broadcast %33 : vector<128x1xi32> to vector<128x128xi32>
    %37 = arith.cmpi eq, %1, %36 : vector<128x128xi32>
    %38 = arith.extui %37 : vector<128x128xi1> to vector<128x128xi32>
    %39 = arith.sitofp %38 : vector<128x128xi32> to vector<128x128xf32>
    %40 = vector.broadcast %35 : vector<128x1xi32> to vector<128x128xi32>
    %41 = arith.cmpi eq, %1, %40 : vector<128x128xi32>
    %42 = arith.extui %41 : vector<128x128xi1> to vector<128x128xi32>
    %43 = arith.sitofp %42 : vector<128x128xi32> to vector<128x128xf32>
    %44 = arith.addf %39, %43 : vector<128x128xf32>
    %45 = arith.truncf %44 : vector<128x128xf32> to vector<128x128xbf16>
    %cst_19 = arith.constant dense<0.000000e+00> : vector<128x128xf32>
    %46 = tpu.matmul %45, %8, %cst_19 {dimension_numbers = #tpu.dot_dimension_numbers<[1], [0], [0], [1], [0, 0, 1, 1], [], []>} : vector<128x128xbf16>, vector<128x128xbf16>, vector<128x128xf32> -> vector<128x128xf32>
    %47 = arith.truncf %46 : vector<128x128xf32> to vector<128x128xbf16>
    %c0_20 = arith.constant 0 : index
    %c0_21 = arith.constant 0 : index
    %48 = vector.load %arg8[%c0_20, %c0_21] : memref<128x128xbf16, #tpu.memory_space<vmem>>, vector<128x128xbf16>
    %cst_22 = arith.constant dense<0.000000e+00> : vector<128x128xf32>
    %49 = tpu.matmul %47, %48, %cst_22 {dimension_numbers = #tpu.dot_dimension_numbers<[1], [0], [0], [1], [0, 0, 1, 1], [], []>} : vector<128x128xbf16>, vector<128x128xbf16>, vector<128x128xf32> -> vector<128x128xf32>
    %c0_23 = arith.constant 0 : index
    %c0_24 = arith.constant 0 : index
    %50 = vector.load %arg9[%c0_23, %c0_24] : memref<128x128xbf16, #tpu.memory_space<vmem>>, vector<128x128xbf16>
    %cst_25 = arith.constant dense<0.000000e+00> : vector<128x128xf32>
    %51 = tpu.matmul %20, %50, %cst_25 {dimension_numbers = #tpu.dot_dimension_numbers<[1], [0], [0], [1], [0, 0, 1, 1], [], []>} : vector<128x128xbf16>, vector<128x128xbf16>, vector<128x128xf32> -> vector<128x128xf32>
    %52 = arith.addf %49, %51 : vector<128x128xf32>
    %c0_26 = arith.constant 0 : index
    %c0_27 = arith.constant 0 : index
    %53 = vector.load %arg11[%c0_26, %c0_27] : memref<1x128xf32, #tpu.memory_space<vmem>>, vector<1x128xf32>
    %54 = vector.broadcast %53 : vector<1x128xf32> to vector<128x128xf32>
    %55 = arith.addf %52, %54 : vector<128x128xf32>
    %cst_28 = arith.constant 0.000000e+00 : f32
    %56 = vector.broadcast %cst_28 : f32 to vector<128x128xf32>
    %57 = arith.maximumf %55, %56 : vector<128x128xf32>
    %58 = arith.truncf %57 : vector<128x128xf32> to vector<128x128xbf16>
    %59 = arith.index_cast %12 : i32 to index
    %c0_29 = arith.constant 0 : index
    %60 = vector.load %arg26[%59, %c0_29] : memref<128x128xbf16, #tpu.memory_space<vmem>>, vector<128x128xbf16>
    tpu.vector_store %arg26[%59, %c0_29], %58 {strides = array<i32>} : memref<128x128xbf16, #tpu.memory_space<vmem>>, vector<128x128xbf16>,
    %c1_i32 = arith.constant 1 : i32
    %c0_30 = arith.constant 0 : index
    %c0_31 = arith.constant 0 : index
    %61 = vector.load %arg25[%c0_30, %c0_31] : memref<128x128xf32, #tpu.memory_space<vmem>>, vector<128x128xf32>
    %62 = arith.truncf %61 : vector<128x128xf32> to vector<128x128xbf16>
    %c0_32 = arith.constant 0 : index
    %c0_33 = arith.constant 0 : index
    %63 = vector.load %arg6[%c0_32, %c0_33] : memref<128x128xbf16, #tpu.memory_space<vmem>>, vector<128x128xbf16>
    %cst_34 = arith.constant dense<0.000000e+00> : vector<128x128xf32>
    %64 = tpu.matmul %62, %63, %cst_34 {dimension_numbers = #tpu.dot_dimension_numbers<[1], [0], [0], [1], [0, 0, 1, 1], [], []>} : vector<128x128xbf16>, vector<128x128xbf16>, vector<128x128xf32> -> vector<128x128xf32>
    %c0_35 = arith.constant 0 : index
    %c0_36 = arith.constant 0 : index
    %65 = vector.load %arg7[%c0_35, %c0_36] : memref<128x128xbf16, #tpu.memory_space<vmem>>, vector<128x128xbf16>
    %cst_37 = arith.constant dense<0.000000e+00> : vector<128x128xf32>
    %66 = tpu.matmul %8, %65, %cst_37 {dimension_numbers = #tpu.dot_dimension_numbers<[1], [0], [0], [1], [0, 0, 1, 1], [], []>} : vector<128x128xbf16>, vector<128x128xbf16>, vector<128x128xf32> -> vector<128x128xf32>
    %67 = arith.addf %64, %66 : vector<128x128xf32>
    %c0_38 = arith.constant 0 : index
    %c0_39 = arith.constant 0 : index
    %68 = vector.load %arg10[%c0_38, %c0_39] : memref<1x128xf32, #tpu.memory_space<vmem>>, vector<1x128xf32>
    %69 = vector.broadcast %68 : vector<1x128xf32> to vector<128x128xf32>
    %70 = arith.addf %67, %69 : vector<128x128xf32>
    %cst_40 = arith.constant 0.000000e+00 : f32
    %71 = vector.broadcast %cst_40 : f32 to vector<128x128xf32>
    %72 = arith.maximumf %70, %71 : vector<128x128xf32>
    %c0_41 = arith.constant 0 : index
    %c0_42 = arith.constant 0 : index
    %73 = vector.load %arg12[%c0_41, %c0_42] : memref<1x128xf32, #tpu.memory_space<vmem>>, vector<1x128xf32>
    %74 = vector.broadcast %73 : vector<1x128xf32> to vector<128x128xf32>
    %75 = arith.mulf %72, %74 : vector<128x128xf32>
    %c0_43 = arith.constant 0 : index
    %c0_44 = arith.constant 0 : index
    %76 = vector.load %arg13[%c0_43, %c0_44] : memref<1x128xf32, #tpu.memory_space<vmem>>, vector<1x128xf32>
    %77 = vector.broadcast %76 : vector<1x128xf32> to vector<128x128xf32>
    %78 = arith.addf %75, %77 : vector<128x128xf32>
    %79 = arith.truncf %78 : vector<128x128xf32> to vector<128x128xbf16>
    %c0_45 = arith.constant 0 : index
    %c0_46 = arith.constant 0 : index
    %80 = vector.load %arg14[%c0_45, %c0_46] : memref<128x128xbf16, #tpu.memory_space<vmem>>, vector<128x128xbf16>
    %cst_47 = arith.constant dense<0.000000e+00> : vector<128x128xf32>
    %81 = tpu.matmul %79, %80, %cst_47 {dimension_numbers = #tpu.dot_dimension_numbers<[1], [0], [0], [1], [0, 0, 1, 1], [], []>} : vector<128x128xbf16>, vector<128x128xbf16>, vector<128x128xf32> -> vector<128x128xf32>
    %cst_48 = arith.constant 0.000000e+00 : f32
    %82 = vector.broadcast %cst_48 : f32 to vector<128x128xf32>
    %83 = arith.maximumf %81, %82 : vector<128x128xf32>
    %84 = arith.truncf %83 : vector<128x128xf32> to vector<128x128xbf16>
    %cst_49 = arith.constant 0.000000e+00 : f32
    %85 = vector.broadcast %cst_49 : f32 to vector<128x128xf32>
    %c0_50 = arith.constant 0 : index
    %c0_51 = arith.constant 0 : index
    %86 = vector.load %arg25[%c0_50, %c0_51] : memref<128x128xf32, #tpu.memory_space<vmem>>, vector<128x128xf32>
    tpu.vector_store %arg25[%c0_50, %c0_51], %85 {strides = array<i32>} : memref<128x128xf32, #tpu.memory_space<vmem>>, vector<128x128xf32>,
    %c0_i32_52 = arith.constant 0 : i32
    %c128_i32_53 = arith.constant 128 : i32
    %87 = arith.muli %c0_i32_52, %c128_i32_53 : i32
    %88 = tpu.assume_multiple %87, 128 : i32
    %89 = arith.index_cast %88 : i32 to index
    %c0_54 = arith.constant 0 : index
    %90 = vector.load %arg26[%89, %c0_54] : memref<128x128xbf16, #tpu.memory_space<vmem>>, vector<128x128xbf16>
    %c0_55 = arith.constant 0 : index
    %c0_56 = arith.constant 0 : index
    %91 = vector.load %arg15[%c0_55, %c0_56] : memref<128x128xbf16, #tpu.memory_space<vmem>>, vector<128x128xbf16>
    %cst_57 = arith.constant dense<0.000000e+00> : vector<128x128xf32>
    %92 = tpu.matmul %90, %91, %cst_57 {dimension_numbers = #tpu.dot_dimension_numbers<[1], [0], [0], [1], [0, 0, 1, 1], [], []>} : vector<128x128xbf16>, vector<128x128xbf16>, vector<128x128xf32> -> vector<128x128xf32>
    %cst_58 = arith.constant 0.000000e+00 : f32
    %93 = vector.broadcast %cst_58 : f32 to vector<128x128xf32>
    %94 = arith.maximumf %92, %93 : vector<128x128xf32>
    %95 = arith.truncf %94 : vector<128x128xf32> to vector<128x128xbf16>
    %96 = arith.index_cast %c0_i32_52 : i32 to index
    %c0_59 = arith.constant 0 : index
    %97 = vector.load %arg0[%96, %c0_59] : memref<1x128xi32, #tpu.memory_space<vmem>>, vector<1x128xi32>
    %98 = vector.broadcast %97 : vector<1x128xi32> to vector<128x128xi32>
    %99 = arith.cmpi eq, %0, %98 : vector<128x128xi32>
    %100 = arith.extui %99 : vector<128x128xi1> to vector<128x128xi32>
    %101 = arith.sitofp %100 : vector<128x128xi32> to vector<128x128xf32>
    %102 = arith.truncf %101 : vector<128x128xf32> to vector<128x128xbf16>
    %c0_60 = arith.constant 0 : index
    %c0_61 = arith.constant 0 : index
    %103 = vector.load %arg25[%c0_60, %c0_61] : memref<128x128xf32, #tpu.memory_space<vmem>>, vector<128x128xf32>
    %cst_62 = arith.constant dense<0.000000e+00> : vector<128x128xf32>
    %104 = tpu.matmul %102, %95, %cst_62 {dimension_numbers = #tpu.dot_dimension_numbers<[1], [0], [0], [1], [0, 0, 1, 1], [], []>} : vector<128x128xbf16>, vector<128x128xbf16>, vector<128x128xf32> -> vector<128x128xf32>
    %105 = arith.addf %103, %104 : vector<128x128xf32>
    %c0_63 = arith.constant 0 : index
    %c0_64 = arith.constant 0 : index
    %106 = vector.load %arg25[%c0_63, %c0_64] : memref<128x128xf32, #tpu.memory_space<vmem>>, vector<128x128xf32>
    tpu.vector_store %arg25[%c0_63, %c0_64], %105 {strides = array<i32>} : memref<128x128xf32, #tpu.memory_space<vmem>>, vector<128x128xf32>,
    %c1_i32_65 = arith.constant 1 : i32
    %c0_66 = arith.constant 0 : index
    %c0_67 = arith.constant 0 : index
    %107 = vector.load %arg25[%c0_66, %c0_67] : memref<128x128xf32, #tpu.memory_space<vmem>>, vector<128x128xf32>
    %108 = arith.truncf %107 : vector<128x128xf32> to vector<128x128xbf16>
    %c0_68 = arith.constant 0 : index
    %c0_69 = arith.constant 0 : index
    %109 = vector.load %arg16[%c0_68, %c0_69] : memref<128x128xbf16, #tpu.memory_space<vmem>>, vector<128x128xbf16>
    %cst_70 = arith.constant dense<0.000000e+00> : vector<128x128xf32>
    %110 = tpu.matmul %108, %109, %cst_70 {dimension_numbers = #tpu.dot_dimension_numbers<[1], [0], [0], [1], [0, 0, 1, 1], [], []>} : vector<128x128xbf16>, vector<128x128xbf16>, vector<128x128xf32> -> vector<128x128xf32>
    %c0_71 = arith.constant 0 : index
    %c0_72 = arith.constant 0 : index
    %111 = vector.load %arg17[%c0_71, %c0_72] : memref<128x128xbf16, #tpu.memory_space<vmem>>, vector<128x128xbf16>
    %cst_73 = arith.constant dense<0.000000e+00> : vector<128x128xf32>
    %112 = tpu.matmul %84, %111, %cst_73 {dimension_numbers = #tpu.dot_dimension_numbers<[1], [0], [0], [1], [0, 0, 1, 1], [], []>} : vector<128x128xbf16>, vector<128x128xbf16>, vector<128x128xf32> -> vector<128x128xf32>
    %113 = arith.addf %110, %112 : vector<128x128xf32>
    %c0_74 = arith.constant 0 : index
    %c0_75 = arith.constant 0 : index
    %114 = vector.load %arg20[%c0_74, %c0_75] : memref<1x128xf32, #tpu.memory_space<vmem>>, vector<1x128xf32>
    %115 = vector.broadcast %114 : vector<1x128xf32> to vector<128x128xf32>
    %116 = arith.addf %113, %115 : vector<128x128xf32>
    %cst_76 = arith.constant 0.000000e+00 : f32
    %117 = vector.broadcast %cst_76 : f32 to vector<128x128xf32>
    %118 = arith.maximumf %116, %117 : vector<128x128xf32>
    %c0_77 = arith.constant 0 : index
    %c0_78 = arith.constant 0 : index
    %119 = vector.load %arg22[%c0_77, %c0_78] : memref<1x128xf32, #tpu.memory_space<vmem>>, vector<1x128xf32>
    %120 = vector.broadcast %119 : vector<1x128xf32> to vector<128x128xf32>
    %121 = arith.mulf %118, %120 : vector<128x128xf32>
    %c0_79 = arith.constant 0 : index
    %c0_80 = arith.constant 0 : index
    %122 = vector.load %arg23[%c0_79, %c0_80] : memref<1x128xf32, #tpu.memory_space<vmem>>, vector<1x128xf32>
    %123 = vector.broadcast %122 : vector<1x128xf32> to vector<128x128xf32>
    %124 = arith.addf %121, %123 : vector<128x128xf32>
    %c0_81 = arith.constant 0 : index
    %c0_82 = arith.constant 0 : index
    %125 = vector.load %arg24[%c0_81, %c0_82] : memref<128x128xf32, #tpu.memory_space<vmem>>, vector<128x128xf32>
    tpu.vector_store %arg24[%c0_81, %c0_82], %124 {strides = array<i32>} : memref<128x128xf32, #tpu.memory_space<vmem>>, vector<128x128xf32>,
    return
  }
}

</mosaic_0001>

<llo_original>
// kernel: gnn_encoder_forward.1
$region0: #{gnn_encoder_forward.1}
  #allocation0 [shape = 'u32[]', space=smem, size = 0x4, offset = 0x4, fixed_abs, tag = 'smem constant byte address 0x4 - core index']
  #allocation1 [shape = 'u32[144,128]{1,0:T(1,128)}', space=vmem, size = 0x12000, scoped, tag = 'internal scratch']
  #allocation2 [shape = 'f32[128,128]{1,0:T(8,128)}', space=vmem, size = 0x10000, scoped, tag = 'scratch operand']
  #allocation3 [shape = 'bf16[128,128]{1,0:T(16,128)(2,1)}', space=vmem, size = 0x8000, scoped, tag = 'scratch operand']
  %s0 = inlined_call_operand.vmem [shape: s32[1,128], index: 0, kind: input, shape index: {}]
  %s1 = inlined_call_operand.vmem [shape: s32[128,2], index: 1, kind: input, shape index: {}]
  %s2 = inlined_call_operand.vmem [shape: f32[128,128], index: 2, kind: input, shape index: {}]
  %s3 = inlined_call_operand.vmem [shape: f32[128,128], index: 3, kind: input, shape index: {}]
  %s4 = inlined_call_operand.vmem [shape: bf16[128,128], index: 4, kind: input, shape index: {}]
  %s5 = inlined_call_operand.vmem [shape: bf16[128,128], index: 5, kind: input, shape index: {}]
  %s6 = inlined_call_operand.vmem [shape: bf16[128,128], index: 6, kind: input, shape index: {}]
  %s7 = inlined_call_operand.vmem [shape: bf16[128,128], index: 7, kind: input, shape index: {}]
  %s8 = inlined_call_operand.vmem [shape: bf16[128,128], index: 8, kind: input, shape index: {}]
  %s9 = inlined_call_operand.vmem [shape: bf16[128,128], index: 9, kind: input, shape index: {}]
  %s10 = inlined_call_operand.vmem [shape: f32[1,128], index: 10, kind: input, shape index: {}]
  %s11 = inlined_call_operand.vmem [shape: f32[1,128], index: 11, kind: input, shape index: {}]
  %s12 = inlined_call_operand.vmem [shape: f32[1,128], index: 12, kind: input, shape index: {}]
  %s13 = inlined_call_operand.vmem [shape: f32[1,128], index: 13, kind: input, shape index: {}]
  %s14 = inlined_call_operand.vmem [shape: bf16[128,128], index: 14, kind: input, shape index: {}]
  %s15 = inlined_call_operand.vmem [shape: bf16[128,128], index: 15, kind: input, shape index: {}]
  %s16 = inlined_call_operand.vmem [shape: bf16[128,128], index: 16, kind: input, shape index: {}]
  %s17 = inlined_call_operand.vmem [shape: bf16[128,128], index: 17, kind: input, shape index: {}]
  %s18 = inlined_call_operand.vmem [shape: bf16[128,128], index: 18, kind: input, shape index: {}]
  %s19 = inlined_call_operand.vmem [shape: bf16[128,128], index: 19, kind: input, shape index: {}]
  %s20 = inlined_call_operand.vmem [shape: f32[1,128], index: 20, kind: input, shape index: {}]
  %s21 = inlined_call_operand.vmem [shape: f32[1,128], index: 21, kind: input, shape index: {}]
  %s22 = inlined_call_operand.vmem [shape: f32[1,128], index: 22, kind: input, shape index: {}]
  %s23 = inlined_call_operand.vmem [shape: f32[1,128], index: 23, kind: input, shape index: {}]
  %s24 = inlined_call_operand.vmem [shape: f32[128,128], index: 24, kind: output, shape index: {}]
  %s25 = sld [smem:[#allocation0]]
  $region106: #{gnn_encoder_forward.1} parent=0
    _
  %s27 = ssub.s32 1, %s25
  %s28 = scalar_select 0, %s27, %s25
  // Predicated region
  $region2: #{gnn_encoder_forward.1} parent=0 // pred_check
    _
  $region3: #{gnn_encoder_forward.1} parent=0 // pred_check_branch
    %30 = sbr.rel (0) target = $region5
  $region4: #{gnn_encoder_forward.1} parent=0 // pred_region
    _
  $region5: #{gnn_encoder_forward.1} parent=0 // pred_fallthru
    _
  // Predicated region
  $region6: #{gnn_encoder_forward.1} parent=0 // pred_check
    _
  $region7: #{gnn_encoder_forward.1} parent=0 // pred_check_branch
    %32 = sbr.rel (0) target = $region9
  $region8: #{gnn_encoder_forward.1} parent=0 // pred_region
    _
  $region9: #{gnn_encoder_forward.1} parent=0 // pred_fallthru
    _
  // Predicated region
  $region10: #{gnn_encoder_forward.1} parent=0 // pred_check
    _
  $region11: #{gnn_encoder_forward.1} parent=0 // pred_check_branch
    %34 = sbr.rel (0) target = $region13
  $region12: #{gnn_encoder_forward.1} parent=0 // pred_region
    _
  $region13: #{gnn_encoder_forward.1} parent=0 // pred_fallthru
    _
  // Predicated region
  $region14: #{gnn_encoder_forward.1} parent=0 // pred_check
    _
  $region15: #{gnn_encoder_forward.1} parent=0 // pred_check_branch
    %36 = sbr.rel (0) target = $region17
  $region16: #{gnn_encoder_forward.1} parent=0 // pred_region
    _
  $region17: #{gnn_encoder_forward.1} parent=0 // pred_fallthru
    _
  // Predicated region
  $region18: #{gnn_encoder_forward.1} parent=0 // pred_check
    _
  $region19: #{gnn_encoder_forward.1} parent=0 // pred_check_branch
    %38 = sbr.rel (0) target = $region21
  $region20: #{gnn_encoder_forward.1} parent=0 // pred_region
    _
  $region21: #{gnn_encoder_forward.1} parent=0 // pred_fallthru
    _
  // Predicated region
  $region22: #{gnn_encoder_forward.1} parent=0 // pred_check
    _
  $region23: #{gnn_encoder_forward.1} parent=0 // pred_check_branch
    %40 = sbr.rel (0) target = $region25
  $region24: #{gnn_encoder_forward.1} parent=0 // pred_region
    _
  $region25: #{gnn_encoder_forward.1} parent=0 // pred_fallthru
    _
  // Predicated region
  $region26: #{gnn_encoder_forward.1} parent=0 // pred_check
    _
  $region27: #{gnn_encoder_forward.1} parent=0 // pred_check_branch
    %42 = sbr.rel (0) target = $region29
  $region28: #{gnn_encoder_forward.1} parent=0 // pred_region
    _
  $region29: #{gnn_encoder_forward.1} parent=0 // pred_fallthru
    _
  // Predicated region
  $region30: #{gnn_encoder_forward.1} parent=0 // pred_check
    _
  $region31: #{gnn_encoder_forward.1} parent=0 // pred_check_branch
    %44 = sbr.rel (0) target = $region33
  $region32: #{gnn_encoder_forward.1} parent=0 // pred_region
    _
  $region33: #{gnn_encoder_forward.1} parent=0 // pred_fallthru
    _
  // Predicated region
  $region34: #{gnn_encoder_forward.1} parent=0 // pred_check
    _
  $region35: #{gnn_encoder_forward.1} parent=0 // pred_check_branch
    %46 = sbr.rel (0) target = $region37
  $region36: #{gnn_encoder_forward.1} parent=0 // pred_region
    _
  $region37: #{gnn_encoder_forward.1} parent=0 // pred_fallthru
    _
  // Predicated region
  $region38: #{gnn_encoder_forward.1} parent=0 // pred_check
    _
  $region39: #{gnn_encoder_forward.1} parent=0 // pred_check_branch
    %48 = sbr.rel (0) target = $region41
  $region40: #{gnn_encoder_forward.1} parent=0 // pred_region
    _
  $region41: #{gnn_encoder_forward.1} parent=0 // pred_fallthru
    _
  // Predicated region
  $region42: #{gnn_encoder_forward.1} parent=0 // pred_check
    _
  $region43: #{gnn_encoder_forward.1} parent=0 // pred_check_branch
    %50 = sbr.rel (0) target = $region45
  $region44: #{gnn_encoder_forward.1} parent=0 // pred_region
    _
  $region45: #{gnn_encoder_forward.1} parent=0 // pred_fallthru
    _
  // Predicated region
  $region46: #{gnn_encoder_forward.1} parent=0 // pred_check
    _
  $region47: #{gnn_encoder_forward.1} parent=0 // pred_check_branch
    %52 = sbr.rel (0) target = $region49
  $region48: #{gnn_encoder_forward.1} parent=0 // pred_region
    _
  $region49: #{gnn_encoder_forward.1} parent=0 // pred_fallthru
    _
  // Predicated region
  $region50: #{gnn_encoder_forward.1} parent=0 // pred_check
    _
  $region51: #{gnn_encoder_forward.1} parent=0 // pred_check_branch
    %54 = sbr.rel (0) target = $region53
  $region52: #{gnn_encoder_forward.1} parent=0 // pred_region
    _
  $region53: #{gnn_encoder_forward.1} parent=0 // pred_fallthru
    _
  // Predicated region
  $region54: #{gnn_encoder_forward.1} parent=0 // pred_check
    _
  $region55: #{gnn_encoder_forward.1} parent=0 // pred_check_branch
    %56 = sbr.rel (0) target = $region57
  $region56: #{gnn_encoder_forward.1} parent=0 // pred_region
    _
  $region57: #{gnn_encoder_forward.1} parent=0 // pred_fallthru
    _
  // Predicated region
  $region58: #{gnn_encoder_forward.1} parent=0 // pred_check
    _
  $region59: #{gnn_encoder_forward.1} parent=0 // pred_check_branch
    %58 = sbr.rel (0) target = $region61
  $region60: #{gnn_encoder_forward.1} parent=0 // pred_region
    _
  $region61: #{gnn_encoder_forward.1} parent=0 // pred_fallthru
    _
  // Predicated region
  $region62: #{gnn_encoder_forward.1} parent=0 // pred_check
    _
  $region63: #{gnn_encoder_forward.1} parent=0 // pred_check_branch
    %60 = sbr.rel (0) target = $region65
  $region64: #{gnn_encoder_forward.1} parent=0 // pred_region
    _
  $region65: #{gnn_encoder_forward.1} parent=0 // pred_fallthru
    _
  // Predicated region
  $region66: #{gnn_encoder_forward.1} parent=0 // pred_check
    _
  $region67: #{gnn_encoder_forward.1} parent=0 // pred_check_branch
    %62 = sbr.rel (0) target = $region69
  $region68: #{gnn_encoder_forward.1} parent=0 // pred_region
    _
  $region69: #{gnn_encoder_forward.1} parent=0 // pred_fallthru
    _
  // Predicated region
  $region70: #{gnn_encoder_forward.1} parent=0 // pred_check
    _
  $region71: #{gnn_encoder_forward.1} parent=0 // pred_check_branch
    %64 = sbr.rel (0) target = $region73
  $region72: #{gnn_encoder_forward.1} parent=0 // pred_region
    _
  $region73: #{gnn_encoder_forward.1} parent=0 // pred_fallthru
    _
  // Predicated region
  $region74: #{gnn_encoder_forward.1} parent=0 // pred_check
    _
  $region75: #{gnn_encoder_forward.1} parent=0 // pred_check_branch
    %66 = sbr.rel (0) target = $region77
  $region76: #{gnn_encoder_forward.1} parent=0 // pred_region
    _
  $region77: #{gnn_encoder_forward.1} parent=0 // pred_fallthru
    _
  // Predicated region
  $region78: #{gnn_encoder_forward.1} parent=0 // pred_check
    _
  $region79: #{gnn_encoder_forward.1} parent=0 // pred_check_branch
    %68 = sbr.rel (0) target = $region81
  $region80: #{gnn_encoder_forward.1} parent=0 // pred_region
    _
  $region81: #{gnn_encoder_forward.1} parent=0 // pred_fallthru
    _
  // Predicated region
  $region82: #{gnn_encoder_forward.1} parent=0 // pred_check
    _
  $region83: #{gnn_encoder_forward.1} parent=0 // pred_check_branch
    %70 = sbr.rel (0) target = $region85
  $region84: #{gnn_encoder_forward.1} parent=0 // pred_region
    _
  $region85: #{gnn_encoder_forward.1} parent=0 // pred_fallthru
    _
  // Predicated region
  $region86: #{gnn_encoder_forward.1} parent=0 // pred_check
    _
  $region87: #{gnn_encoder_forward.1} parent=0 // pred_check_branch
    %72 = sbr.rel (0) target = $region89
  $region88: #{gnn_encoder_forward.1} parent=0 // pred_region
    _
  $region89: #{gnn_encoder_forward.1} parent=0 // pred_fallthru
    _
  // Predicated region
  $region90: #{gnn_encoder_forward.1} parent=0 // pred_check
    _
  $region91: #{gnn_encoder_forward.1} parent=0 // pred_check_branch
    %74 = sbr.rel (0) target = $region93
  $region92: #{gnn_encoder_forward.1} parent=0 // pred_region
    _
  $region93: #{gnn_encoder_forward.1} parent=0 // pred_fallthru
    _
  // Predicated region
  $region94: #{gnn_encoder_forward.1} parent=0 // pred_check
    _
  $region95: #{gnn_encoder_forward.1} parent=0 // pred_check_branch
    %76 = sbr.rel (0) target = $region97
  $region96: #{gnn_encoder_forward.1} parent=0 // pred_region
    _
  $region97: #{gnn_encoder_forward.1} parent=0 // pred_fallthru
    _
  %v78 = vlaneseq
  %v79 = vshrl.u32 %v78, 7
  %v80 = vadd.s32 %v79, 8
  %v81 = vadd.s32 %v79, 16
  %v82 = vadd.s32 %v79, 24
  %v83 = vadd.s32 %v79, 32
  %v84 = vadd.s32 %v79, 40
  %v85 = vadd.s32 %v79, 48
  %v86 = vadd.s32 %v79, 56
  %v87 = vadd.s32 %v79, 64
  %v88 = vadd.s32 %v79, 72
  %v89 = vadd.s32 %v79, 80
  %v90 = vadd.s32 %v79, 88
  %v91 = vadd.s32 %v79, 96
  %v92 = vadd.s32 %v79, 104
  %v93 = vadd.s32 %v79, 112
  %v94 = vadd.s32 %v79, 120
  %v95 = vlaneseq
  %v96 = vand.u32 %v95, 127
  %v97 = vld [vmem:[%s2] sm:$0xff]
  %v98 = vld [vmem:[%s2 + $0x8] sm:$0xff]
  %v99 = vld [vmem:[%s2 + $0x10] sm:$0xff]
  %v100 = vld [vmem:[%s2 + $0x18] sm:$0xff]
  %v101 = vld [vmem:[%s2 + $0x20] sm:$0xff]
  %v102 = vld [vmem:[%s2 + $0x28] sm:$0xff]
  %v103 = vld [vmem:[%s2 + $0x30] sm:$0xff]
  %v104 = vld [vmem:[%s2 + $0x38] sm:$0xff]
  %v105 = vld [vmem:[%s2 + $0x40] sm:$0xff]
  %v106 = vld [vmem:[%s2 + $0x48] sm:$0xff]
  %v107 = vld [vmem:[%s2 + $0x50] sm:$0xff]
  %v108 = vld [vmem:[%s2 + $0x58] sm:$0xff]
  %v109 = vld [vmem:[%s2 + $0x60] sm:$0xff]
  %v110 = vld [vmem:[%s2 + $0x68] sm:$0xff]
  %v111 = vld [vmem:[%s2 + $0x70] sm:$0xff]
  %v112 = vld [vmem:[%s2 + $0x78] sm:$0xff]
  %v113 = vpack.c.bf16 %v98, %v97
  %v114 = vpack.c.bf16 %v100, %v99
  %v115 = vpack.c.bf16 %v102, %v101
  %v116 = vpack.c.bf16 %v104, %v103
  %v117 = vpack.c.bf16 %v106, %v105
  %v118 = vpack.c.bf16 %v108, %v107
  %v119 = vpack.c.bf16 %v110, %v109
  %v120 = vpack.c.bf16 %v112, %v111
  %v121 = vld [vmem:[%s4] sm:$0xf]
  %v122 = vld [vmem:[%s4 + $0x4] sm:$0xf]
  %v123 = vld [vmem:[%s4 + $0x8] sm:$0xf]
  %v124 = vld [vmem:[%s4 + $0xc] sm:$0xf]
  %v125 = vld [vmem:[%s4 + $0x10] sm:$0xf]
  %v126 = vld [vmem:[%s4 + $0x14] sm:$0xf]
  %v127 = vld [vmem:[%s4 + $0x18] sm:$0xf]
  %v128 = vld [vmem:[%s4 + $0x1c] sm:$0xf]
  %v129 = vld [vmem:[%s4 + $0x20] sm:$0xf]
  %v130 = vld [vmem:[%s4 + $0x24] sm:$0xf]
  %v131 = vld [vmem:[%s4 + $0x28] sm:$0xf]
  %v132 = vld [vmem:[%s4 + $0x2c] sm:$0xf]
  %v133 = vld [vmem:[%s4 + $0x30] sm:$0xf]
  %v134 = vld [vmem:[%s4 + $0x34] sm:$0xf]
  %v135 = vld [vmem:[%s4 + $0x38] sm:$0xf]
  %v136 = vld [vmem:[%s4 + $0x3c] sm:$0xf]
  %v153 = vunpack.c.l.b16 %v121
  %v154 = vunpack.c.l.b16 %v122
  %v155 = vunpack.c.l.b16 %v123
  %v156 = vunpack.c.l.b16 %v124
  %v157 = vunpack.c.l.b16 %v125
  %v158 = vunpack.c.l.b16 %v126
  %v159 = vunpack.c.l.b16 %v127
  %v160 = vunpack.c.l.b16 %v128
  %v161 = vunpack.c.l.b16 %v129
  %v162 = vunpack.c.l.b16 %v130
  %v163 = vunpack.c.l.b16 %v131
  %v164 = vunpack.c.l.b16 %v132
  %v165 = vunpack.c.l.b16 %v133
  %v166 = vunpack.c.l.b16 %v134
  %v167 = vunpack.c.l.b16 %v135
  %v168 = vunpack.c.l.b16 %v136
  %v169 = vpack.c.b16 %v154, %v153
  %v170 = vpack.c.b16 %v156, %v155
  %v171 = vpack.c.b16 %v158, %v157
  %v172 = vpack.c.b16 %v160, %v159
  %v173 = vpack.c.b16 %v162, %v161
  %v174 = vpack.c.b16 %v164, %v163
  %v175 = vpack.c.b16 %v166, %v165
  %v176 = vpack.c.b16 %v168, %v167
  %185 = vmatprep.subr.bf16.mxu0 0
  %186 = vmatpush1.bf16.msra.mxu0 %v169
  %187 = vmatprep.subr.bf16.mxu0 0
  %188 = vmatpush1.bf16.msra.mxu0 %v170
  %189 = vmatprep.subr.bf16.mxu0 0
  %190 = vmatpush1.bf16.msra.mxu0 %v171
  %191 = vmatprep.subr.bf16.mxu0 0
  %192 = vmatpush1.bf16.msra.mxu0 %v172
  %193 = vmatprep.subr.bf16.mxu0 0
  %194 = vmatpush1.bf16.msra.mxu0 %v173
  %195 = vmatprep.subr.bf16.mxu0 0
  %196 = vmatpush1.bf16.msra.mxu0 %v174
  %197 = vmatprep.subr.bf16.mxu0 0
  %198 = vmatpush1.bf16.msra.mxu0 %v175
  %199 = vmatprep.subr.bf16.mxu0 0
  %200 = vmatpush1.bf16.msra.mxu0 %v176
  %201 = vmatprep.subr.bf16.mxu0 0
  %202 = vmatpush1.bf16.msra.mxu0 0
  %203 = vmatprep.subr.bf16.mxu0 0
  %204 = vmatpush1.bf16.msra.mxu0 0
  %205 = vmatprep.subr.bf16.mxu0 0
  %206 = vmatpush1.bf16.msra.mxu0 0
  %207 = vmatprep.subr.bf16.mxu0 0
  %208 = vmatpush1.bf16.msra.mxu0 0
  %209 = vmatprep.subr.bf16.mxu0 0
  %210 = vmatpush1.bf16.msra.mxu0 0
  %211 = vmatprep.subr.bf16.mxu0 0
  %212 = vmatpush1.bf16.msra.mxu0 0
  %213 = vmatprep.subr.bf16.mxu0 0
  %214 = vmatpush1.bf16.msra.mxu0 0
  %215 = vmatprep.subr.bf16.mxu0 0
  %216 = vmatpush1.bf16.msra.mxu0 0
  %217 = vmatprep.mubr.bf16.mxu0 0
  %218 = vmatmul.mubr.bf16.gmra.mrb[0].mxu0 %v113
  %v219 = vpop.f32.mrb[0].mxu0
  %v220 = vadd.f32 0.0, %v219
  %v221 = vpop.f32.mrb[0].mxu0
  %v222 = vpop.f32.mrb[0].mxu0
  %v223 = vadd.f32 0.0, %v222
  %v224 = vpop.f32.mrb[0].mxu0
  %225 = vmatprep.mubr.bf16.mxu0 0
  %226 = vmatmul.mubr.bf16.gmra.mrb[0].mxu0 %v114
  %v227 = vpop.f32.mrb[0].mxu0
  %v228 = vadd.f32 0.0, %v227
  %v229 = vpop.f32.mrb[0].mxu0
  %v230 = vpop.f32.mrb[0].mxu0
  %v231 = vadd.f32 0.0, %v230
  %v232 = vpop.f32.mrb[0].mxu0
  %233 = vmatprep.mubr.bf16.mxu0 0
  %234 = vmatmul.mubr.bf16.gmra.mrb[0].mxu0 %v115
  %v235 = vpop.f32.mrb[0].mxu0
  %v236 = vadd.f32 0.0, %v235
  %v237 = vpop.f32.mrb[0].mxu0
  %v238 = vpop.f32.mrb[0].mxu0
  %v239 = vadd.f32 0.0, %v238
  %v240 = vpop.f32.mrb[0].mxu0
  %241 = vmatprep.mubr.bf16.mxu0 0
  %242 = vmatmul.mubr.bf16.gmra.mrb[0].mxu0 %v116
  %v243 = vpop.f32.mrb[0].mxu0
  %v244 = vadd.f32 0.0, %v243
  %v245 = vpop.f32.mrb[0].mxu0
  %v246 = vpop.f32.mrb[0].mxu0
  %v247 = vadd.f32 0.0, %v246
  %v248 = vpop.f32.mrb[0].mxu0
  %249 = vmatprep.mubr.bf16.mxu0 0
  %250 = vmatmul.mubr.bf16.gmra.mrb[0].mxu0 %v117
  %v251 = vpop.f32.mrb[0].mxu0
  %v252 = vadd.f32 0.0, %v251
  %v253 = vpop.f32.mrb[0].mxu0
  %v254 = vpop.f32.mrb[0].mxu0
  %v255 = vadd.f32 0.0, %v254
  %v256 = vpop.f32.mrb[0].mxu0
  %257 = vmatprep.mubr.bf16.mxu0 0
  %258 = vmatmul.mubr.bf16.gmra.mrb[0].mxu0 %v118
  %v259 = vpop.f32.mrb[0].mxu0
  %v260 = vadd.f32 0.0, %v259
  %v261 = vpop.f32.mrb[0].mxu0
  %v262 = vpop.f32.mrb[0].mxu0
  %v263 = vadd.f32 0.0, %v262
  %v264 = vpop.f32.mrb[0].mxu0
  %265 = vmatprep.mubr.bf16.mxu0 0
  %266 = vmatmul.mubr.bf16.gmra.mrb[0].mxu0 %v119
  %v267 = vpop.f32.mrb[0].mxu0
  %v268 = vadd.f32 0.0, %v267
  %v269 = vpop.f32.mrb[0].mxu0
  %v270 = vpop.f32.mrb[0].mxu0
  %v271 = vadd.f32 0.0, %v270
  %v272 = vpop.f32.mrb[0].mxu0
  %273 = vmatprep.mubr.bf16.mxu0 0
  %274 = vmatmul.mubr.bf16.gmra.mrb[0].mxu0 %v120
  %v275 = vpop.f32.mrb[0].mxu0
  %v276 = vadd.f32 0.0, %v275
  %v277 = vpop.f32.mrb[0].mxu0
  %v278 = vpop.f32.mrb[0].mxu0
  %v279 = vadd.f32 0.0, %v278
  %v280 = vpop.f32.mrb[0].mxu0
  %281 = vdwg.mxu0
  %v282 = vmax.f32 %v220, 0.0
  %v283 = vmax.f32 %v223, 0.0
  %v284 = vmax.f32 %v228, 0.0
  %v285 = vmax.f32 %v231, 0.0
  %v286 = vmax.f32 %v236, 0.0
  %v287 = vmax.f32 %v239, 0.0
  %v288 = vmax.f32 %v244, 0.0
  %v289 = vmax.f32 %v247, 0.0
  %v290 = vmax.f32 %v252, 0.0
  %v291 = vmax.f32 %v255, 0.0
  %v292 = vmax.f32 %v260, 0.0
  %v293 = vmax.f32 %v263, 0.0
  %v294 = vmax.f32 %v268, 0.0
  %v295 = vmax.f32 %v271, 0.0
  %v296 = vmax.f32 %v276, 0.0
  %v297 = vmax.f32 %v279, 0.0
  %v298 = vpack.c.bf16 %v283, %v282
  %v299 = vpack.c.bf16 %v285, %v284
  %v300 = vpack.c.bf16 %v287, %v286
  %v301 = vpack.c.bf16 %v289, %v288
  %v302 = vpack.c.bf16 %v291, %v290
  %v303 = vpack.c.bf16 %v293, %v292
  %v304 = vpack.c.bf16 %v295, %v294
  %v305 = vpack.c.bf16 %v297, %v296
  %306 = vst [vmem:[#allocation2] sm:$0xff] 0.0
  %307 = vst [vmem:[#allocation2 + $0x8] sm:$0xff] 0.0
  %308 = vst [vmem:[#allocation2 + $0x10] sm:$0xff] 0.0
  %309 = vst [vmem:[#allocation2 + $0x18] sm:$0xff] 0.0
  %310 = vst [vmem:[#allocation2 + $0x20] sm:$0xff] 0.0
  %311 = vst [vmem:[#allocation2 + $0x28] sm:$0xff] 0.0
  %312 = vst [vmem:[#allocation2 + $0x30] sm:$0xff] 0.0
  %313 = vst [vmem:[#allocation2 + $0x38] sm:$0xff] 0.0
  %314 = vst [vmem:[#allocation2 + $0x40] sm:$0xff] 0.0
  %315 = vst [vmem:[#allocation2 + $0x48] sm:$0xff] 0.0
  %316 = vst [vmem:[#allocation2 + $0x50] sm:$0xff] 0.0
  %317 = vst [vmem:[#allocation2 + $0x58] sm:$0xff] 0.0
  %318 = vst [vmem:[#allocation2 + $0x60] sm:$0xff] 0.0
  %319 = vst [vmem:[#allocation2 + $0x68] sm:$0xff] 0.0
  %320 = vst [vmem:[#allocation2 + $0x70] sm:$0xff] 0.0
  %321 = vst [vmem:[#allocation2 + $0x78] sm:$0xff] 0.0
  %v322 = vld [vmem:[%s3] sm:$0xff]
  %v323 = vld [vmem:[%s3 + $0x8] sm:$0xff]
  %v324 = vld [vmem:[%s3 + $0x10] sm:$0xff]
  %v325 = vld [vmem:[%s3 + $0x18] sm:$0xff]
  %v326 = vld [vmem:[%s3 + $0x20] sm:$0xff]
  %v327 = vld [vmem:[%s3 + $0x28] sm:$0xff]
  %v328 = vld [vmem:[%s3 + $0x30] sm:$0xff]
  %v329 = vld [vmem:[%s3 + $0x38] sm:$0xff]
  %v330 = vld [vmem:[%s3 + $0x40] sm:$0xff]
  %v331 = vld [vmem:[%s3 + $0x48] sm:$0xff]
  %v332 = vld [vmem:[%s3 + $0x50] sm:$0xff]
  %v333 = vld [vmem:[%s3 + $0x58] sm:$0xff]
  %v334 = vld [vmem:[%s3 + $0x60] sm:$0xff]
  %v335 = vld [vmem:[%s3 + $0x68] sm:$0xff]
  %v336 = vld [vmem:[%s3 + $0x70] sm:$0xff]
  %v337 = vld [vmem:[%s3 + $0x78] sm:$0xff]
  %v338 = vpack.c.bf16 %v323, %v322
  %v339 = vpack.c.bf16 %v325, %v324
  %v340 = vpack.c.bf16 %v327, %v326
  %v341 = vpack.c.bf16 %v329, %v328
  %v342 = vpack.c.bf16 %v331, %v330
  %v343 = vpack.c.bf16 %v333, %v332
  %v344 = vpack.c.bf16 %v335, %v334
  %v345 = vpack.c.bf16 %v337, %v336
  %v346 = vld [vmem:[%s5] sm:$0xf]
  %v347 = vld [vmem:[%s5 + $0x4] sm:$0xf]
  %v348 = vld [vmem:[%s5 + $0x8] sm:$0xf]
  %v349 = vld [vmem:[%s5 + $0xc] sm:$0xf]
  %v350 = vld [vmem:[%s5 + $0x10] sm:$0xf]
  %v351 = vld [vmem:[%s5 + $0x14] sm:$0xf]
  %v352 = vld [vmem:[%s5 + $0x18] sm:$0xf]
  %v353 = vld [vmem:[%s5 + $0x1c] sm:$0xf]
  %v354 = vld [vmem:[%s5 + $0x20] sm:$0xf]
  %v355 = vld [vmem:[%s5 + $0x24] sm:$0xf]
  %v356 = vld [vmem:[%s5 + $0x28] sm:$0xf]
  %v357 = vld [vmem:[%s5 + $0x2c] sm:$0xf]
  %v358 = vld [vmem:[%s5 + $0x30] sm:$0xf]
  %v359 = vld [vmem:[%s5 + $0x34] sm:$0xf]
  %v360 = vld [vmem:[%s5 + $0x38] sm:$0xf]
  %v361 = vld [vmem:[%s5 + $0x3c] sm:$0xf]
  %v378 = vunpack.c.l.b16 %v346
  %v379 = vunpack.c.l.b16 %v347
  %v380 = vunpack.c.l.b16 %v348
  %v381 = vunpack.c.l.b16 %v349
  %v382 = vunpack.c.l.b16 %v350
  %v383 = vunpack.c.l.b16 %v351
  %v384 = vunpack.c.l.b16 %v352
  %v385 = vunpack.c.l.b16 %v353
  %v386 = vunpack.c.l.b16 %v354
  %v387 = vunpack.c.l.b16 %v355
  %v388 = vunpack.c.l.b16 %v356
  %v389 = vunpack.c.l.b16 %v357
  %v390 = vunpack.c.l.b16 %v358
  %v391 = vunpack.c.l.b16 %v359
  %v392 = vunpack.c.l.b16 %v360
  %v393 = vunpack.c.l.b16 %v361
  %v394 = vpack.c.b16 %v379, %v378
  %v395 = vpack.c.b16 %v381, %v380
  %v396 = vpack.c.b16 %v383, %v382
  %v397 = vpack.c.b16 %v385, %v384
  %v398 = vpack.c.b16 %v387, %v386
  %v399 = vpack.c.b16 %v389, %v388
  %v400 = vpack.c.b16 %v391, %v390
  %v401 = vpack.c.b16 %v393, %v392
  %410 = vmatprep.subr.bf16.mxu0 0
  %411 = vmatpush1.bf16.msra.mxu0 %v394
  %412 = vmatprep.subr.bf16.mxu0 0
  %413 = vmatpush1.bf16.msra.mxu0 %v395
  %414 = vmatprep.subr.bf16.mxu0 0
  %415 = vmatpush1.bf16.msra.mxu0 %v396
  %416 = vmatprep.subr.bf16.mxu0 0
  %417 = vmatpush1.bf16.msra.mxu0 %v397
  %418 = vmatprep.subr.bf16.mxu0 0
  %419 = vmatpush1.bf16.msra.mxu0 %v398
  %420 = vmatprep.subr.bf16.mxu0 0
  %421 = vmatpush1.bf16.msra.mxu0 %v399
  %422 = vmatprep.subr.bf16.mxu0 0
  %423 = vmatpush1.bf16.msra.mxu0 %v400
  %424 = vmatprep.subr.bf16.mxu0 0
  %425 = vmatpush1.bf16.msra.mxu0 %v401
  %426 = vmatprep.subr.bf16.mxu0 0
  %427 = vmatpush1.bf16.msra.mxu0 0
  %428 = vmatprep.subr.bf16.mxu0 0
  %429 = vmatpush1.bf16.msra.mxu0 0
  %430 = vmatprep.subr.bf16.mxu0 0
  %431 = vmatpush1.bf16.msra.mxu0 0
  %432 = vmatprep.subr.bf16.mxu0 0
  %433 = vmatpush1.bf16.msra.mxu0 0
  %434 = vmatprep.subr.bf16.mxu0 0
  %435 = vmatpush1.bf16.msra.mxu0 0
  %436 = vmatprep.subr.bf16.mxu0 0
  %437 = vmatpush1.bf16.msra.mxu0 0
  %438 = vmatprep.subr.bf16.mxu0 0
  %439 = vmatpush1.bf16.msra.mxu0 0
  %440 = vmatprep.subr.bf16.mxu0 0
  %441 = vmatpush1.bf16.msra.mxu0 0
  %442 = vmatprep.mubr.bf16.mxu0 0
  %443 = vmatmul.mubr.bf16.gmra.mrb[0].mxu0 %v338
  %v444 = vpop.f32.mrb[0].mxu0
  %v445 = vadd.f32 0.0, %v444
  %v446 = vpop.f32.mrb[0].mxu0
  %v447 = vpop.f32.mrb[0].mxu0
  %v448 = vadd.f32 0.0, %v447
  %v449 = vpop.f32.mrb[0].mxu0
  %450 = vmatprep.mubr.bf16.mxu0 0
  %451 = vmatmul.mubr.bf16.gmra.mrb[0].mxu0 %v339
  %v452 = vpop.f32.mrb[0].mxu0
  %v453 = vadd.f32 0.0, %v452
  %v454 = vpop.f32.mrb[0].mxu0
  %v455 = vpop.f32.mrb[0].mxu0
  %v456 = vadd.f32 0.0, %v455
  %v457 = vpop.f32.mrb[0].mxu0
  %458 = vmatprep.mubr.bf16.mxu0 0
  %459 = vmatmul.mubr.bf16.gmra.mrb[0].mxu0 %v340
  %v460 = vpop.f32.mrb[0].mxu0
  %v461 = vadd.f32 0.0, %v460
  %v462 = vpop.f32.mrb[0].mxu0
  %v463 = vpop.f32.mrb[0].mxu0
  %v464 = vadd.f32 0.0, %v463
  %v465 = vpop.f32.mrb[0].mxu0
  %466 = vmatprep.mubr.bf16.mxu0 0
  %467 = vmatmul.mubr.bf16.gmra.mrb[0].mxu0 %v341
  %v468 = vpop.f32.mrb[0].mxu0
  %v469 = vadd.f32 0.0, %v468
  %v470 = vpop.f32.mrb[0].mxu0
  %v471 = vpop.f32.mrb[0].mxu0
  %v472 = vadd.f32 0.0, %v471
  %v473 = vpop.f32.mrb[0].mxu0
  %474 = vmatprep.mubr.bf16.mxu0 0
  %475 = vmatmul.mubr.bf16.gmra.mrb[0].mxu0 %v342
  %v476 = vpop.f32.mrb[0].mxu0
  %v477 = vadd.f32 0.0, %v476
  %v478 = vpop.f32.mrb[0].mxu0
  %v479 = vpop.f32.mrb[0].mxu0
  %v480 = vadd.f32 0.0, %v479
  %v481 = vpop.f32.mrb[0].mxu0
  %482 = vmatprep.mubr.bf16.mxu0 0
  %483 = vmatmul.mubr.bf16.gmra.mrb[0].mxu0 %v343
  %v484 = vpop.f32.mrb[0].mxu0
  %v485 = vadd.f32 0.0, %v484
  %v486 = vpop.f32.mrb[0].mxu0
  %v487 = vpop.f32.mrb[0].mxu0
  %v488 = vadd.f32 0.0, %v487
  %v489 = vpop.f32.mrb[0].mxu0
  %490 = vmatprep.mubr.bf16.mxu0 0
  %491 = vmatmul.mubr.bf16.gmra.mrb[0].mxu0 %v344
  %v492 = vpop.f32.mrb[0].mxu0
  %v493 = vadd.f32 0.0, %v492
  %v494 = vpop.f32.mrb[0].mxu0
  %v495 = vpop.f32.mrb[0].mxu0
  %v496 = vadd.f32 0.0, %v495
  %v497 = vpop.f32.mrb[0].mxu0
  %498 = vmatprep.mubr.bf16.mxu0 0
  %499 = vmatmul.mubr.bf16.gmra.mrb[0].mxu0 %v345
  %v500 = vpop.f32.mrb[0].mxu0
  %v501 = vadd.f32 0.0, %v500
  %v502 = vpop.f32.mrb[0].mxu0
  %v503 = vpop.f32.mrb[0].mxu0
  %v504 = vadd.f32 0.0, %v503
  %v505 = vpop.f32.mrb[0].mxu0
  %506 = vdwg.mxu0
  %v507 = vmax.f32 %v445, 0.0
  %v508 = vmax.f32 %v448, 0.0
  %v509 = vmax.f32 %v453, 0.0
  %v510 = vmax.f32 %v456, 0.0
  %v511 = vmax.f32 %v461, 0.0
  %v512 = vmax.f32 %v464, 0.0
  %v513 = vmax.f32 %v469, 0.0
  %v514 = vmax.f32 %v472, 0.0
  %v515 = vmax.f32 %v477, 0.0
  %v516 = vmax.f32 %v480, 0.0
  %v517 = vmax.f32 %v485, 0.0
  %v518 = vmax.f32 %v488, 0.0
  %v519 = vmax.f32 %v493, 0.0
  %v520 = vmax.f32 %v496, 0.0
  %v521 = vmax.f32 %v501, 0.0
  %v522 = vmax.f32 %v504, 0.0
  %v523 = vpack.c.bf16 %v508, %v507
  %v524 = vpack.c.bf16 %v510, %v509
  %v525 = vpack.c.bf16 %v512, %v511
  %v526 = vpack.c.bf16 %v514, %v513
  %v527 = vpack.c.bf16 %v516, %v515
  %v528 = vpack.c.bf16 %v518, %v517
  %v529 = vpack.c.bf16 %v520, %v519
  %v530 = vpack.c.bf16 %v522, %v521
  %v531 = vld [vmem:[%s0] sm:$0x1]
  %v532 = vlaneseq
  %v533 = vshrl.u32 %v532, 7
  %v534 = vsub.s32 0, %v533
  %v535 = vrot.slane %v531, %v534
  %vm536 = vcmp.eq.s32.totalorder %v79, %v535
  %vm537 = vcmp.eq.s32.totalorder %v80, %v535
  %vm538 = vcmp.eq.s32.totalorder %v81, %v535
  %vm539 = vcmp.eq.s32.totalorder %v82, %v535
  %vm540 = vcmp.eq.s32.totalorder %v83, %v535
  %vm541 = vcmp.eq.s32.totalorder %v84, %v535
  %vm542 = vcmp.eq.s32.totalorder %v85, %v535
  %vm543 = vcmp.eq.s32.totalorder %v86, %v535
  %vm544 = vcmp.eq.s32.totalorder %v87, %v535
  %vm545 = vcmp.eq.s32.totalorder %v88, %v535
  %vm546 = vcmp.eq.s32.totalorder %v89, %v535
  %vm547 = vcmp.eq.s32.totalorder %v90, %v535
  %vm548 = vcmp.eq.s32.totalorder %v91, %v535
  %vm549 = vcmp.eq.s32.totalorder %v92, %v535
  %vm550 = vcmp.eq.s32.totalorder %v93, %v535
  %vm551 = vcmp.eq.s32.totalorder %v94, %v535
  %v552 = vsel %vm536, 1, 0
  %v553 = vsel %vm537, 1, 0
  %v554 = vsel %vm538, 1, 0
  %v555 = vsel %vm539, 1, 0
  %v556 = vsel %vm540, 1, 0
  %v557 = vsel %vm541, 1, 0
  %v558 = vsel %vm542, 1, 0
  %v559 = vsel %vm543, 1, 0
  %v560 = vsel %vm544, 1, 0
  %v561 = vsel %vm545, 1, 0
  %v562 = vsel %vm546, 1, 0
  %v563 = vsel %vm547, 1, 0
  %v564 = vsel %vm548, 1, 0
  %v565 = vsel %vm549, 1, 0
  %v566 = vsel %vm550, 1, 0
  %v567 = vsel %vm551, 1, 0
  %v568 = vcvt.s32.f32 %v552
  %v569 = vcvt.s32.f32 %v553
  %v570 = vcvt.s32.f32 %v554
  %v571 = vcvt.s32.f32 %v555
  %v572 = vcvt.s32.f32 %v556
  %v573 = vcvt.s32.f32 %v557
  %v574 = vcvt.s32.f32 %v558
  %v575 = vcvt.s32.f32 %v559
  %v576 = vcvt.s32.f32 %v560
  %v577 = vcvt.s32.f32 %v561
  %v578 = vcvt.s32.f32 %v562
  %v579 = vcvt.s32.f32 %v563
  %v580 = vcvt.s32.f32 %v564
  %v581 = vcvt.s32.f32 %v565
  %v582 = vcvt.s32.f32 %v566
  %v583 = vcvt.s32.f32 %v567
  %v584 = vpack.c.bf16 %v569, %v568
  %v585 = vpack.c.bf16 %v571, %v570
  %v586 = vpack.c.bf16 %v573, %v572
  %v587 = vpack.c.bf16 %v575, %v574
  %v588 = vpack.c.bf16 %v577, %v576
  %v589 = vpack.c.bf16 %v579, %v578
  %v590 = vpack.c.bf16 %v581, %v580
  %v591 = vpack.c.bf16 %v583, %v582
  %v592 = vld [vmem:[#allocation2] sm:$0xff]
  %v593 = vld [vmem:[#allocation2 + $0x8] sm:$0xff]
  %v594 = vld [vmem:[#allocation2 + $0x10] sm:$0xff]
  %v595 = vld [vmem:[#allocation2 + $0x18] sm:$0xff]
  %v596 = vld [vmem:[#allocation2 + $0x20] sm:$0xff]
  %v597 = vld [vmem:[#allocation2 + $0x28] sm:$0xff]
  %v598 = vld [vmem:[#allocation2 + $0x30] sm:$0xff]
  %v599 = vld [vmem:[#allocation2 + $0x38] sm:$0xff]
  %v600 = vld [vmem:[#allocation2 + $0x40] sm:$0xff]
  %v601 = vld [vmem:[#allocation2 + $0x48] sm:$0xff]
  %v602 = vld [vmem:[#allocation2 + $0x50] sm:$0xff]
  %v603 = vld [vmem:[#allocation2 + $0x58] sm:$0xff]
  %v604 = vld [vmem:[#allocation2 + $0x60] sm:$0xff]
  %v605 = vld [vmem:[#allocation2 + $0x68] sm:$0xff]
  %v606 = vld [vmem:[#allocation2 + $0x70] sm:$0xff]
  %v607 = vld [vmem:[#allocation2 + $0x78] sm:$0xff]
  %608 = vmatprep.subr.bf16.mxu0 0
  %609 = vmatpush1.bf16.msra.mxu0 %v523
  %610 = vmatprep.subr.bf16.mxu0 0
  %611 = vmatpush1.bf16.msra.mxu0 %v524
  %612 = vmatprep.subr.bf16.mxu0 0
  %613 = vmatpush1.bf16.msra.mxu0 %v525
  %614 = vmatprep.subr.bf16.mxu0 0
  %615 = vmatpush1.bf16.msra.mxu0 %v526
  %616 = vmatprep.subr.bf16.mxu0 0
  %617 = vmatpush1.bf16.msra.mxu0 %v527
  %618 = vmatprep.subr.bf16.mxu0 0
  %619 = vmatpush1.bf16.msra.mxu0 %v528
  %620 = vmatprep.subr.bf16.mxu0 0
  %621 = vmatpush1.bf16.msra.mxu0 %v529
  %622 = vmatprep.subr.bf16.mxu0 0
  %623 = vmatpush1.bf16.msra.mxu0 %v530
  %624 = vmatprep.subr.bf16.mxu0 0
  %625 = vmatpush1.bf16.msra.mxu0 0
  %626 = vmatprep.subr.bf16.mxu0 0
  %627 = vmatpush1.bf16.msra.mxu0 0
  %628 = vmatprep.subr.bf16.mxu0 0
  %629 = vmatpush1.bf16.msra.mxu0 0
  %630 = vmatprep.subr.bf16.mxu0 0
  %631 = vmatpush1.bf16.msra.mxu0 0
  %632 = vmatprep.subr.bf16.mxu0 0
  %633 = vmatpush1.bf16.msra.mxu0 0
  %634 = vmatprep.subr.bf16.mxu0 0
  %635 = vmatpush1.bf16.msra.mxu0 0
  %636 = vmatprep.subr.bf16.mxu0 0
  %637 = vmatpush1.bf16.msra.mxu0 0
  %638 = vmatprep.subr.bf16.mxu0 0
  %639 = vmatpush1.bf16.msra.mxu0 0
  %640 = vmatprep.mubr.bf16.mxu0 0
  %641 = vmatmul.mubr.bf16.gmra.mrb[0].mxu0 %v584
  %v642 = vpop.f32.mrb[0].mxu0
  %v643 = vadd.f32 0.0, %v642
  %v644 = vpop.f32.mrb[0].mxu0
  %v645 = vpop.f32.mrb[0].mxu0
  %v646 = vadd.f32 0.0, %v645
  %v647 = vpop.f32.mrb[0].mxu0
  %648 = vmatprep.mubr.bf16.mxu0 0
  %649 = vmatmul.mubr.bf16.gmra.mrb[0].mxu0 %v585
  %v650 = vpop.f32.mrb[0].mxu0
  %v651 = vadd.f32 0.0, %v650
  %v652 = vpop.f32.mrb[0].mxu0
  %v653 = vpop.f32.mrb[0].mxu0
  %v654 = vadd.f32 0.0, %v653
  %v655 = vpop.f32.mrb[0].mxu0
  %656 = vmatprep.mubr.bf16.mxu0 0
  %657 = vmatmul.mubr.bf16.gmra.mrb[0].mxu0 %v586
  %v658 = vpop.f32.mrb[0].mxu0
  %v659 = vadd.f32 0.0, %v658
  %v660 = vpop.f32.mrb[0].mxu0
  %v661 = vpop.f32.mrb[0].mxu0
  %v662 = vadd.f32 0.0, %v661
  %v663 = vpop.f32.mrb[0].mxu0
  %664 = vmatprep.mubr.bf16.mxu0 0
  %665 = vmatmul.mubr.bf16.gmra.mrb[0].mxu0 %v587
  %v666 = vpop.f32.mrb[0].mxu0
  %v667 = vadd.f32 0.0, %v666
  %v668 = vpop.f32.mrb[0].mxu0
  %v669 = vpop.f32.mrb[0].mxu0
  %v670 = vadd.f32 0.0, %v669
  %v671 = vpop.f32.mrb[0].mxu0
  %672 = vmatprep.mubr.bf16.mxu0 0
  %673 = vmatmul.mubr.bf16.gmra.mrb[0].mxu0 %v588
  %v674 = vpop.f32.mrb[0].mxu0
  %v675 = vadd.f32 0.0, %v674
  %v676 = vpop.f32.mrb[0].mxu0
  %v677 = vpop.f32.mrb[0].mxu0
  %v678 = vadd.f32 0.0, %v677
  %v679 = vpop.f32.mrb[0].mxu0
  %680 = vmatprep.mubr.bf16.mxu0 0
  %681 = vmatmul.mubr.bf16.gmra.mrb[0].mxu0 %v589
  %v682 = vpop.f32.mrb[0].mxu0
  %v683 = vadd.f32 0.0, %v682
  %v684 = vpop.f32.mrb[0].mxu0
  %v685 = vpop.f32.mrb[0].mxu0
  %v686 = vadd.f32 0.0, %v685
  %v687 = vpop.f32.mrb[0].mxu0
  %688 = vmatprep.mubr.bf16.mxu0 0
  %689 = vmatmul.mubr.bf16.gmra.mrb[0].mxu0 %v590
  %v690 = vpop.f32.mrb[0].mxu0
  %v691 = vadd.f32 0.0, %v690
  %v692 = vpop.f32.mrb[0].mxu0
  %v693 = vpop.f32.mrb[0].mxu0
  %v694 = vadd.f32 0.0, %v693
  %v695 = vpop.f32.mrb[0].mxu0
  %696 = vmatprep.mubr.bf16.mxu0 0
  %697 = vmatmul.mubr.bf16.gmra.mrb[0].mxu0 %v591
  %v698 = vpop.f32.mrb[0].mxu0
  %v699 = vadd.f32 0.0, %v698
  %v700 = vpop.f32.mrb[0].mxu0
  %v701 = vpop.f32.mrb[0].mxu0
  %v702 = vadd.f32 0.0, %v701
  %v703 = vpop.f32.mrb[0].mxu0
  %704 = vdwg.mxu0
  %v705 = vadd.f32 %v592, %v643
  %v706 = vadd.f32 %v593, %v646
  %v707 = vadd.f32 %v594, %v651
  %v708 = vadd.f32 %v595, %v654
  %v709 = vadd.f32 %v596, %v659
  %v710 = vadd.f32 %v597, %v662
  %v711 = vadd.f32 %v598, %v667
  %v712 = vadd.f32 %v599, %v670
  %v713 = vadd.f32 %v600, %v675
  %v714 = vadd.f32 %v601, %v678
  %v715 = vadd.f32 %v602, %v683
  %v716 = vadd.f32 %v603, %v686
  %v717 = vadd.f32 %v604, %v691
  %v718 = vadd.f32 %v605, %v694
  %v719 = vadd.f32 %v606, %v699
  %v720 = vadd.f32 %v607, %v702
  %721 = vst [vmem:[#allocation2] sm:$0xff] %v705
  %722 = vst [vmem:[#allocation2 + $0x8] sm:$0xff] %v706
  %723 = vst [vmem:[#allocation2 + $0x10] sm:$0xff] %v707
  %724 = vst [vmem:[#allocation2 + $0x18] sm:$0xff] %v708
  %725 = vst [vmem:[#allocation2 + $0x20] sm:$0xff] %v709
  %726 = vst [vmem:[#allocation2 + $0x28] sm:$0xff] %v710
  %727 = vst [vmem:[#allocation2 + $0x30] sm:$0xff] %v711
  %728 = vst [vmem:[#allocation2 + $0x38] sm:$0xff] %v712
  %729 = vst [vmem:[#allocation2 + $0x40] sm:$0xff] %v713
  %730 = vst [vmem:[#allocation2 + $0x48] sm:$0xff] %v714
  %731 = vst [vmem:[#allocation2 + $0x50] sm:$0xff] %v715
  %732 = vst [vmem:[#allocation2 + $0x58] sm:$0xff] %v716
  %733 = vst [vmem:[#allocation2 + $0x60] sm:$0xff] %v717
  %734 = vst [vmem:[#allocation2 + $0x68] sm:$0xff] %v718
  %735 = vst [vmem:[#allocation2 + $0x70] sm:$0xff] %v719
  %736 = vst [vmem:[#allocation2 + $0x78] sm:$0xff] %v720
  %v737 = vld [vmem:[%s1] sm:$0xff]
  %v738 = vld [vmem:[%s1 + $0x8] sm:$0xff]
  %v739 = vld [vmem:[%s1 + $0x10] sm:$0xff]
  %v740 = vld [vmem:[%s1 + $0x18] sm:$0xff]
  %v741 = vld [vmem:[%s1 + $0x20] sm:$0xff]
  %v742 = vld [vmem:[%s1 + $0x28] sm:$0xff]
  %v743 = vld [vmem:[%s1 + $0x30] sm:$0xff]
  %v744 = vld [vmem:[%s1 + $0x38] sm:$0xff]
  %v745 = vld [vmem:[%s1 + $0x40] sm:$0xff]
  %v746 = vld [vmem:[%s1 + $0x48] sm:$0xff]
  %v747 = vld [vmem:[%s1 + $0x50] sm:$0xff]
  %v748 = vld [vmem:[%s1 + $0x58] sm:$0xff]
  %v749 = vld [vmem:[%s1 + $0x60] sm:$0xff]
  %v750 = vld [vmem:[%s1 + $0x68] sm:$0xff]
  %v751 = vld [vmem:[%s1 + $0x70] sm:$0xff]
  %v752 = vld [vmem:[%s1 + $0x78] sm:$0xff]
  %753 = vset.pattern.permute.xlu0 0
  %754 = vperm.xlu0 %753, %v737
  %v755 = vpop.permute.xlu0 %754
  %756 = vset.pattern.permute.xlu0 0
  %757 = vperm.xlu0 %756, %v738
  %v758 = vpop.permute.xlu0 %757
  %759 = vset.pattern.permute.xlu0 0
  %760 = vperm.xlu0 %759, %v739
  %v761 = vpop.permute.xlu0 %760
  %762 = vset.pattern.permute.xlu0 0
  %763 = vperm.xlu0 %762, %v740
  %v764 = vpop.permute.xlu0 %763
  %765 = vset.pattern.permute.xlu0 0
  %766 = vperm.xlu0 %765, %v741
  %v767 = vpop.permute.xlu0 %766
  %768 = vset.pattern.permute.xlu0 0
  %769 = vperm.xlu0 %768, %v742
  %v770 = vpop.permute.xlu0 %769
  %771 = vset.pattern.permute.xlu0 0
  %772 = vperm.xlu0 %771, %v743
  %v773 = vpop.permute.xlu0 %772
  %774 = vset.pattern.permute.xlu0 0
  %775 = vperm.xlu0 %774, %v744
  %v776 = vpop.permute.xlu0 %775
  %777 = vset.pattern.permute.xlu0 0
  %778 = vperm.xlu0 %777, %v745
  %v779 = vpop.permute.xlu0 %778
  %780 = vset.pattern.permute.xlu0 0
  %781 = vperm.xlu0 %780, %v746
  %v782 = vpop.permute.xlu0 %781
  %783 = vset.pattern.permute.xlu0 0
  %784 = vperm.xlu0 %783, %v747
  %v785 = vpop.permute.xlu0 %784
  %786 = vset.pattern.permute.xlu0 0
  %787 = vperm.xlu0 %786, %v748
  %v788 = vpop.permute.xlu0 %787
  %789 = vset.pattern.permute.xlu0 0
  %790 = vperm.xlu0 %789, %v749
  %v791 = vpop.permute.xlu0 %790
  %792 = vset.pattern.permute.xlu0 0
  %793 = vperm.xlu0 %792, %v750
  %v794 = vpop.permute.xlu0 %793
  %795 = vset.pattern.permute.xlu0 0
  %796 = vperm.xlu0 %795, %v751
  %v797 = vpop.permute.xlu0 %796
  %798 = vset.pattern.permute.xlu0 0
  %799 = vperm.xlu0 %798, %v752
  %v800 = vpop.permute.xlu0 %799
  %vm801 = vcmp.eq.s32.totalorder %v96, %v755
  %vm802 = vcmp.eq.s32.totalorder %v96, %v758
  %vm803 = vcmp.eq.s32.totalorder %v96, %v761
  %vm804 = vcmp.eq.s32.totalorder %v96, %v764
  %vm805 = vcmp.eq.s32.totalorder %v96, %v767
  %vm806 = vcmp.eq.s32.totalorder %v96, %v770
  %vm807 = vcmp.eq.s32.totalorder %v96, %v773
  %vm808 = vcmp.eq.s32.totalorder %v96, %v776
  %vm809 = vcmp.eq.s32.totalorder %v96, %v779
  %vm810 = vcmp.eq.s32.totalorder %v96, %v782
  %vm811 = vcmp.eq.s32.totalorder %v96, %v785
  %vm812 = vcmp.eq.s32.totalorder %v96, %v788
  %vm813 = vcmp.eq.s32.totalorder %v96, %v791
  %vm814 = vcmp.eq.s32.totalorder %v96, %v794
  %vm815 = vcmp.eq.s32.totalorder %v96, %v797
  %vm816 = vcmp.eq.s32.totalorder %v96, %v800
  %v817 = vsel %vm801, 1, 0
  %v818 = vsel %vm802, 1, 0
  %v819 = vsel %vm803, 1, 0
  %v820 = vsel %vm804, 1, 0
  %v821 = vsel %vm805, 1, 0
  %v822 = vsel %vm806, 1, 0
  %v823 = vsel %vm807, 1, 0
  %v824 = vsel %vm808, 1, 0
  %v825 = vsel %vm809, 1, 0
  %v826 = vsel %vm810, 1, 0
  %v827 = vsel %vm811, 1, 0
  %v828 = vsel %vm812, 1, 0
  %v829 = vsel %vm813, 1, 0
  %v830 = vsel %vm814, 1, 0
  %v831 = vsel %vm815, 1, 0
  %v832 = vsel %vm816, 1, 0
  %v833 = vcvt.s32.f32 %v817
  %v834 = vcvt.s32.f32 %v818
  %v835 = vcvt.s32.f32 %v819
  %v836 = vcvt.s32.f32 %v820
  %v837 = vcvt.s32.f32 %v821
  %v838 = vcvt.s32.f32 %v822
  %v839 = vcvt.s32.f32 %v823
  %v840 = vcvt.s32.f32 %v824
  %v841 = vcvt.s32.f32 %v825
  %v842 = vcvt.s32.f32 %v826
  %v843 = vcvt.s32.f32 %v827
  %v844 = vcvt.s32.f32 %v828
  %v845 = vcvt.s32.f32 %v829
  %v846 = vcvt.s32.f32 %v830
  %v847 = vcvt.s32.f32 %v831
  %v848 = vcvt.s32.f32 %v832
  %849 = vset.pattern.permute.xlu0 1
  %850 = vperm.xlu0 %849, %v737
  %v851 = vpop.permute.xlu0 %850
  %852 = vset.pattern.permute.xlu0 1
  %853 = vperm.xlu0 %852, %v738
  %v854 = vpop.permute.xlu0 %853
  %855 = vset.pattern.permute.xlu0 1
  %856 = vperm.xlu0 %855, %v739
  %v857 = vpop.permute.xlu0 %856
  %858 = vset.pattern.permute.xlu0 1
  %859 = vperm.xlu0 %858, %v740
  %v860 = vpop.permute.xlu0 %859
  %861 = vset.pattern.permute.xlu0 1
  %862 = vperm.xlu0 %861, %v741
  %v863 = vpop.permute.xlu0 %862
  %864 = vset.pattern.permute.xlu0 1
  %865 = vperm.xlu0 %864, %v742
  %v866 = vpop.permute.xlu0 %865
  %867 = vset.pattern.permute.xlu0 1
  %868 = vperm.xlu0 %867, %v743
  %v869 = vpop.permute.xlu0 %868
  %870 = vset.pattern.permute.xlu0 1
  %871 = vperm.xlu0 %870, %v744
  %v872 = vpop.permute.xlu0 %871
  %873 = vset.pattern.permute.xlu0 1
  %874 = vperm.xlu0 %873, %v745
  %v875 = vpop.permute.xlu0 %874
  %876 = vset.pattern.permute.xlu0 1
  %877 = vperm.xlu0 %876, %v746
  %v878 = vpop.permute.xlu0 %877
  %879 = vset.pattern.permute.xlu0 1
  %880 = vperm.xlu0 %879, %v747
  %v881 = vpop.permute.xlu0 %880
  %882 = vset.pattern.permute.xlu0 1
  %883 = vperm.xlu0 %882, %v748
  %v884 = vpop.permute.xlu0 %883
  %885 = vset.pattern.permute.xlu0 1
  %886 = vperm.xlu0 %885, %v749
  %v887 = vpop.permute.xlu0 %886
  %888 = vset.pattern.permute.xlu0 1
  %889 = vperm.xlu0 %888, %v750
  %v890 = vpop.permute.xlu0 %889
  %891 = vset.pattern.permute.xlu0 1
  %892 = vperm.xlu0 %891, %v751
  %v893 = vpop.permute.xlu0 %892
  %894 = vset.pattern.permute.xlu0 1
  %895 = vperm.xlu0 %894, %v752
  %v896 = vpop.permute.xlu0 %895
  %vm897 = vcmp.eq.s32.totalorder %v96, %v851
  %vm898 = vcmp.eq.s32.totalorder %v96, %v854
  %vm899 = vcmp.eq.s32.totalorder %v96, %v857
  %vm900 = vcmp.eq.s32.totalorder %v96, %v860
  %vm901 = vcmp.eq.s32.totalorder %v96, %v863
  %vm902 = vcmp.eq.s32.totalorder %v96, %v866
  %vm903 = vcmp.eq.s32.totalorder %v96, %v869
  %vm904 = vcmp.eq.s32.totalorder %v96, %v872
  %vm905 = vcmp.eq.s32.totalorder %v96, %v875
  %vm906 = vcmp.eq.s32.totalorder %v96, %v878
  %vm907 = vcmp.eq.s32.totalorder %v96, %v881
  %vm908 = vcmp.eq.s32.totalorder %v96, %v884
  %vm909 = vcmp.eq.s32.totalorder %v96, %v887
  %vm910 = vcmp.eq.s32.totalorder %v96, %v890
  %vm911 = vcmp.eq.s32.totalorder %v96, %v893
  %vm912 = vcmp.eq.s32.totalorder %v96, %v896
  %v913 = vsel %vm897, 1, 0
  %v914 = vsel %vm898, 1, 0
  %v915 = vsel %vm899, 1, 0
  %v916 = vsel %vm900, 1, 0
  %v917 = vsel %vm901, 1, 0
  %v918 = vsel %vm902, 1, 0
  %v919 = vsel %vm903, 1, 0
  %v920 = vsel %vm904, 1, 0
  %v921 = vsel %vm905, 1, 0
  %v922 = vsel %vm906, 1, 0
  %v923 = vsel %vm907, 1, 0
  %v924 = vsel %vm908, 1, 0
  %v925 = vsel %vm909, 1, 0
  %v926 = vsel %vm910, 1, 0
  %v927 = vsel %vm911, 1, 0
  %v928 = vsel %vm912, 1, 0
  %v929 = vcvt.s32.f32 %v913
  %v930 = vcvt.s32.f32 %v914
  %v931 = vcvt.s32.f32 %v915
  %v932 = vcvt.s32.f32 %v916
  %v933 = vcvt.s32.f32 %v917
  %v934 = vcvt.s32.f32 %v918
  %v935 = vcvt.s32.f32 %v919
  %v936 = vcvt.s32.f32 %v920
  %v937 = vcvt.s32.f32 %v921
  %v938 = vcvt.s32.f32 %v922
  %v939 = vcvt.s32.f32 %v923
  %v940 = vcvt.s32.f32 %v924
  %v941 = vcvt.s32.f32 %v925
  %v942 = vcvt.s32.f32 %v926
  %v943 = vcvt.s32.f32 %v927
  %v944 = vcvt.s32.f32 %v928
  %v945 = vadd.f32 %v833, %v929
  %v946 = vadd.f32 %v834, %v930
  %v947 = vadd.f32 %v835, %v931
  %v948 = vadd.f32 %v836, %v932
  %v949 = vadd.f32 %v837, %v933
  %v950 = vadd.f32 %v838, %v934
  %v951 = vadd.f32 %v839, %v935
  %v952 = vadd.f32 %v840, %v936
  %v953 = vadd.f32 %v841, %v937
  %v954 = vadd.f32 %v842, %v938
  %v955 = vadd.f32 %v843, %v939
  %v956 = vadd.f32 %v844, %v940
  %v957 = vadd.f32 %v845, %v941
  %v958 = vadd.f32 %v846, %v942
  %v959 = vadd.f32 %v847, %v943
  %v960 = vadd.f32 %v848, %v944
  %v961 = vpack.c.bf16 %v946, %v945
  %v962 = vpack.c.bf16 %v948, %v947
  %v963 = vpack.c.bf16 %v950, %v949
  %v964 = vpack.c.bf16 %v952, %v951
  %v965 = vpack.c.bf16 %v954, %v953
  %v966 = vpack.c.bf16 %v956, %v955
  %v967 = vpack.c.bf16 %v958, %v957
  %v968 = vpack.c.bf16 %v960, %v959
  %969 = vmatprep.subr.bf16.mxu0 0
  %970 = vmatpush1.bf16.msra.mxu0 %v298
  %971 = vmatprep.subr.bf16.mxu0 0
  %972 = vmatpush1.bf16.msra.mxu0 %v299
  %973 = vmatprep.subr.bf16.mxu0 0
  %974 = vmatpush1.bf16.msra.mxu0 %v300
  %975 = vmatprep.subr.bf16.mxu0 0
  %976 = vmatpush1.bf16.msra.mxu0 %v301
  %977 = vmatprep.subr.bf16.mxu0 0
  %978 = vmatpush1.bf16.msra.mxu0 %v302
  %979 = vmatprep.subr.bf16.mxu0 0
  %980 = vmatpush1.bf16.msra.mxu0 %v303
  %981 = vmatprep.subr.bf16.mxu0 0
  %982 = vmatpush1.bf16.msra.mxu0 %v304
  %983 = vmatprep.subr.bf16.mxu0 0
  %984 = vmatpush1.bf16.msra.mxu0 %v305
  %985 = vmatprep.subr.bf16.mxu0 0
  %986 = vmatpush1.bf16.msra.mxu0 0
  %987 = vmatprep.subr.bf16.mxu0 0
  %988 = vmatpush1.bf16.msra.mxu0 0
  %989 = vmatprep.subr.bf16.mxu0 0
  %990 = vmatpush1.bf16.msra.mxu0 0
  %991 = vmatprep.subr.bf16.mxu0 0
  %992 = vmatpush1.bf16.msra.mxu0 0
  %993 = vmatprep.subr.bf16.mxu0 0
  %994 = vmatpush1.bf16.msra.mxu0 0
  %995 = vmatprep.subr.bf16.mxu0 0
  %996 = vmatpush1.bf16.msra.mxu0 0
  %997 = vmatprep.subr.bf16.mxu0 0
  %998 = vmatpush1.bf16.msra.mxu0 0
  %999 = vmatprep.subr.bf16.mxu0 0
  %1000 = vmatpush1.bf16.msra.mxu0 0
  %1001 = vmatprep.mubr.bf16.mxu0 0
  %1002 = vmatmul.mubr.bf16.gmra.mrb[0].mxu0 %v961
  %v1003 = vpop.f32.mrb[0].mxu0
  %v1004 = vadd.f32 0.0, %v1003
  %v1005 = vpop.f32.mrb[0].mxu0
  %v1006 = vpop.f32.mrb[0].mxu0
  %v1007 = vadd.f32 0.0, %v1006
  %v1008 = vpop.f32.mrb[0].mxu0
  %1009 = vmatprep.mubr.bf16.mxu0 0
  %1010 = vmatmul.mubr.bf16.gmra.mrb[0].mxu0 %v962
  %v1011 = vpop.f32.mrb[0].mxu0
  %v1012 = vadd.f32 0.0, %v1011
  %v1013 = vpop.f32.mrb[0].mxu0
  %v1014 = vpop.f32.mrb[0].mxu0
  %v1015 = vadd.f32 0.0, %v1014
  %v1016 = vpop.f32.mrb[0].mxu0
  %1017 = vmatprep.mubr.bf16.mxu0 0
  %1018 = vmatmul.mubr.bf16.gmra.mrb[0].mxu0 %v963
  %v1019 = vpop.f32.mrb[0].mxu0
  %v1020 = vadd.f32 0.0, %v1019
  %v1021 = vpop.f32.mrb[0].mxu0
  %v1022 = vpop.f32.mrb[0].mxu0
  %v1023 = vadd.f32 0.0, %v1022
  %v1024 = vpop.f32.mrb[0].mxu0
  %1025 = vmatprep.mubr.bf16.mxu0 0
  %1026 = vmatmul.mubr.bf16.gmra.mrb[0].mxu0 %v964
  %v1027 = vpop.f32.mrb[0].mxu0
  %v1028 = vadd.f32 0.0, %v1027
  %v1029 = vpop.f32.mrb[0].mxu0
  %v1030 = vpop.f32.mrb[0].mxu0
  %v1031 = vadd.f32 0.0, %v1030
  %v1032 = vpop.f32.mrb[0].mxu0
  %1033 = vmatprep.mubr.bf16.mxu0 0
  %1034 = vmatmul.mubr.bf16.gmra.mrb[0].mxu0 %v965
  %v1035 = vpop.f32.mrb[0].mxu0
  %v1036 = vadd.f32 0.0, %v1035
  %v1037 = vpop.f32.mrb[0].mxu0
  %v1038 = vpop.f32.mrb[0].mxu0
  %v1039 = vadd.f32 0.0, %v1038
  %v1040 = vpop.f32.mrb[0].mxu0
  %1041 = vmatprep.mubr.bf16.mxu0 0
  %1042 = vmatmul.mubr.bf16.gmra.mrb[0].mxu0 %v966
  %v1043 = vpop.f32.mrb[0].mxu0
  %v1044 = vadd.f32 0.0, %v1043
  %v1045 = vpop.f32.mrb[0].mxu0
  %v1046 = vpop.f32.mrb[0].mxu0
  %v1047 = vadd.f32 0.0, %v1046
  %v1048 = vpop.f32.mrb[0].mxu0
  %1049 = vmatprep.mubr.bf16.mxu0 0
  %1050 = vmatmul.mubr.bf16.gmra.mrb[0].mxu0 %v967
  %v1051 = vpop.f32.mrb[0].mxu0
  %v1052 = vadd.f32 0.0, %v1051
  %v1053 = vpop.f32.mrb[0].mxu0
  %v1054 = vpop.f32.mrb[0].mxu0
  %v1055 = vadd.f32 0.0, %v1054
  %v1056 = vpop.f32.mrb[0].mxu0
  %1057 = vmatprep.mubr.bf16.mxu0 0
  %1058 = vmatmul.mubr.bf16.gmra.mrb[0].mxu0 %v968
  %v1059 = vpop.f32.mrb[0].mxu0
  %v1060 = vadd.f32 0.0, %v1059
  %v1061 = vpop.f32.mrb[0].mxu0
  %v1062 = vpop.f32.mrb[0].mxu0
  %v1063 = vadd.f32 0.0, %v1062
  %v1064 = vpop.f32.mrb[0].mxu0
  %1065 = vdwg.mxu0
  %v1066 = vpack.c.bf16 %v1007, %v1004
  %v1067 = vpack.c.bf16 %v1015, %v1012
  %v1068 = vpack.c.bf16 %v1023, %v1020
  %v1069 = vpack.c.bf16 %v1031, %v1028
  %v1070 = vpack.c.bf16 %v1039, %v1036
  %v1071 = vpack.c.bf16 %v1047, %v1044
  %v1072 = vpack.c.bf16 %v1055, %v1052
  %v1073 = vpack.c.bf16 %v1063, %v1060
  %v1074 = vld [vmem:[%s8] sm:$0xf]
  %v1075 = vld [vmem:[%s8 + $0x4] sm:$0xf]
  %v1076 = vld [vmem:[%s8 + $0x8] sm:$0xf]
  %v1077 = vld [vmem:[%s8 + $0xc] sm:$0xf]
  %v1078 = vld [vmem:[%s8 + $0x10] sm:$0xf]
  %v1079 = vld [vmem:[%s8 + $0x14] sm:$0xf]
  %v1080 = vld [vmem:[%s8 + $0x18] sm:$0xf]
  %v1081 = vld [vmem:[%s8 + $0x1c] sm:$0xf]
  %v1082 = vld [vmem:[%s8 + $0x20] sm:$0xf]
  %v1083 = vld [vmem:[%s8 + $0x24] sm:$0xf]
  %v1084 = vld [vmem:[%s8 + $0x28] sm:$0xf]
  %v1085 = vld [vmem:[%s8 + $0x2c] sm:$0xf]
  %v1086 = vld [vmem:[%s8 + $0x30] sm:$0xf]
  %v1087 = vld [vmem:[%s8 + $0x34] sm:$0xf]
  %v1088 = vld [vmem:[%s8 + $0x38] sm:$0xf]
  %v1089 = vld [vmem:[%s8 + $0x3c] sm:$0xf]
  %v1090 = vld [vmem:[%s9] sm:$0xf]
  %v1091 = vld [vmem:[%s9 + $0x4] sm:$0xf]
  %v1092 = vld [vmem:[%s9 + $0x8] sm:$0xf]
  %v1093 = vld [vmem:[%s9 + $0xc] sm:$0xf]
  %v1094 = vld [vmem:[%s9 + $0x10] sm:$0xf]
  %v1095 = vld [vmem:[%s9 + $0x14] sm:$0xf]
  %v1096 = vld [vmem:[%s9 + $0x18] sm:$0xf]
  %v1097 = vld [vmem:[%s9 + $0x1c] sm:$0xf]
  %v1098 = vld [vmem:[%s9 + $0x20] sm:$0xf]
  %v1099 = vld [vmem:[%s9 + $0x24] sm:$0xf]
  %v1100 = vld [vmem:[%s9 + $0x28] sm:$0xf]
  %v1101 = vld [vmem:[%s9 + $0x2c] sm:$0xf]
  %v1102 = vld [vmem:[%s9 + $0x30] sm:$0xf]
  %v1103 = vld [vmem:[%s9 + $0x34] sm:$0xf]
  %v1104 = vld [vmem:[%s9 + $0x38] sm:$0xf]
  %v1105 = vld [vmem:[%s9 + $0x3c] sm:$0xf]
  %v1122 = vunpack.c.l.b16 %v1090
  %v1123 = vunpack.c.l.b16 %v1091
  %v1124 = vunpack.c.l.b16 %v1092
  %v1125 = vunpack.c.l.b16 %v1093
  %v1126 = vunpack.c.l.b16 %v1094
  %v1127 = vunpack.c.l.b16 %v1095
  %v1128 = vunpack.c.l.b16 %v1096
  %v1129 = vunpack.c.l.b16 %v1097
  %v1130 = vunpack.c.l.b16 %v1098
  %v1131 = vunpack.c.l.b16 %v1099
  %v1132 = vunpack.c.l.b16 %v1100
  %v1133 = vunpack.c.l.b16 %v1101
  %v1134 = vunpack.c.l.b16 %v1102
  %v1135 = vunpack.c.l.b16 %v1103
  %v1136 = vunpack.c.l.b16 %v1104
  %v1137 = vunpack.c.l.b16 %v1105
  %v1138 = vpack.c.b16 %v1123, %v1122
  %v1139 = vpack.c.b16 %v1125, %v1124
  %v1140 = vpack.c.b16 %v1127, %v1126
  %v1141 = vpack.c.b16 %v1129, %v1128
  %v1142 = vpack.c.b16 %v1131, %v1130
  %v1143 = vpack.c.b16 %v1133, %v1132
  %v1144 = vpack.c.b16 %v1135, %v1134
  %v1145 = vpack.c.b16 %v1137, %v1136
  %1154 = vmatprep.subr.bf16.mxu0 0
  %1155 = vmatpush1.bf16.msra.mxu0 %v1138
  %1156 = vmatprep.subr.bf16.mxu0 0
  %1157 = vmatpush1.bf16.msra.mxu0 %v1139
  %1158 = vmatprep.subr.bf16.mxu0 0
  %1159 = vmatpush1.bf16.msra.mxu0 %v1140
  %1160 = vmatprep.subr.bf16.mxu0 0
  %1161 = vmatpush1.bf16.msra.mxu0 %v1141
  %1162 = vmatprep.subr.bf16.mxu0 0
  %1163 = vmatpush1.bf16.msra.mxu0 %v1142
  %1164 = vmatprep.subr.bf16.mxu0 0
  %1165 = vmatpush1.bf16.msra.mxu0 %v1143
  %1166 = vmatprep.subr.bf16.mxu0 0
  %1167 = vmatpush1.bf16.msra.mxu0 %v1144
  %1168 = vmatprep.subr.bf16.mxu0 0
  %1169 = vmatpush1.bf16.msra.mxu0 %v1145
  %1170 = vmatprep.subr.bf16.mxu0 0
  %1171 = vmatpush1.bf16.msra.mxu0 0
  %1172 = vmatprep.subr.bf16.mxu0 0
  %1173 = vmatpush1.bf16.msra.mxu0 0
  %1174 = vmatprep.subr.bf16.mxu0 0
  %1175 = vmatpush1.bf16.msra.mxu0 0
  %1176 = vmatprep.subr.bf16.mxu0 0
  %1177 = vmatpush1.bf16.msra.mxu0 0
  %1178 = vmatprep.subr.bf16.mxu0 0
  %1179 = vmatpush1.bf16.msra.mxu0 0
  %1180 = vmatprep.subr.bf16.mxu0 0
  %1181 = vmatpush1.bf16.msra.mxu0 0
  %1182 = vmatprep.subr.bf16.mxu0 0
  %1183 = vmatpush1.bf16.msra.mxu0 0
  %1184 = vmatprep.subr.bf16.mxu0 0
  %1185 = vmatpush1.bf16.msra.mxu0 0
  %1186 = vmatprep.mubr.bf16.mxu0 0
  %1187 = vmatmul.mubr.bf16.gmra.mrb[0].mxu0 %v523
  %v1188 = vpop.f32.mrb[0].mxu0
  %v1189 = vadd.f32 0.0, %v1188
  %v1190 = vpop.f32.mrb[0].mxu0
  %v1191 = vpop.f32.mrb[0].mxu0
  %v1192 = vadd.f32 0.0, %v1191
  %v1193 = vpop.f32.mrb[0].mxu0
  %1194 = vmatprep.mubr.bf16.mxu0 0
  %1195 = vmatmul.mubr.bf16.gmra.mrb[0].mxu0 %v524
  %v1196 = vpop.f32.mrb[0].mxu0
  %v1197 = vadd.f32 0.0, %v1196
  %v1198 = vpop.f32.mrb[0].mxu0
  %v1199 = vpop.f32.mrb[0].mxu0
  %v1200 = vadd.f32 0.0, %v1199
  %v1201 = vpop.f32.mrb[0].mxu0
  %1202 = vmatprep.mubr.bf16.mxu0 0
  %1203 = vmatmul.mubr.bf16.gmra.mrb[0].mxu0 %v525
  %v1204 = vpop.f32.mrb[0].mxu0
  %v1205 = vadd.f32 0.0, %v1204
  %v1206 = vpop.f32.mrb[0].mxu0
  %v1207 = vpop.f32.mrb[0].mxu0
  %v1208 = vadd.f32 0.0, %v1207
  %v1209 = vpop.f32.mrb[0].mxu0
  %1210 = vmatprep.mubr.bf16.mxu0 0
  %1211 = vmatmul.mubr.bf16.gmra.mrb[0].mxu0 %v526
  %v1212 = vpop.f32.mrb[0].mxu0
  %v1213 = vadd.f32 0.0, %v1212
  %v1214 = vpop.f32.mrb[0].mxu0
  %v1215 = vpop.f32.mrb[0].mxu0
  %v1216 = vadd.f32 0.0, %v1215
  %v1217 = vpop.f32.mrb[0].mxu0
  %1218 = vmatprep.mubr.bf16.mxu0 0
  %1219 = vmatmul.mubr.bf16.gmra.mrb[0].mxu0 %v527
  %v1220 = vpop.f32.mrb[0].mxu0
  %v1221 = vadd.f32 0.0, %v1220
  %v1222 = vpop.f32.mrb[0].mxu0
  %v1223 = vpop.f32.mrb[0].mxu0
  %v1224 = vadd.f32 0.0, %v1223
  %v1225 = vpop.f32.mrb[0].mxu0
  %1226 = vmatprep.mubr.bf16.mxu0 0
  %1227 = vmatmul.mubr.bf16.gmra.mrb[0].mxu0 %v528
  %v1228 = vpop.f32.mrb[0].mxu0
  %v1229 = vadd.f32 0.0, %v1228
  %v1230 = vpop.f32.mrb[0].mxu0
  %v1231 = vpop.f32.mrb[0].mxu0
  %v1232 = vadd.f32 0.0, %v1231
  %v1233 = vpop.f32.mrb[0].mxu0
  %1234 = vmatprep.mubr.bf16.mxu0 0
  %1235 = vmatmul.mubr.bf16.gmra.mrb[0].mxu0 %v529
  %v1236 = vpop.f32.mrb[0].mxu0
  %v1237 = vadd.f32 0.0, %v1236
  %v1238 = vpop.f32.mrb[0].mxu0
  %v1239 = vpop.f32.mrb[0].mxu0
  %v1240 = vadd.f32 0.0, %v1239
  %v1241 = vpop.f32.mrb[0].mxu0
  %1242 = vmatprep.mubr.bf16.mxu0 0
  %1243 = vmatmul.mubr.bf16.gmra.mrb[0].mxu0 %v530
  %v1244 = vpop.f32.mrb[0].mxu0
  %v1245 = vadd.f32 0.0, %v1244
  %v1246 = vpop.f32.mrb[0].mxu0
  %v1247 = vpop.f32.mrb[0].mxu0
  %v1248 = vadd.f32 0.0, %v1247
  %v1249 = vpop.f32.mrb[0].mxu0
  %1250 = vdwg.mxu0
  %v1267 = vunpack.c.l.b16 %v1074
  %v1268 = vunpack.c.l.b16 %v1075
  %v1269 = vunpack.c.l.b16 %v1076
  %v1270 = vunpack.c.l.b16 %v1077
  %v1271 = vunpack.c.l.b16 %v1078
  %v1272 = vunpack.c.l.b16 %v1079
  %v1273 = vunpack.c.l.b16 %v1080
  %v1274 = vunpack.c.l.b16 %v1081
  %v1275 = vunpack.c.l.b16 %v1082
  %v1276 = vunpack.c.l.b16 %v1083
  %v1277 = vunpack.c.l.b16 %v1084
  %v1278 = vunpack.c.l.b16 %v1085
  %v1279 = vunpack.c.l.b16 %v1086
  %v1280 = vunpack.c.l.b16 %v1087
  %v1281 = vunpack.c.l.b16 %v1088
  %v1282 = vunpack.c.l.b16 %v1089
  %v1283 = vpack.c.b16 %v1268, %v1267
  %v1284 = vpack.c.b16 %v1270, %v1269
  %v1285 = vpack.c.b16 %v1272, %v1271
  %v1286 = vpack.c.b16 %v1274, %v1273
  %v1287 = vpack.c.b16 %v1276, %v1275
  %v1288 = vpack.c.b16 %v1278, %v1277
  %v1289 = vpack.c.b16 %v1280, %v1279
  %v1290 = vpack.c.b16 %v1282, %v1281
  %1299 = vmatprep.subr.bf16.mxu0 0
  %1300 = vmatpush1.bf16.msra.mxu0 %v1283
  %1301 = vmatprep.subr.bf16.mxu0 0
  %1302 = vmatpush1.bf16.msra.mxu0 %v1284
  %1303 = vmatprep.subr.bf16.mxu0 0
  %1304 = vmatpush1.bf16.msra.mxu0 %v1285
  %1305 = vmatprep.subr.bf16.mxu0 0
  %1306 = vmatpush1.bf16.msra.mxu0 %v1286
  %1307 = vmatprep.subr.bf16.mxu0 0
  %1308 = vmatpush1.bf16.msra.mxu0 %v1287
  %1309 = vmatprep.subr.bf16.mxu0 0
  %1310 = vmatpush1.bf16.msra.mxu0 %v1288
  %1311 = vmatprep.subr.bf16.mxu0 0
  %1312 = vmatpush1.bf16.msra.mxu0 %v1289
  %1313 = vmatprep.subr.bf16.mxu0 0
  %1314 = vmatpush1.bf16.msra.mxu0 %v1290
  %1315 = vmatprep.subr.bf16.mxu0 0
  %1316 = vmatpush1.bf16.msra.mxu0 0
  %1317 = vmatprep.subr.bf16.mxu0 0
  %1318 = vmatpush1.bf16.msra.mxu0 0
  %1319 = vmatprep.subr.bf16.mxu0 0
  %1320 = vmatpush1.bf16.msra.mxu0 0
  %1321 = vmatprep.subr.bf16.mxu0 0
  %1322 = vmatpush1.bf16.msra.mxu0 0
  %1323 = vmatprep.subr.bf16.mxu0 0
  %1324 = vmatpush1.bf16.msra.mxu0 0
  %1325 = vmatprep.subr.bf16.mxu0 0
  %1326 = vmatpush1.bf16.msra.mxu0 0
  %1327 = vmatprep.subr.bf16.mxu0 0
  %1328 = vmatpush1.bf16.msra.mxu0 0
  %1329 = vmatprep.subr.bf16.mxu0 0
  %1330 = vmatpush1.bf16.msra.mxu0 0
  %1331 = vmatprep.mubr.bf16.mxu0 0
  %1332 = vmatmul.mubr.bf16.gmra.mrb[0].mxu0 %v1066
  %v1333 = vpop.f32.mrb[0].mxu0
  %v1334 = vadd.f32 %v1189, %v1333
  %v1335 = vpop.f32.mrb[0].mxu0
  %v1336 = vpop.f32.mrb[0].mxu0
  %v1337 = vadd.f32 %v1192, %v1336
  %v1338 = vpop.f32.mrb[0].mxu0
  %1339 = vmatprep.mubr.bf16.mxu0 0
  %1340 = vmatmul.mubr.bf16.gmra.mrb[0].mxu0 %v1067
  %v1341 = vpop.f32.mrb[0].mxu0
  %v1342 = vadd.f32 %v1197, %v1341
  %v1343 = vpop.f32.mrb[0].mxu0
  %v1344 = vpop.f32.mrb[0].mxu0
  %v1345 = vadd.f32 %v1200, %v1344
  %v1346 = vpop.f32.mrb[0].mxu0
  %1347 = vmatprep.mubr.bf16.mxu0 0
  %1348 = vmatmul.mubr.bf16.gmra.mrb[0].mxu0 %v1068
  %v1349 = vpop.f32.mrb[0].mxu0
  %v1350 = vadd.f32 %v1205, %v1349
  %v1351 = vpop.f32.mrb[0].mxu0
  %v1352 = vpop.f32.mrb[0].mxu0
  %v1353 = vadd.f32 %v1208, %v1352
  %v1354 = vpop.f32.mrb[0].mxu0
  %1355 = vmatprep.mubr.bf16.mxu0 0
  %1356 = vmatmul.mubr.bf16.gmra.mrb[0].mxu0 %v1069
  %v1357 = vpop.f32.mrb[0].mxu0
  %v1358 = vadd.f32 %v1213, %v1357
  %v1359 = vpop.f32.mrb[0].mxu0
  %v1360 = vpop.f32.mrb[0].mxu0
  %v1361 = vadd.f32 %v1216, %v1360
  %v1362 = vpop.f32.mrb[0].mxu0
  %1363 = vmatprep.mubr.bf16.mxu0 0
  %1364 = vmatmul.mubr.bf16.gmra.mrb[0].mxu0 %v1070
  %v1365 = vpop.f32.mrb[0].mxu0
  %v1366 = vadd.f32 %v1221, %v1365
  %v1367 = vpop.f32.mrb[0].mxu0
  %v1368 = vpop.f32.mrb[0].mxu0
  %v1369 = vadd.f32 %v1224, %v1368
  %v1370 = vpop.f32.mrb[0].mxu0
  %1371 = vmatprep.mubr.bf16.mxu0 0
  %1372 = vmatmul.mubr.bf16.gmra.mrb[0].mxu0 %v1071
  %v1373 = vpop.f32.mrb[0].mxu0
  %v1374 = vadd.f32 %v1229, %v1373
  %v1375 = vpop.f32.mrb[0].mxu0
  %v1376 = vpop.f32.mrb[0].mxu0
  %v1377 = vadd.f32 %v1232, %v1376
  %v1378 = vpop.f32.mrb[0].mxu0
  %1379 = vmatprep.mubr.bf16.mxu0 0
  %1380 = vmatmul.mubr.bf16.gmra.mrb[0].mxu0 %v1072
  %v1381 = vpop.f32.mrb[0].mxu0
  %v1382 = vadd.f32 %v1237, %v1381
  %v1383 = vpop.f32.mrb[0].mxu0
  %v1384 = vpop.f32.mrb[0].mxu0
  %v1385 = vadd.f32 %v1240, %v1384
  %v1386 = vpop.f32.mrb[0].mxu0
  %1387 = vmatprep.mubr.bf16.mxu0 0
  %1388 = vmatmul.mubr.bf16.gmra.mrb[0].mxu0 %v1073
  %v1389 = vpop.f32.mrb[0].mxu0
  %v1390 = vadd.f32 %v1245, %v1389
  %v1391 = vpop.f32.mrb[0].mxu0
  %v1392 = vpop.f32.mrb[0].mxu0
  %v1393 = vadd.f32 %v1248, %v1392
  %v1394 = vpop.f32.mrb[0].mxu0
  %1395 = vdwg.mxu0
  %v1396 = vld [vmem:[%s11] sm:$0x1]
  %v1398 = vlaneseq
  %v1399 = vshrl.u32 %v1398, 7
  %v1400 = vsub.s32 0, %v1399
  %v1401 = vrot.slane %v1396, %v1400
  %v1403 = vadd.f32 %v1334, %v1401
  %v1404 = vadd.f32 %v1337, %v1401
  %v1405 = vadd.f32 %v1342, %v1401
  %v1406 = vadd.f32 %v1345, %v1401
  %v1407 = vadd.f32 %v1350, %v1401
  %v1408 = vadd.f32 %v1353, %v1401
  %v1409 = vadd.f32 %v1358, %v1401
  %v1410 = vadd.f32 %v1361, %v1401
  %v1411 = vadd.f32 %v1366, %v1401
  %v1412 = vadd.f32 %v1369, %v1401
  %v1413 = vadd.f32 %v1374, %v1401
  %v1414 = vadd.f32 %v1377, %v1401
  %v1415 = vadd.f32 %v1382, %v1401
  %v1416 = vadd.f32 %v1385, %v1401
  %v1417 = vadd.f32 %v1390, %v1401
  %v1418 = vadd.f32 %v1393, %v1401
  %v1419 = vmax.f32 %v1403, 0.0
  %v1420 = vmax.f32 %v1404, 0.0
  %v1421 = vmax.f32 %v1405, 0.0
  %v1422 = vmax.f32 %v1406, 0.0
  %v1423 = vmax.f32 %v1407, 0.0
  %v1424 = vmax.f32 %v1408, 0.0
  %v1425 = vmax.f32 %v1409, 0.0
  %v1426 = vmax.f32 %v1410, 0.0
  %v1427 = vmax.f32 %v1411, 0.0
  %v1428 = vmax.f32 %v1412, 0.0
  %v1429 = vmax.f32 %v1413, 0.0
  %v1430 = vmax.f32 %v1414, 0.0
  %v1431 = vmax.f32 %v1415, 0.0
  %v1432 = vmax.f32 %v1416, 0.0
  %v1433 = vmax.f32 %v1417, 0.0
  %v1434 = vmax.f32 %v1418, 0.0
  %v1435 = vpack.c.bf16 %v1420, %v1419
  %v1436 = vpack.c.bf16 %v1422, %v1421
  %v1437 = vpack.c.bf16 %v1424, %v1423
  %v1438 = vpack.c.bf16 %v1426, %v1425
  %v1439 = vpack.c.bf16 %v1428, %v1427
  %v1440 = vpack.c.bf16 %v1430, %v1429
  %v1441 = vpack.c.bf16 %v1432, %v1431
  %v1442 = vpack.c.bf16 %v1434, %v1433
  %1443 = vst [vmem:[#allocation3] sm:$0xff] %v1435
  %1444 = vst [vmem:[#allocation3 + $0x8] sm:$0xff] %v1436
  %1445 = vst [vmem:[#allocation3 + $0x10] sm:$0xff] %v1437
  %1446 = vst [vmem:[#allocation3 + $0x18] sm:$0xff] %v1438
  %1447 = vst [vmem:[#allocation3 + $0x20] sm:$0xff] %v1439
  %1448 = vst [vmem:[#allocation3 + $0x28] sm:$0xff] %v1440
  %1449 = vst [vmem:[#allocation3 + $0x30] sm:$0xff] %v1441
  %1450 = vst [vmem:[#allocation3 + $0x38] sm:$0xff] %v1442
  %v1451 = vld [vmem:[#allocation2] sm:$0xff]
  %v1452 = vld [vmem:[#allocation2 + $0x8] sm:$0xff]
  %v1453 = vld [vmem:[#allocation2 + $0x10] sm:$0xff]
  %v1454 = vld [vmem:[#allocation2 + $0x18] sm:$0xff]
  %v1455 = vld [vmem:[#allocation2 + $0x20] sm:$0xff]
  %v1456 = vld [vmem:[#allocation2 + $0x28] sm:$0xff]
  %v1457 = vld [vmem:[#allocation2 + $0x30] sm:$0xff]
  %v1458 = vld [vmem:[#allocation2 + $0x38] sm:$0xff]
  %v1459 = vld [vmem:[#allocation2 + $0x40] sm:$0xff]
  %v1460 = vld [vmem:[#allocation2 + $0x48] sm:$0xff]
  %v1461 = vld [vmem:[#allocation2 + $0x50] sm:$0xff]
  %v1462 = vld [vmem:[#allocation2 + $0x58] sm:$0xff]
  %v1463 = vld [vmem:[#allocation2 + $0x60] sm:$0xff]
  %v1464 = vld [vmem:[#allocation2 + $0x68] sm:$0xff]
  %v1465 = vld [vmem:[#allocation2 + $0x70] sm:$0xff]
  %v1466 = vld [vmem:[#allocation2 + $0x78] sm:$0xff]
  %v1467 = vpack.c.bf16 %v1452, %v1451
  %v1468 = vpack.c.bf16 %v1454, %v1453
  %v1469 = vpack.c.bf16 %v1456, %v1455
  %v1470 = vpack.c.bf16 %v1458, %v1457
  %v1471 = vpack.c.bf16 %v1460, %v1459
  %v1472 = vpack.c.bf16 %v1462, %v1461
  %v1473 = vpack.c.bf16 %v1464, %v1463
  %v1474 = vpack.c.bf16 %v1466, %v1465
  %v1475 = vld [vmem:[%s6] sm:$0xf]
  %v1476 = vld [vmem:[%s6 + $0x4] sm:$0xf]
  %v1477 = vld [vmem:[%s6 + $0x8] sm:$0xf]
  %v1478 = vld [vmem:[%s6 + $0xc] sm:$0xf]
  %v1479 = vld [vmem:[%s6 + $0x10] sm:$0xf]
  %v1480 = vld [vmem:[%s6 + $0x14] sm:$0xf]
  %v1481 = vld [vmem:[%s6 + $0x18] sm:$0xf]
  %v1482 = vld [vmem:[%s6 + $0x1c] sm:$0xf]
  %v1483 = vld [vmem:[%s6 + $0x20] sm:$0xf]
  %v1484 = vld [vmem:[%s6 + $0x24] sm:$0xf]
  %v1485 = vld [vmem:[%s6 + $0x28] sm:$0xf]
  %v1486 = vld [vmem:[%s6 + $0x2c] sm:$0xf]
  %v1487 = vld [vmem:[%s6 + $0x30] sm:$0xf]
  %v1488 = vld [vmem:[%s6 + $0x34] sm:$0xf]
  %v1489 = vld [vmem:[%s6 + $0x38] sm:$0xf]
  %v1490 = vld [vmem:[%s6 + $0x3c] sm:$0xf]
  %v1491 = vld [vmem:[%s7] sm:$0xf]
  %v1492 = vld [vmem:[%s7 + $0x4] sm:$0xf]
  %v1493 = vld [vmem:[%s7 + $0x8] sm:$0xf]
  %v1494 = vld [vmem:[%s7 + $0xc] sm:$0xf]
  %v1495 = vld [vmem:[%s7 + $0x10] sm:$0xf]
  %v1496 = vld [vmem:[%s7 + $0x14] sm:$0xf]
  %v1497 = vld [vmem:[%s7 + $0x18] sm:$0xf]
  %v1498 = vld [vmem:[%s7 + $0x1c] sm:$0xf]
  %v1499 = vld [vmem:[%s7 + $0x20] sm:$0xf]
  %v1500 = vld [vmem:[%s7 + $0x24] sm:$0xf]
  %v1501 = vld [vmem:[%s7 + $0x28] sm:$0xf]
  %v1502 = vld [vmem:[%s7 + $0x2c] sm:$0xf]
  %v1503 = vld [vmem:[%s7 + $0x30] sm:$0xf]
  %v1504 = vld [vmem:[%s7 + $0x34] sm:$0xf]
  %v1505 = vld [vmem:[%s7 + $0x38] sm:$0xf]
  %v1506 = vld [vmem:[%s7 + $0x3c] sm:$0xf]
  %v1523 = vunpack.c.l.b16 %v1491
  %v1524 = vunpack.c.l.b16 %v1492
  %v1525 = vunpack.c.l.b16 %v1493
  %v1526 = vunpack.c.l.b16 %v1494
  %v1527 = vunpack.c.l.b16 %v1495
  %v1528 = vunpack.c.l.b16 %v1496
  %v1529 = vunpack.c.l.b16 %v1497
  %v1530 = vunpack.c.l.b16 %v1498
  %v1531 = vunpack.c.l.b16 %v1499
  %v1532 = vunpack.c.l.b16 %v1500
  %v1533 = vunpack.c.l.b16 %v1501
  %v1534 = vunpack.c.l.b16 %v1502
  %v1535 = vunpack.c.l.b16 %v1503
  %v1536 = vunpack.c.l.b16 %v1504
  %v1537 = vunpack.c.l.b16 %v1505
  %v1538 = vunpack.c.l.b16 %v1506
  %v1539 = vpack.c.b16 %v1524, %v1523
  %v1540 = vpack.c.b16 %v1526, %v1525
  %v1541 = vpack.c.b16 %v1528, %v1527
  %v1542 = vpack.c.b16 %v1530, %v1529
  %v1543 = vpack.c.b16 %v1532, %v1531
  %v1544 = vpack.c.b16 %v1534, %v1533
  %v1545 = vpack.c.b16 %v1536, %v1535
  %v1546 = vpack.c.b16 %v1538, %v1537
  %1555 = vmatprep.subr.bf16.mxu0 0
  %1556 = vmatpush1.bf16.msra.mxu0 %v1539
  %1557 = vmatprep.subr.bf16.mxu0 0
  %1558 = vmatpush1.bf16.msra.mxu0 %v1540
  %1559 = vmatprep.subr.bf16.mxu0 0
  %1560 = vmatpush1.bf16.msra.mxu0 %v1541
  %1561 = vmatprep.subr.bf16.mxu0 0
  %1562 = vmatpush1.bf16.msra.mxu0 %v1542
  %1563 = vmatprep.subr.bf16.mxu0 0
  %1564 = vmatpush1.bf16.msra.mxu0 %v1543
  %1565 = vmatprep.subr.bf16.mxu0 0
  %1566 = vmatpush1.bf16.msra.mxu0 %v1544
  %1567 = vmatprep.subr.bf16.mxu0 0
  %1568 = vmatpush1.bf16.msra.mxu0 %v1545
  %1569 = vmatprep.subr.bf16.mxu0 0
  %1570 = vmatpush1.bf16.msra.mxu0 %v1546
  %1571 = vmatprep.subr.bf16.mxu0 0
  %1572 = vmatpush1.bf16.msra.mxu0 0
  %1573 = vmatprep.subr.bf16.mxu0 0
  %1574 = vmatpush1.bf16.msra.mxu0 0
  %1575 = vmatprep.subr.bf16.mxu0 0
  %1576 = vmatpush1.bf16.msra.mxu0 0
  %1577 = vmatprep.subr.bf16.mxu0 0
  %1578 = vmatpush1.bf16.msra.mxu0 0
  %1579 = vmatprep.subr.bf16.mxu0 0
  %1580 = vmatpush1.bf16.msra.mxu0 0
  %1581 = vmatprep.subr.bf16.mxu0 0
  %1582 = vmatpush1.bf16.msra.mxu0 0
  %1583 = vmatprep.subr.bf16.mxu0 0
  %1584 = vmatpush1.bf16.msra.mxu0 0
  %1585 = vmatprep.subr.bf16.mxu0 0
  %1586 = vmatpush1.bf16.msra.mxu0 0
  %1587 = vmatprep.mubr.bf16.mxu0 0
  %1588 = vmatmul.mubr.bf16.gmra.mrb[0].mxu0 %v298
  %v1589 = vpop.f32.mrb[0].mxu0
  %v1590 = vadd.f32 0.0, %v1589
  %v1591 = vpop.f32.mrb[0].mxu0
  %v1592 = vpop.f32.mrb[0].mxu0
  %v1593 = vadd.f32 0.0, %v1592
  %v1594 = vpop.f32.mrb[0].mxu0
  %1595 = vmatprep.mubr.bf16.mxu0 0
  %1596 = vmatmul.mubr.bf16.gmra.mrb[0].mxu0 %v299
  %v1597 = vpop.f32.mrb[0].mxu0
  %v1598 = vadd.f32 0.0, %v1597
  %v1599 = vpop.f32.mrb[0].mxu0
  %v1600 = vpop.f32.mrb[0].mxu0
  %v1601 = vadd.f32 0.0, %v1600
  %v1602 = vpop.f32.mrb[0].mxu0
  %1603 = vmatprep.mubr.bf16.mxu0 0
  %1604 = vmatmul.mubr.bf16.gmra.mrb[0].mxu0 %v300
  %v1605 = vpop.f32.mrb[0].mxu0
  %v1606 = vadd.f32 0.0, %v1605
  %v1607 = vpop.f32.mrb[0].mxu0
  %v1608 = vpop.f32.mrb[0].mxu0
  %v1609 = vadd.f32 0.0, %v1608
  %v1610 = vpop.f32.mrb[0].mxu0
  %1611 = vmatprep.mubr.bf16.mxu0 0
  %1612 = vmatmul.mubr.bf16.gmra.mrb[0].mxu0 %v301
  %v1613 = vpop.f32.mrb[0].mxu0
  %v1614 = vadd.f32 0.0, %v1613
  %v1615 = vpop.f32.mrb[0].mxu0
  %v1616 = vpop.f32.mrb[0].mxu0
  %v1617 = vadd.f32 0.0, %v1616
  %v1618 = vpop.f32.mrb[0].mxu0
  %1619 = vmatprep.mubr.bf16.mxu0 0
  %1620 = vmatmul.mubr.bf16.gmra.mrb[0].mxu0 %v302
  %v1621 = vpop.f32.mrb[0].mxu0
  %v1622 = vadd.f32 0.0, %v1621
  %v1623 = vpop.f32.mrb[0].mxu0
  %v1624 = vpop.f32.mrb[0].mxu0
  %v1625 = vadd.f32 0.0, %v1624
  %v1626 = vpop.f32.mrb[0].mxu0
  %1627 = vmatprep.mubr.bf16.mxu0 0
  %1628 = vmatmul.mubr.bf16.gmra.mrb[0].mxu0 %v303
  %v1629 = vpop.f32.mrb[0].mxu0
  %v1630 = vadd.f32 0.0, %v1629
  %v1631 = vpop.f32.mrb[0].mxu0
  %v1632 = vpop.f32.mrb[0].mxu0
  %v1633 = vadd.f32 0.0, %v1632
  %v1634 = vpop.f32.mrb[0].mxu0
  %1635 = vmatprep.mubr.bf16.mxu0 0
  %1636 = vmatmul.mubr.bf16.gmra.mrb[0].mxu0 %v304
  %v1637 = vpop.f32.mrb[0].mxu0
  %v1638 = vadd.f32 0.0, %v1637
  %v1639 = vpop.f32.mrb[0].mxu0
  %v1640 = vpop.f32.mrb[0].mxu0
  %v1641 = vadd.f32 0.0, %v1640
  %v1642 = vpop.f32.mrb[0].mxu0
  %1643 = vmatprep.mubr.bf16.mxu0 0
  %1644 = vmatmul.mubr.bf16.gmra.mrb[0].mxu0 %v305
  %v1645 = vpop.f32.mrb[0].mxu0
  %v1646 = vadd.f32 0.0, %v1645
  %v1647 = vpop.f32.mrb[0].mxu0
  %v1648 = vpop.f32.mrb[0].mxu0
  %v1649 = vadd.f32 0.0, %v1648
  %v1650 = vpop.f32.mrb[0].mxu0
  %1651 = vdwg.mxu0
  %v1668 = vunpack.c.l.b16 %v1475
  %v1669 = vunpack.c.l.b16 %v1476
  %v1670 = vunpack.c.l.b16 %v1477
  %v1671 = vunpack.c.l.b16 %v1478
  %v1672 = vunpack.c.l.b16 %v1479
  %v1673 = vunpack.c.l.b16 %v1480
  %v1674 = vunpack.c.l.b16 %v1481
  %v1675 = vunpack.c.l.b16 %v1482
  %v1676 = vunpack.c.l.b16 %v1483
  %v1677 = vunpack.c.l.b16 %v1484
  %v1678 = vunpack.c.l.b16 %v1485
  %v1679 = vunpack.c.l.b16 %v1486
  %v1680 = vunpack.c.l.b16 %v1487
  %v1681 = vunpack.c.l.b16 %v1488
  %v1682 = vunpack.c.l.b16 %v1489
  %v1683 = vunpack.c.l.b16 %v1490
  %v1684 = vpack.c.b16 %v1669, %v1668
  %v1685 = vpack.c.b16 %v1671, %v1670
  %v1686 = vpack.c.b16 %v1673, %v1672
  %v1687 = vpack.c.b16 %v1675, %v1674
  %v1688 = vpack.c.b16 %v1677, %v1676
  %v1689 = vpack.c.b16 %v1679, %v1678
  %v1690 = vpack.c.b16 %v1681, %v1680
  %v1691 = vpack.c.b16 %v1683, %v1682
  %1700 = vmatprep.subr.bf16.mxu0 0
  %1701 = vmatpush1.bf16.msra.mxu0 %v1684
  %1702 = vmatprep.subr.bf16.mxu0 0
  %1703 = vmatpush1.bf16.msra.mxu0 %v1685
  %1704 = vmatprep.subr.bf16.mxu0 0
  %1705 = vmatpush1.bf16.msra.mxu0 %v1686
  %1706 = vmatprep.subr.bf16.mxu0 0
  %1707 = vmatpush1.bf16.msra.mxu0 %v1687
  %1708 = vmatprep.subr.bf16.mxu0 0
  %1709 = vmatpush1.bf16.msra.mxu0 %v1688
  %1710 = vmatprep.subr.bf16.mxu0 0
  %1711 = vmatpush1.bf16.msra.mxu0 %v1689
  %1712 = vmatprep.subr.bf16.mxu0 0
  %1713 = vmatpush1.bf16.msra.mxu0 %v1690
  %1714 = vmatprep.subr.bf16.mxu0 0
  %1715 = vmatpush1.bf16.msra.mxu0 %v1691
  %1716 = vmatprep.subr.bf16.mxu0 0
  %1717 = vmatpush1.bf16.msra.mxu0 0
  %1718 = vmatprep.subr.bf16.mxu0 0
  %1719 = vmatpush1.bf16.msra.mxu0 0
  %1720 = vmatprep.subr.bf16.mxu0 0
  %1721 = vmatpush1.bf16.msra.mxu0 0
  %1722 = vmatprep.subr.bf16.mxu0 0
  %1723 = vmatpush1.bf16.msra.mxu0 0
  %1724 = vmatprep.subr.bf16.mxu0 0
  %1725 = vmatpush1.bf16.msra.mxu0 0
  %1726 = vmatprep.subr.bf16.mxu0 0
  %1727 = vmatpush1.bf16.msra.mxu0 0
  %1728 = vmatprep.subr.bf16.mxu0 0
  %1729 = vmatpush1.bf16.msra.mxu0 0
  %1730 = vmatprep.subr.bf16.mxu0 0
  %1731 = vmatpush1.bf16.msra.mxu0 0
  %1732 = vmatprep.mubr.bf16.mxu0 0
  %1733 = vmatmul.mubr.bf16.gmra.mrb[0].mxu0 %v1467
  %v1734 = vpop.f32.mrb[0].mxu0
  %v1735 = vadd.f32 %v1590, %v1734
  %v1736 = vpop.f32.mrb[0].mxu0
  %v1737 = vpop.f32.mrb[0].mxu0
  %v1738 = vadd.f32 %v1593, %v1737
  %v1739 = vpop.f32.mrb[0].mxu0
  %1740 = vmatprep.mubr.bf16.mxu0 0
  %1741 = vmatmul.mubr.bf16.gmra.mrb[0].mxu0 %v1468
  %v1742 = vpop.f32.mrb[0].mxu0
  %v1743 = vadd.f32 %v1598, %v1742
  %v1744 = vpop.f32.mrb[0].mxu0
  %v1745 = vpop.f32.mrb[0].mxu0
  %v1746 = vadd.f32 %v1601, %v1745
  %v1747 = vpop.f32.mrb[0].mxu0
  %1748 = vmatprep.mubr.bf16.mxu0 0
  %1749 = vmatmul.mubr.bf16.gmra.mrb[0].mxu0 %v1469
  %v1750 = vpop.f32.mrb[0].mxu0
  %v1751 = vadd.f32 %v1606, %v1750
  %v1752 = vpop.f32.mrb[0].mxu0
  %v1753 = vpop.f32.mrb[0].mxu0
  %v1754 = vadd.f32 %v1609, %v1753
  %v1755 = vpop.f32.mrb[0].mxu0
  %1756 = vmatprep.mubr.bf16.mxu0 0
  %1757 = vmatmul.mubr.bf16.gmra.mrb[0].mxu0 %v1470
  %v1758 = vpop.f32.mrb[0].mxu0
  %v1759 = vadd.f32 %v1614, %v1758
  %v1760 = vpop.f32.mrb[0].mxu0
  %v1761 = vpop.f32.mrb[0].mxu0
  %v1762 = vadd.f32 %v1617, %v1761
  %v1763 = vpop.f32.mrb[0].mxu0
  %1764 = vmatprep.mubr.bf16.mxu0 0
  %1765 = vmatmul.mubr.bf16.gmra.mrb[0].mxu0 %v1471
  %v1766 = vpop.f32.mrb[0].mxu0
  %v1767 = vadd.f32 %v1622, %v1766
  %v1768 = vpop.f32.mrb[0].mxu0
  %v1769 = vpop.f32.mrb[0].mxu0
  %v1770 = vadd.f32 %v1625, %v1769
  %v1771 = vpop.f32.mrb[0].mxu0
  %1772 = vmatprep.mubr.bf16.mxu0 0
  %1773 = vmatmul.mubr.bf16.gmra.mrb[0].mxu0 %v1472
  %v1774 = vpop.f32.mrb[0].mxu0
  %v1775 = vadd.f32 %v1630, %v1774
  %v1776 = vpop.f32.mrb[0].mxu0
  %v1777 = vpop.f32.mrb[0].mxu0
  %v1778 = vadd.f32 %v1633, %v1777
  %v1779 = vpop.f32.mrb[0].mxu0
  %1780 = vmatprep.mubr.bf16.mxu0 0
  %1781 = vmatmul.mubr.bf16.gmra.mrb[0].mxu0 %v1473
  %v1782 = vpop.f32.mrb[0].mxu0
  %v1783 = vadd.f32 %v1638, %v1782
  %v1784 = vpop.f32.mrb[0].mxu0
  %v1785 = vpop.f32.mrb[0].mxu0
  %v1786 = vadd.f32 %v1641, %v1785
  %v1787 = vpop.f32.mrb[0].mxu0
  %1788 = vmatprep.mubr.bf16.mxu0 0
  %1789 = vmatmul.mubr.bf16.gmra.mrb[0].mxu0 %v1474
  %v1790 = vpop.f32.mrb[0].mxu0
  %v1791 = vadd.f32 %v1646, %v1790
  %v1792 = vpop.f32.mrb[0].mxu0
  %v1793 = vpop.f32.mrb[0].mxu0
  %v1794 = vadd.f32 %v1649, %v1793
  %v1795 = vpop.f32.mrb[0].mxu0
  %1796 = vdwg.mxu0
  %v1797 = vld [vmem:[%s10] sm:$0x1]
  %v1799 = vlaneseq
  %v1800 = vshrl.u32 %v1799, 7
  %v1801 = vsub.s32 0, %v1800
  %v1802 = vrot.slane %v1797, %v1801
  %v1804 = vadd.f32 %v1735, %v1802
  %v1805 = vadd.f32 %v1738, %v1802
  %v1806 = vadd.f32 %v1743, %v1802
  %v1807 = vadd.f32 %v1746, %v1802
  %v1808 = vadd.f32 %v1751, %v1802
  %v1809 = vadd.f32 %v1754, %v1802
  %v1810 = vadd.f32 %v1759, %v1802
  %v1811 = vadd.f32 %v1762, %v1802
  %v1812 = vadd.f32 %v1767, %v1802
  %v1813 = vadd.f32 %v1770, %v1802
  %v1814 = vadd.f32 %v1775, %v1802
  %v1815 = vadd.f32 %v1778, %v1802
  %v1816 = vadd.f32 %v1783, %v1802
  %v1817 = vadd.f32 %v1786, %v1802
  %v1818 = vadd.f32 %v1791, %v1802
  %v1819 = vadd.f32 %v1794, %v1802
  %v1820 = vmax.f32 %v1804, 0.0
  %v1821 = vmax.f32 %v1805, 0.0
  %v1822 = vmax.f32 %v1806, 0.0
  %v1823 = vmax.f32 %v1807, 0.0
  %v1824 = vmax.f32 %v1808, 0.0
  %v1825 = vmax.f32 %v1809, 0.0
  %v1826 = vmax.f32 %v1810, 0.0
  %v1827 = vmax.f32 %v1811, 0.0
  %v1828 = vmax.f32 %v1812, 0.0
  %v1829 = vmax.f32 %v1813, 0.0
  %v1830 = vmax.f32 %v1814, 0.0
  %v1831 = vmax.f32 %v1815, 0.0
  %v1832 = vmax.f32 %v1816, 0.0
  %v1833 = vmax.f32 %v1817, 0.0
  %v1834 = vmax.f32 %v1818, 0.0
  %v1835 = vmax.f32 %v1819, 0.0
  %v1836 = vld [vmem:[%s12] sm:$0x1]
  %v1838 = vlaneseq
  %v1839 = vshrl.u32 %v1838, 7
  %v1840 = vsub.s32 0, %v1839
  %v1841 = vrot.slane %v1836, %v1840
  %v1843 = vmul.f32 %v1820, %v1841
  %v1844 = vmul.f32 %v1821, %v1841
  %v1845 = vmul.f32 %v1822, %v1841
  %v1846 = vmul.f32 %v1823, %v1841
  %v1847 = vmul.f32 %v1824, %v1841
  %v1848 = vmul.f32 %v1825, %v1841
  %v1849 = vmul.f32 %v1826, %v1841
  %v1850 = vmul.f32 %v1827, %v1841
  %v1851 = vmul.f32 %v1828, %v1841
  %v1852 = vmul.f32 %v1829, %v1841
  %v1853 = vmul.f32 %v1830, %v1841
  %v1854 = vmul.f32 %v1831, %v1841
  %v1855 = vmul.f32 %v1832, %v1841
  %v1856 = vmul.f32 %v1833, %v1841
  %v1857 = vmul.f32 %v1834, %v1841
  %v1858 = vmul.f32 %v1835, %v1841
  %v1859 = vld [vmem:[%s13] sm:$0x1]
  %v1861 = vlaneseq
  %v1862 = vshrl.u32 %v1861, 7
  %v1863 = vsub.s32 0, %v1862
  %v1864 = vrot.slane %v1859, %v1863
  %v1866 = vadd.f32 %v1843, %v1864
  %v1867 = vadd.f32 %v1844, %v1864
  %v1868 = vadd.f32 %v1845, %v1864
  %v1869 = vadd.f32 %v1846, %v1864
  %v1870 = vadd.f32 %v1847, %v1864
  %v1871 = vadd.f32 %v1848, %v1864
  %v1872 = vadd.f32 %v1849, %v1864
  %v1873 = vadd.f32 %v1850, %v1864
  %v1874 = vadd.f32 %v1851, %v1864
  %v1875 = vadd.f32 %v1852, %v1864
  %v1876 = vadd.f32 %v1853, %v1864
  %v1877 = vadd.f32 %v1854, %v1864
  %v1878 = vadd.f32 %v1855, %v1864
  %v1879 = vadd.f32 %v1856, %v1864
  %v1880 = vadd.f32 %v1857, %v1864
  %v1881 = vadd.f32 %v1858, %v1864
  %v1882 = vpack.c.bf16 %v1867, %v1866
  %v1883 = vpack.c.bf16 %v1869, %v1868
  %v1884 = vpack.c.bf16 %v1871, %v1870
  %v1885 = vpack.c.bf16 %v1873, %v1872
  %v1886 = vpack.c.bf16 %v1875, %v1874
  %v1887 = vpack.c.bf16 %v1877, %v1876
  %v1888 = vpack.c.bf16 %v1879, %v1878
  %v1889 = vpack.c.bf16 %v1881, %v1880
  %v1890 = vld [vmem:[%s14] sm:$0xf]
  %v1891 = vld [vmem:[%s14 + $0x4] sm:$0xf]
  %v1892 = vld [vmem:[%s14 + $0x8] sm:$0xf]
  %v1893 = vld [vmem:[%s14 + $0xc] sm:$0xf]
  %v1894 = vld [vmem:[%s14 + $0x10] sm:$0xf]
  %v1895 = vld [vmem:[%s14 + $0x14] sm:$0xf]
  %v1896 = vld [vmem:[%s14 + $0x18] sm:$0xf]
  %v1897 = vld [vmem:[%s14 + $0x1c] sm:$0xf]
  %v1898 = vld [vmem:[%s14 + $0x20] sm:$0xf]
  %v1899 = vld [vmem:[%s14 + $0x24] sm:$0xf]
  %v1900 = vld [vmem:[%s14 + $0x28] sm:$0xf]
  %v1901 = vld [vmem:[%s14 + $0x2c] sm:$0xf]
  %v1902 = vld [vmem:[%s14 + $0x30] sm:$0xf]
  %v1903 = vld [vmem:[%s14 + $0x34] sm:$0xf]
  %v1904 = vld [vmem:[%s14 + $0x38] sm:$0xf]
  %v1905 = vld [vmem:[%s14 + $0x3c] sm:$0xf]
  %v1922 = vunpack.c.l.b16 %v1890
  %v1923 = vunpack.c.l.b16 %v1891
  %v1924 = vunpack.c.l.b16 %v1892
  %v1925 = vunpack.c.l.b16 %v1893
  %v1926 = vunpack.c.l.b16 %v1894
  %v1927 = vunpack.c.l.b16 %v1895
  %v1928 = vunpack.c.l.b16 %v1896
  %v1929 = vunpack.c.l.b16 %v1897
  %v1930 = vunpack.c.l.b16 %v1898
  %v1931 = vunpack.c.l.b16 %v1899
  %v1932 = vunpack.c.l.b16 %v1900
  %v1933 = vunpack.c.l.b16 %v1901
  %v1934 = vunpack.c.l.b16 %v1902
  %v1935 = vunpack.c.l.b16 %v1903
  %v1936 = vunpack.c.l.b16 %v1904
  %v1937 = vunpack.c.l.b16 %v1905
  %v1938 = vpack.c.b16 %v1923, %v1922
  %v1939 = vpack.c.b16 %v1925, %v1924
  %v1940 = vpack.c.b16 %v1927, %v1926
  %v1941 = vpack.c.b16 %v1929, %v1928
  %v1942 = vpack.c.b16 %v1931, %v1930
  %v1943 = vpack.c.b16 %v1933, %v1932
  %v1944 = vpack.c.b16 %v1935, %v1934
  %v1945 = vpack.c.b16 %v1937, %v1936
  %1954 = vmatprep.subr.bf16.mxu0 0
  %1955 = vmatpush1.bf16.msra.mxu0 %v1938
  %1956 = vmatprep.subr.bf16.mxu0 0
  %1957 = vmatpush1.bf16.msra.mxu0 %v1939
  %1958 = vmatprep.subr.bf16.mxu0 0
  %1959 = vmatpush1.bf16.msra.mxu0 %v1940
  %1960 = vmatprep.subr.bf16.mxu0 0
  %1961 = vmatpush1.bf16.msra.mxu0 %v1941
  %1962 = vmatprep.subr.bf16.mxu0 0
  %1963 = vmatpush1.bf16.msra.mxu0 %v1942
  %1964 = vmatprep.subr.bf16.mxu0 0
  %1965 = vmatpush1.bf16.msra.mxu0 %v1943
  %1966 = vmatprep.subr.bf16.mxu0 0
  %1967 = vmatpush1.bf16.msra.mxu0 %v1944
  %1968 = vmatprep.subr.bf16.mxu0 0
  %1969 = vmatpush1.bf16.msra.mxu0 %v1945
  %1970 = vmatprep.subr.bf16.mxu0 0
  %1971 = vmatpush1.bf16.msra.mxu0 0
  %1972 = vmatprep.subr.bf16.mxu0 0
  %1973 = vmatpush1.bf16.msra.mxu0 0
  %1974 = vmatprep.subr.bf16.mxu0 0
  %1975 = vmatpush1.bf16.msra.mxu0 0
  %1976 = vmatprep.subr.bf16.mxu0 0
  %1977 = vmatpush1.bf16.msra.mxu0 0
  %1978 = vmatprep.subr.bf16.mxu0 0
  %1979 = vmatpush1.bf16.msra.mxu0 0
  %1980 = vmatprep.subr.bf16.mxu0 0
  %1981 = vmatpush1.bf16.msra.mxu0 0
  %1982 = vmatprep.subr.bf16.mxu0 0
  %1983 = vmatpush1.bf16.msra.mxu0 0
  %1984 = vmatprep.subr.bf16.mxu0 0
  %1985 = vmatpush1.bf16.msra.mxu0 0
  %1986 = vmatprep.mubr.bf16.mxu0 0
  %1987 = vmatmul.mubr.bf16.gmra.mrb[0].mxu0 %v1882
  %v1988 = vpop.f32.mrb[0].mxu0
  %v1989 = vadd.f32 0.0, %v1988
  %v1990 = vpop.f32.mrb[0].mxu0
  %v1991 = vpop.f32.mrb[0].mxu0
  %v1992 = vadd.f32 0.0, %v1991
  %v1993 = vpop.f32.mrb[0].mxu0
  %1994 = vmatprep.mubr.bf16.mxu0 0
  %1995 = vmatmul.mubr.bf16.gmra.mrb[0].mxu0 %v1883
  %v1996 = vpop.f32.mrb[0].mxu0
  %v1997 = vadd.f32 0.0, %v1996
  %v1998 = vpop.f32.mrb[0].mxu0
  %v1999 = vpop.f32.mrb[0].mxu0
  %v2000 = vadd.f32 0.0, %v1999
  %v2001 = vpop.f32.mrb[0].mxu0
  %2002 = vmatprep.mubr.bf16.mxu0 0
  %2003 = vmatmul.mubr.bf16.gmra.mrb[0].mxu0 %v1884
  %v2004 = vpop.f32.mrb[0].mxu0
  %v2005 = vadd.f32 0.0, %v2004
  %v2006 = vpop.f32.mrb[0].mxu0
  %v2007 = vpop.f32.mrb[0].mxu0
  %v2008 = vadd.f32 0.0, %v2007
  %v2009 = vpop.f32.mrb[0].mxu0
  %2010 = vmatprep.mubr.bf16.mxu0 0
  %2011 = vmatmul.mubr.bf16.gmra.mrb[0].mxu0 %v1885
  %v2012 = vpop.f32.mrb[0].mxu0
  %v2013 = vadd.f32 0.0, %v2012
  %v2014 = vpop.f32.mrb[0].mxu0
  %v2015 = vpop.f32.mrb[0].mxu0
  %v2016 = vadd.f32 0.0, %v2015
  %v2017 = vpop.f32.mrb[0].mxu0
  %2018 = vmatprep.mubr.bf16.mxu0 0
  %2019 = vmatmul.mubr.bf16.gmra.mrb[0].mxu0 %v1886
  %v2020 = vpop.f32.mrb[0].mxu0
  %v2021 = vadd.f32 0.0, %v2020
  %v2022 = vpop.f32.mrb[0].mxu0
  %v2023 = vpop.f32.mrb[0].mxu0
  %v2024 = vadd.f32 0.0, %v2023
  %v2025 = vpop.f32.mrb[0].mxu0
  %2026 = vmatprep.mubr.bf16.mxu0 0
  %2027 = vmatmul.mubr.bf16.gmra.mrb[0].mxu0 %v1887
  %v2028 = vpop.f32.mrb[0].mxu0
  %v2029 = vadd.f32 0.0, %v2028
  %v2030 = vpop.f32.mrb[0].mxu0
  %v2031 = vpop.f32.mrb[0].mxu0
  %v2032 = vadd.f32 0.0, %v2031
  %v2033 = vpop.f32.mrb[0].mxu0
  %2034 = vmatprep.mubr.bf16.mxu0 0
  %2035 = vmatmul.mubr.bf16.gmra.mrb[0].mxu0 %v1888
  %v2036 = vpop.f32.mrb[0].mxu0
  %v2037 = vadd.f32 0.0, %v2036
  %v2038 = vpop.f32.mrb[0].mxu0
  %v2039 = vpop.f32.mrb[0].mxu0
  %v2040 = vadd.f32 0.0, %v2039
  %v2041 = vpop.f32.mrb[0].mxu0
  %2042 = vmatprep.mubr.bf16.mxu0 0
  %2043 = vmatmul.mubr.bf16.gmra.mrb[0].mxu0 %v1889
  %v2044 = vpop.f32.mrb[0].mxu0
  %v2045 = vadd.f32 0.0, %v2044
  %v2046 = vpop.f32.mrb[0].mxu0
  %v2047 = vpop.f32.mrb[0].mxu0
  %v2048 = vadd.f32 0.0, %v2047
  %v2049 = vpop.f32.mrb[0].mxu0
  %2050 = vdwg.mxu0
  %v2051 = vmax.f32 %v1989, 0.0
  %v2052 = vmax.f32 %v1992, 0.0
  %v2053 = vmax.f32 %v1997, 0.0
  %v2054 = vmax.f32 %v2000, 0.0
  %v2055 = vmax.f32 %v2005, 0.0
  %v2056 = vmax.f32 %v2008, 0.0
  %v2057 = vmax.f32 %v2013, 0.0
  %v2058 = vmax.f32 %v2016, 0.0
  %v2059 = vmax.f32 %v2021, 0.0
  %v2060 = vmax.f32 %v2024, 0.0
  %v2061 = vmax.f32 %v2029, 0.0
  %v2062 = vmax.f32 %v2032, 0.0
  %v2063 = vmax.f32 %v2037, 0.0
  %v2064 = vmax.f32 %v2040, 0.0
  %v2065 = vmax.f32 %v2045, 0.0
  %v2066 = vmax.f32 %v2048, 0.0
  %v2067 = vpack.c.bf16 %v2052, %v2051
  %v2068 = vpack.c.bf16 %v2054, %v2053
  %v2069 = vpack.c.bf16 %v2056, %v2055
  %v2070 = vpack.c.bf16 %v2058, %v2057
  %v2071 = vpack.c.bf16 %v2060, %v2059
  %v2072 = vpack.c.bf16 %v2062, %v2061
  %v2073 = vpack.c.bf16 %v2064, %v2063
  %v2074 = vpack.c.bf16 %v2066, %v2065
  %2075 = vst [vmem:[#allocation2] sm:$0xff] 0.0
  %2076 = vst [vmem:[#allocation2 + $0x8] sm:$0xff] 0.0
  %2077 = vst [vmem:[#allocation2 + $0x10] sm:$0xff] 0.0
  %2078 = vst [vmem:[#allocation2 + $0x18] sm:$0xff] 0.0
  %2079 = vst [vmem:[#allocation2 + $0x20] sm:$0xff] 0.0
  %2080 = vst [vmem:[#allocation2 + $0x28] sm:$0xff] 0.0
  %2081 = vst [vmem:[#allocation2 + $0x30] sm:$0xff] 0.0
  %2082 = vst [vmem:[#allocation2 + $0x38] sm:$0xff] 0.0
  %2083 = vst [vmem:[#allocation2 + $0x40] sm:$0xff] 0.0
  %2084 = vst [vmem:[#allocation2 + $0x48] sm:$0xff] 0.0
  %2085 = vst [vmem:[#allocation2 + $0x50] sm:$0xff] 0.0
  %2086 = vst [vmem:[#allocation2 + $0x58] sm:$0xff] 0.0
  %2087 = vst [vmem:[#allocation2 + $0x60] sm:$0xff] 0.0
  %2088 = vst [vmem:[#allocation2 + $0x68] sm:$0xff] 0.0
  %2089 = vst [vmem:[#allocation2 + $0x70] sm:$0xff] 0.0
  %2090 = vst [vmem:[#allocation2 + $0x78] sm:$0xff] 0.0
  %v2091 = vld [vmem:[#allocation3] sm:$0xff]
  %v2092 = vld [vmem:[#allocation3 + $0x8] sm:$0xff]
  %v2093 = vld [vmem:[#allocation3 + $0x10] sm:$0xff]
  %v2094 = vld [vmem:[#allocation3 + $0x18] sm:$0xff]
  %v2095 = vld [vmem:[#allocation3 + $0x20] sm:$0xff]
  %v2096 = vld [vmem:[#allocation3 + $0x28] sm:$0xff]
  %v2097 = vld [vmem:[#allocation3 + $0x30] sm:$0xff]
  %v2098 = vld [vmem:[#allocation3 + $0x38] sm:$0xff]
  %v2099 = vld [vmem:[%s15] sm:$0xf]
  %v2100 = vld [vmem:[%s15 + $0x4] sm:$0xf]
  %v2101 = vld [vmem:[%s15 + $0x8] sm:$0xf]
  %v2102 = vld [vmem:[%s15 + $0xc] sm:$0xf]
  %v2103 = vld [vmem:[%s15 + $0x10] sm:$0xf]
  %v2104 = vld [vmem:[%s15 + $0x14] sm:$0xf]
  %v2105 = vld [vmem:[%s15 + $0x18] sm:$0xf]
  %v2106 = vld [vmem:[%s15 + $0x1c] sm:$0xf]
  %v2107 = vld [vmem:[%s15 + $0x20] sm:$0xf]
  %v2108 = vld [vmem:[%s15 + $0x24] sm:$0xf]
  %v2109 = vld [vmem:[%s15 + $0x28] sm:$0xf]
  %v2110 = vld [vmem:[%s15 + $0x2c] sm:$0xf]
  %v2111 = vld [vmem:[%s15 + $0x30] sm:$0xf]
  %v2112 = vld [vmem:[%s15 + $0x34] sm:$0xf]
  %v2113 = vld [vmem:[%s15 + $0x38] sm:$0xf]
  %v2114 = vld [vmem:[%s15 + $0x3c] sm:$0xf]
  %v2131 = vunpack.c.l.b16 %v2099
  %v2132 = vunpack.c.l.b16 %v2100
  %v2133 = vunpack.c.l.b16 %v2101
  %v2134 = vunpack.c.l.b16 %v2102
  %v2135 = vunpack.c.l.b16 %v2103
  %v2136 = vunpack.c.l.b16 %v2104
  %v2137 = vunpack.c.l.b16 %v2105
  %v2138 = vunpack.c.l.b16 %v2106
  %v2139 = vunpack.c.l.b16 %v2107
  %v2140 = vunpack.c.l.b16 %v2108
  %v2141 = vunpack.c.l.b16 %v2109
  %v2142 = vunpack.c.l.b16 %v2110
  %v2143 = vunpack.c.l.b16 %v2111
  %v2144 = vunpack.c.l.b16 %v2112
  %v2145 = vunpack.c.l.b16 %v2113
  %v2146 = vunpack.c.l.b16 %v2114
  %v2147 = vpack.c.b16 %v2132, %v2131
  %v2148 = vpack.c.b16 %v2134, %v2133
  %v2149 = vpack.c.b16 %v2136, %v2135
  %v2150 = vpack.c.b16 %v2138, %v2137
  %v2151 = vpack.c.b16 %v2140, %v2139
  %v2152 = vpack.c.b16 %v2142, %v2141
  %v2153 = vpack.c.b16 %v2144, %v2143
  %v2154 = vpack.c.b16 %v2146, %v2145
  %2163 = vmatprep.subr.bf16.mxu0 0
  %2164 = vmatpush1.bf16.msra.mxu0 %v2147
  %2165 = vmatprep.subr.bf16.mxu0 0
  %2166 = vmatpush1.bf16.msra.mxu0 %v2148
  %2167 = vmatprep.subr.bf16.mxu0 0
  %2168 = vmatpush1.bf16.msra.mxu0 %v2149
  %2169 = vmatprep.subr.bf16.mxu0 0
  %2170 = vmatpush1.bf16.msra.mxu0 %v2150
  %2171 = vmatprep.subr.bf16.mxu0 0
  %2172 = vmatpush1.bf16.msra.mxu0 %v2151
  %2173 = vmatprep.subr.bf16.mxu0 0
  %2174 = vmatpush1.bf16.msra.mxu0 %v2152
  %2175 = vmatprep.subr.bf16.mxu0 0
  %2176 = vmatpush1.bf16.msra.mxu0 %v2153
  %2177 = vmatprep.subr.bf16.mxu0 0
  %2178 = vmatpush1.bf16.msra.mxu0 %v2154
  %2179 = vmatprep.subr.bf16.mxu0 0
  %2180 = vmatpush1.bf16.msra.mxu0 0
  %2181 = vmatprep.subr.bf16.mxu0 0
  %2182 = vmatpush1.bf16.msra.mxu0 0
  %2183 = vmatprep.subr.bf16.mxu0 0
  %2184 = vmatpush1.bf16.msra.mxu0 0
  %2185 = vmatprep.subr.bf16.mxu0 0
  %2186 = vmatpush1.bf16.msra.mxu0 0
  %2187 = vmatprep.subr.bf16.mxu0 0
  %2188 = vmatpush1.bf16.msra.mxu0 0
  %2189 = vmatprep.subr.bf16.mxu0 0
  %2190 = vmatpush1.bf16.msra.mxu0 0
  %2191 = vmatprep.subr.bf16.mxu0 0
  %2192 = vmatpush1.bf16.msra.mxu0 0
  %2193 = vmatprep.subr.bf16.mxu0 0
  %2194 = vmatpush1.bf16.msra.mxu0 0
  %2195 = vmatprep.mubr.bf16.mxu0 0
  %2196 = vmatmul.mubr.bf16.gmra.mrb[0].mxu0 %v2091
  %v2197 = vpop.f32.mrb[0].mxu0
  %v2198 = vadd.f32 0.0, %v2197
  %v2199 = vpop.f32.mrb[0].mxu0
  %v2200 = vpop.f32.mrb[0].mxu0
  %v2201 = vadd.f32 0.0, %v2200
  %v2202 = vpop.f32.mrb[0].mxu0
  %2203 = vmatprep.mubr.bf16.mxu0 0
  %2204 = vmatmul.mubr.bf16.gmra.mrb[0].mxu0 %v2092
  %v2205 = vpop.f32.mrb[0].mxu0
  %v2206 = vadd.f32 0.0, %v2205
  %v2207 = vpop.f32.mrb[0].mxu0
  %v2208 = vpop.f32.mrb[0].mxu0
  %v2209 = vadd.f32 0.0, %v2208
  %v2210 = vpop.f32.mrb[0].mxu0
  %2211 = vmatprep.mubr.bf16.mxu0 0
  %2212 = vmatmul.mubr.bf16.gmra.mrb[0].mxu0 %v2093
  %v2213 = vpop.f32.mrb[0].mxu0
  %v2214 = vadd.f32 0.0, %v2213
  %v2215 = vpop.f32.mrb[0].mxu0
  %v2216 = vpop.f32.mrb[0].mxu0
  %v2217 = vadd.f32 0.0, %v2216
  %v2218 = vpop.f32.mrb[0].mxu0
  %2219 = vmatprep.mubr.bf16.mxu0 0
  %2220 = vmatmul.mubr.bf16.gmra.mrb[0].mxu0 %v2094
  %v2221 = vpop.f32.mrb[0].mxu0
  %v2222 = vadd.f32 0.0, %v2221
  %v2223 = vpop.f32.mrb[0].mxu0
  %v2224 = vpop.f32.mrb[0].mxu0
  %v2225 = vadd.f32 0.0, %v2224
  %v2226 = vpop.f32.mrb[0].mxu0
  %2227 = vmatprep.mubr.bf16.mxu0 0
  %2228 = vmatmul.mubr.bf16.gmra.mrb[0].mxu0 %v2095
  %v2229 = vpop.f32.mrb[0].mxu0
  %v2230 = vadd.f32 0.0, %v2229
  %v2231 = vpop.f32.mrb[0].mxu0
  %v2232 = vpop.f32.mrb[0].mxu0
  %v2233 = vadd.f32 0.0, %v2232
  %v2234 = vpop.f32.mrb[0].mxu0
  %2235 = vmatprep.mubr.bf16.mxu0 0
  %2236 = vmatmul.mubr.bf16.gmra.mrb[0].mxu0 %v2096
  %v2237 = vpop.f32.mrb[0].mxu0
  %v2238 = vadd.f32 0.0, %v2237
  %v2239 = vpop.f32.mrb[0].mxu0
  %v2240 = vpop.f32.mrb[0].mxu0
  %v2241 = vadd.f32 0.0, %v2240
  %v2242 = vpop.f32.mrb[0].mxu0
  %2243 = vmatprep.mubr.bf16.mxu0 0
  %2244 = vmatmul.mubr.bf16.gmra.mrb[0].mxu0 %v2097
  %v2245 = vpop.f32.mrb[0].mxu0
  %v2246 = vadd.f32 0.0, %v2245
  %v2247 = vpop.f32.mrb[0].mxu0
  %v2248 = vpop.f32.mrb[0].mxu0
  %v2249 = vadd.f32 0.0, %v2248
  %v2250 = vpop.f32.mrb[0].mxu0
  %2251 = vmatprep.mubr.bf16.mxu0 0
  %2252 = vmatmul.mubr.bf16.gmra.mrb[0].mxu0 %v2098
  %v2253 = vpop.f32.mrb[0].mxu0
  %v2254 = vadd.f32 0.0, %v2253
  %v2255 = vpop.f32.mrb[0].mxu0
  %v2256 = vpop.f32.mrb[0].mxu0
  %v2257 = vadd.f32 0.0, %v2256
  %v2258 = vpop.f32.mrb[0].mxu0
  %2259 = vdwg.mxu0
  %v2260 = vmax.f32 %v2198, 0.0
  %v2261 = vmax.f32 %v2201, 0.0
  %v2262 = vmax.f32 %v2206, 0.0
  %v2263 = vmax.f32 %v2209, 0.0
  %v2264 = vmax.f32 %v2214, 0.0
  %v2265 = vmax.f32 %v2217, 0.0
  %v2266 = vmax.f32 %v2222, 0.0
  %v2267 = vmax.f32 %v2225, 0.0
  %v2268 = vmax.f32 %v2230, 0.0
  %v2269 = vmax.f32 %v2233, 0.0
  %v2270 = vmax.f32 %v2238, 0.0
  %v2271 = vmax.f32 %v2241, 0.0
  %v2272 = vmax.f32 %v2246, 0.0
  %v2273 = vmax.f32 %v2249, 0.0
  %v2274 = vmax.f32 %v2254, 0.0
  %v2275 = vmax.f32 %v2257, 0.0
  %v2276 = vpack.c.bf16 %v2261, %v2260
  %v2277 = vpack.c.bf16 %v2263, %v2262
  %v2278 = vpack.c.bf16 %v2265, %v2264
  %v2279 = vpack.c.bf16 %v2267, %v2266
  %v2280 = vpack.c.bf16 %v2269, %v2268
  %v2281 = vpack.c.bf16 %v2271, %v2270
  %v2282 = vpack.c.bf16 %v2273, %v2272
  %v2283 = vpack.c.bf16 %v2275, %v2274
  %v2284 = vld [vmem:[%s0] sm:$0x1]
  %v2285 = vlaneseq
  %v2286 = vshrl.u32 %v2285, 7
  %v2287 = vsub.s32 0, %v2286
  %v2288 = vrot.slane %v2284, %v2287
  %vm2289 = vcmp.eq.s32.totalorder %v79, %v2288
  %vm2290 = vcmp.eq.s32.totalorder %v80, %v2288
  %vm2291 = vcmp.eq.s32.totalorder %v81, %v2288
  %vm2292 = vcmp.eq.s32.totalorder %v82, %v2288
  %vm2293 = vcmp.eq.s32.totalorder %v83, %v2288
  %vm2294 = vcmp.eq.s32.totalorder %v84, %v2288
  %vm2295 = vcmp.eq.s32.totalorder %v85, %v2288
  %vm2296 = vcmp.eq.s32.totalorder %v86, %v2288
  %vm2297 = vcmp.eq.s32.totalorder %v87, %v2288
  %vm2298 = vcmp.eq.s32.totalorder %v88, %v2288
  %vm2299 = vcmp.eq.s32.totalorder %v89, %v2288
  %vm2300 = vcmp.eq.s32.totalorder %v90, %v2288
  %vm2301 = vcmp.eq.s32.totalorder %v91, %v2288
  %vm2302 = vcmp.eq.s32.totalorder %v92, %v2288
  %vm2303 = vcmp.eq.s32.totalorder %v93, %v2288
  %vm2304 = vcmp.eq.s32.totalorder %v94, %v2288
  %v2305 = vsel %vm2289, 1, 0
  %v2306 = vsel %vm2290, 1, 0
  %v2307 = vsel %vm2291, 1, 0
  %v2308 = vsel %vm2292, 1, 0
  %v2309 = vsel %vm2293, 1, 0
  %v2310 = vsel %vm2294, 1, 0
  %v2311 = vsel %vm2295, 1, 0
  %v2312 = vsel %vm2296, 1, 0
  %v2313 = vsel %vm2297, 1, 0
  %v2314 = vsel %vm2298, 1, 0
  %v2315 = vsel %vm2299, 1, 0
  %v2316 = vsel %vm2300, 1, 0
  %v2317 = vsel %vm2301, 1, 0
  %v2318 = vsel %vm2302, 1, 0
  %v2319 = vsel %vm2303, 1, 0
  %v2320 = vsel %vm2304, 1, 0
  %v2321 = vcvt.s32.f32 %v2305
  %v2322 = vcvt.s32.f32 %v2306
  %v2323 = vcvt.s32.f32 %v2307
  %v2324 = vcvt.s32.f32 %v2308
  %v2325 = vcvt.s32.f32 %v2309
  %v2326 = vcvt.s32.f32 %v2310
  %v2327 = vcvt.s32.f32 %v2311
  %v2328 = vcvt.s32.f32 %v2312
  %v2329 = vcvt.s32.f32 %v2313
  %v2330 = vcvt.s32.f32 %v2314
  %v2331 = vcvt.s32.f32 %v2315
  %v2332 = vcvt.s32.f32 %v2316
  %v2333 = vcvt.s32.f32 %v2317
  %v2334 = vcvt.s32.f32 %v2318
  %v2335 = vcvt.s32.f32 %v2319
  %v2336 = vcvt.s32.f32 %v2320
  %v2337 = vpack.c.bf16 %v2322, %v2321
  %v2338 = vpack.c.bf16 %v2324, %v2323
  %v2339 = vpack.c.bf16 %v2326, %v2325
  %v2340 = vpack.c.bf16 %v2328, %v2327
  %v2341 = vpack.c.bf16 %v2330, %v2329
  %v2342 = vpack.c.bf16 %v2332, %v2331
  %v2343 = vpack.c.bf16 %v2334, %v2333
  %v2344 = vpack.c.bf16 %v2336, %v2335
  %v2345 = vld [vmem:[#allocation2] sm:$0xff]
  %v2346 = vld [vmem:[#allocation2 + $0x8] sm:$0xff]
  %v2347 = vld [vmem:[#allocation2 + $0x10] sm:$0xff]
  %v2348 = vld [vmem:[#allocation2 + $0x18] sm:$0xff]
  %v2349 = vld [vmem:[#allocation2 + $0x20] sm:$0xff]
  %v2350 = vld [vmem:[#allocation2 + $0x28] sm:$0xff]
  %v2351 = vld [vmem:[#allocation2 + $0x30] sm:$0xff]
  %v2352 = vld [vmem:[#allocation2 + $0x38] sm:$0xff]
  %v2353 = vld [vmem:[#allocation2 + $0x40] sm:$0xff]
  %v2354 = vld [vmem:[#allocation2 + $0x48] sm:$0xff]
  %v2355 = vld [vmem:[#allocation2 + $0x50] sm:$0xff]
  %v2356 = vld [vmem:[#allocation2 + $0x58] sm:$0xff]
  %v2357 = vld [vmem:[#allocation2 + $0x60] sm:$0xff]
  %v2358 = vld [vmem:[#allocation2 + $0x68] sm:$0xff]
  %v2359 = vld [vmem:[#allocation2 + $0x70] sm:$0xff]
  %v2360 = vld [vmem:[#allocation2 + $0x78] sm:$0xff]
  %2361 = vmatprep.subr.bf16.mxu0 0
  %2362 = vmatpush1.bf16.msra.mxu0 %v2276
  %2363 = vmatprep.subr.bf16.mxu0 0
  %2364 = vmatpush1.bf16.msra.mxu0 %v2277
  %2365 = vmatprep.subr.bf16.mxu0 0
  %2366 = vmatpush1.bf16.msra.mxu0 %v2278
  %2367 = vmatprep.subr.bf16.mxu0 0
  %2368 = vmatpush1.bf16.msra.mxu0 %v2279
  %2369 = vmatprep.subr.bf16.mxu0 0
  %2370 = vmatpush1.bf16.msra.mxu0 %v2280
  %2371 = vmatprep.subr.bf16.mxu0 0
  %2372 = vmatpush1.bf16.msra.mxu0 %v2281
  %2373 = vmatprep.subr.bf16.mxu0 0
  %2374 = vmatpush1.bf16.msra.mxu0 %v2282
  %2375 = vmatprep.subr.bf16.mxu0 0
  %2376 = vmatpush1.bf16.msra.mxu0 %v2283
  %2377 = vmatprep.subr.bf16.mxu0 0
  %2378 = vmatpush1.bf16.msra.mxu0 0
  %2379 = vmatprep.subr.bf16.mxu0 0
  %2380 = vmatpush1.bf16.msra.mxu0 0
  %2381 = vmatprep.subr.bf16.mxu0 0
  %2382 = vmatpush1.bf16.msra.mxu0 0
  %2383 = vmatprep.subr.bf16.mxu0 0
  %2384 = vmatpush1.bf16.msra.mxu0 0
  %2385 = vmatprep.subr.bf16.mxu0 0
  %2386 = vmatpush1.bf16.msra.mxu0 0
  %2387 = vmatprep.subr.bf16.mxu0 0
  %2388 = vmatpush1.bf16.msra.mxu0 0
  %2389 = vmatprep.subr.bf16.mxu0 0
  %2390 = vmatpush1.bf16.msra.mxu0 0
  %2391 = vmatprep.subr.bf16.mxu0 0
  %2392 = vmatpush1.bf16.msra.mxu0 0
  %2393 = vmatprep.mubr.bf16.mxu0 0
  %2394 = vmatmul.mubr.bf16.gmra.mrb[0].mxu0 %v2337
  %v2395 = vpop.f32.mrb[0].mxu0
  %v2396 = vadd.f32 0.0, %v2395
  %v2397 = vpop.f32.mrb[0].mxu0
  %v2398 = vpop.f32.mrb[0].mxu0
  %v2399 = vadd.f32 0.0, %v2398
  %v2400 = vpop.f32.mrb[0].mxu0
  %2401 = vmatprep.mubr.bf16.mxu0 0
  %2402 = vmatmul.mubr.bf16.gmra.mrb[0].mxu0 %v2338
  %v2403 = vpop.f32.mrb[0].mxu0
  %v2404 = vadd.f32 0.0, %v2403
  %v2405 = vpop.f32.mrb[0].mxu0
  %v2406 = vpop.f32.mrb[0].mxu0
  %v2407 = vadd.f32 0.0, %v2406
  %v2408 = vpop.f32.mrb[0].mxu0
  %2409 = vmatprep.mubr.bf16.mxu0 0
  %2410 = vmatmul.mubr.bf16.gmra.mrb[0].mxu0 %v2339
  %v2411 = vpop.f32.mrb[0].mxu0
  %v2412 = vadd.f32 0.0, %v2411
  %v2413 = vpop.f32.mrb[0].mxu0
  %v2414 = vpop.f32.mrb[0].mxu0
  %v2415 = vadd.f32 0.0, %v2414
  %v2416 = vpop.f32.mrb[0].mxu0
  %2417 = vmatprep.mubr.bf16.mxu0 0
  %2418 = vmatmul.mubr.bf16.gmra.mrb[0].mxu0 %v2340
  %v2419 = vpop.f32.mrb[0].mxu0
  %v2420 = vadd.f32 0.0, %v2419
  %v2421 = vpop.f32.mrb[0].mxu0
  %v2422 = vpop.f32.mrb[0].mxu0
  %v2423 = vadd.f32 0.0, %v2422
  %v2424 = vpop.f32.mrb[0].mxu0
  %2425 = vmatprep.mubr.bf16.mxu0 0
  %2426 = vmatmul.mubr.bf16.gmra.mrb[0].mxu0 %v2341
  %v2427 = vpop.f32.mrb[0].mxu0
  %v2428 = vadd.f32 0.0, %v2427
  %v2429 = vpop.f32.mrb[0].mxu0
  %v2430 = vpop.f32.mrb[0].mxu0
  %v2431 = vadd.f32 0.0, %v2430
  %v2432 = vpop.f32.mrb[0].mxu0
  %2433 = vmatprep.mubr.bf16.mxu0 0
  %2434 = vmatmul.mubr.bf16.gmra.mrb[0].mxu0 %v2342
  %v2435 = vpop.f32.mrb[0].mxu0
  %v2436 = vadd.f32 0.0, %v2435
  %v2437 = vpop.f32.mrb[0].mxu0
  %v2438 = vpop.f32.mrb[0].mxu0
  %v2439 = vadd.f32 0.0, %v2438
  %v2440 = vpop.f32.mrb[0].mxu0
  %2441 = vmatprep.mubr.bf16.mxu0 0
  %2442 = vmatmul.mubr.bf16.gmra.mrb[0].mxu0 %v2343
  %v2443 = vpop.f32.mrb[0].mxu0
  %v2444 = vadd.f32 0.0, %v2443
  %v2445 = vpop.f32.mrb[0].mxu0
  %v2446 = vpop.f32.mrb[0].mxu0
  %v2447 = vadd.f32 0.0, %v2446
  %v2448 = vpop.f32.mrb[0].mxu0
  %2449 = vmatprep.mubr.bf16.mxu0 0
  %2450 = vmatmul.mubr.bf16.gmra.mrb[0].mxu0 %v2344
  %v2451 = vpop.f32.mrb[0].mxu0
  %v2452 = vadd.f32 0.0, %v2451
  %v2453 = vpop.f32.mrb[0].mxu0
  %v2454 = vpop.f32.mrb[0].mxu0
  %v2455 = vadd.f32 0.0, %v2454
  %v2456 = vpop.f32.mrb[0].mxu0
  %2457 = vdwg.mxu0
  %v2458 = vadd.f32 %v2345, %v2396
  %v2459 = vadd.f32 %v2346, %v2399
  %v2460 = vadd.f32 %v2347, %v2404
  %v2461 = vadd.f32 %v2348, %v2407
  %v2462 = vadd.f32 %v2349, %v2412
  %v2463 = vadd.f32 %v2350, %v2415
  %v2464 = vadd.f32 %v2351, %v2420
  %v2465 = vadd.f32 %v2352, %v2423
  %v2466 = vadd.f32 %v2353, %v2428
  %v2467 = vadd.f32 %v2354, %v2431
  %v2468 = vadd.f32 %v2355, %v2436
  %v2469 = vadd.f32 %v2356, %v2439
  %v2470 = vadd.f32 %v2357, %v2444
  %v2471 = vadd.f32 %v2358, %v2447
  %v2472 = vadd.f32 %v2359, %v2452
  %v2473 = vadd.f32 %v2360, %v2455
  %2474 = vst [vmem:[#allocation2] sm:$0xff] %v2458
  %2475 = vst [vmem:[#allocation2 + $0x8] sm:$0xff] %v2459
  %2476 = vst [vmem:[#allocation2 + $0x10] sm:$0xff] %v2460
  %2477 = vst [vmem:[#allocation2 + $0x18] sm:$0xff] %v2461
  %2478 = vst [vmem:[#allocation2 + $0x20] sm:$0xff] %v2462
  %2479 = vst [vmem:[#allocation2 + $0x28] sm:$0xff] %v2463
  %2480 = vst [vmem:[#allocation2 + $0x30] sm:$0xff] %v2464
  %2481 = vst [vmem:[#allocation2 + $0x38] sm:$0xff] %v2465
  %2482 = vst [vmem:[#allocation2 + $0x40] sm:$0xff] %v2466
  %2483 = vst [vmem:[#allocation2 + $0x48] sm:$0xff] %v2467
  %2484 = vst [vmem:[#allocation2 + $0x50] sm:$0xff] %v2468
  %2485 = vst [vmem:[#allocation2 + $0x58] sm:$0xff] %v2469
  %2486 = vst [vmem:[#allocation2 + $0x60] sm:$0xff] %v2470
  %2487 = vst [vmem:[#allocation2 + $0x68] sm:$0xff] %v2471
  %2488 = vst [vmem:[#allocation2 + $0x70] sm:$0xff] %v2472
  %2489 = vst [vmem:[#allocation2 + $0x78] sm:$0xff] %v2473
  %v2490 = vld [vmem:[#allocation2] sm:$0xff]
  %v2491 = vld [vmem:[#allocation2 + $0x8] sm:$0xff]
  %v2492 = vld [vmem:[#allocation2 + $0x10] sm:$0xff]
  %v2493 = vld [vmem:[#allocation2 + $0x18] sm:$0xff]
  %v2494 = vld [vmem:[#allocation2 + $0x20] sm:$0xff]
  %v2495 = vld [vmem:[#allocation2 + $0x28] sm:$0xff]
  %v2496 = vld [vmem:[#allocation2 + $0x30] sm:$0xff]
  %v2497 = vld [vmem:[#allocation2 + $0x38] sm:$0xff]
  %v2498 = vld [vmem:[#allocation2 + $0x40] sm:$0xff]
  %v2499 = vld [vmem:[#allocation2 + $0x48] sm:$0xff]
  %v2500 = vld [vmem:[#allocation2 + $0x50] sm:$0xff]
  %v2501 = vld [vmem:[#allocation2 + $0x58] sm:$0xff]
  %v2502 = vld [vmem:[#allocation2 + $0x60] sm:$0xff]
  %v2503 = vld [vmem:[#allocation2 + $0x68] sm:$0xff]
  %v2504 = vld [vmem:[#allocation2 + $0x70] sm:$0xff]
  %v2505 = vld [vmem:[#allocation2 + $0x78] sm:$0xff]
  %v2506 = vpack.c.bf16 %v2491, %v2490
  %v2507 = vpack.c.bf16 %v2493, %v2492
  %v2508 = vpack.c.bf16 %v2495, %v2494
  %v2509 = vpack.c.bf16 %v2497, %v2496
  %v2510 = vpack.c.bf16 %v2499, %v2498
  %v2511 = vpack.c.bf16 %v2501, %v2500
  %v2512 = vpack.c.bf16 %v2503, %v2502
  %v2513 = vpack.c.bf16 %v2505, %v2504
  %v2514 = vld [vmem:[%s16] sm:$0xf]
  %v2515 = vld [vmem:[%s16 + $0x4] sm:$0xf]
  %v2516 = vld [vmem:[%s16 + $0x8] sm:$0xf]
  %v2517 = vld [vmem:[%s16 + $0xc] sm:$0xf]
  %v2518 = vld [vmem:[%s16 + $0x10] sm:$0xf]
  %v2519 = vld [vmem:[%s16 + $0x14] sm:$0xf]
  %v2520 = vld [vmem:[%s16 + $0x18] sm:$0xf]
  %v2521 = vld [vmem:[%s16 + $0x1c] sm:$0xf]
  %v2522 = vld [vmem:[%s16 + $0x20] sm:$0xf]
  %v2523 = vld [vmem:[%s16 + $0x24] sm:$0xf]
  %v2524 = vld [vmem:[%s16 + $0x28] sm:$0xf]
  %v2525 = vld [vmem:[%s16 + $0x2c] sm:$0xf]
  %v2526 = vld [vmem:[%s16 + $0x30] sm:$0xf]
  %v2527 = vld [vmem:[%s16 + $0x34] sm:$0xf]
  %v2528 = vld [vmem:[%s16 + $0x38] sm:$0xf]
  %v2529 = vld [vmem:[%s16 + $0x3c] sm:$0xf]
  %v2530 = vld [vmem:[%s17] sm:$0xf]
  %v2531 = vld [vmem:[%s17 + $0x4] sm:$0xf]
  %v2532 = vld [vmem:[%s17 + $0x8] sm:$0xf]
  %v2533 = vld [vmem:[%s17 + $0xc] sm:$0xf]
  %v2534 = vld [vmem:[%s17 + $0x10] sm:$0xf]
  %v2535 = vld [vmem:[%s17 + $0x14] sm:$0xf]
  %v2536 = vld [vmem:[%s17 + $0x18] sm:$0xf]
  %v2537 = vld [vmem:[%s17 + $0x1c] sm:$0xf]
  %v2538 = vld [vmem:[%s17 + $0x20] sm:$0xf]
  %v2539 = vld [vmem:[%s17 + $0x24] sm:$0xf]
  %v2540 = vld [vmem:[%s17 + $0x28] sm:$0xf]
  %v2541 = vld [vmem:[%s17 + $0x2c] sm:$0xf]
  %v2542 = vld [vmem:[%s17 + $0x30] sm:$0xf]
  %v2543 = vld [vmem:[%s17 + $0x34] sm:$0xf]
  %v2544 = vld [vmem:[%s17 + $0x38] sm:$0xf]
  %v2545 = vld [vmem:[%s17 + $0x3c] sm:$0xf]
  %v2562 = vunpack.c.l.b16 %v2530
  %v2563 = vunpack.c.l.b16 %v2531
  %v2564 = vunpack.c.l.b16 %v2532
  %v2565 = vunpack.c.l.b16 %v2533
  %v2566 = vunpack.c.l.b16 %v2534
  %v2567 = vunpack.c.l.b16 %v2535
  %v2568 = vunpack.c.l.b16 %v2536
  %v2569 = vunpack.c.l.b16 %v2537
  %v2570 = vunpack.c.l.b16 %v2538
  %v2571 = vunpack.c.l.b16 %v2539
  %v2572 = vunpack.c.l.b16 %v2540
  %v2573 = vunpack.c.l.b16 %v2541
  %v2574 = vunpack.c.l.b16 %v2542
  %v2575 = vunpack.c.l.b16 %v2543
  %v2576 = vunpack.c.l.b16 %v2544
  %v2577 = vunpack.c.l.b16 %v2545
  %v2578 = vpack.c.b16 %v2563, %v2562
  %v2579 = vpack.c.b16 %v2565, %v2564
  %v2580 = vpack.c.b16 %v2567, %v2566
  %v2581 = vpack.c.b16 %v2569, %v2568
  %v2582 = vpack.c.b16 %v2571, %v2570
  %v2583 = vpack.c.b16 %v2573, %v2572
  %v2584 = vpack.c.b16 %v2575, %v2574
  %v2585 = vpack.c.b16 %v2577, %v2576
  %2594 = vmatprep.subr.bf16.mxu0 0
  %2595 = vmatpush1.bf16.msra.mxu0 %v2578
  %2596 = vmatprep.subr.bf16.mxu0 0
  %2597 = vmatpush1.bf16.msra.mxu0 %v2579
  %2598 = vmatprep.subr.bf16.mxu0 0
  %2599 = vmatpush1.bf16.msra.mxu0 %v2580
  %2600 = vmatprep.subr.bf16.mxu0 0
  %2601 = vmatpush1.bf16.msra.mxu0 %v2581
  %2602 = vmatprep.subr.bf16.mxu0 0
  %2603 = vmatpush1.bf16.msra.mxu0 %v2582
  %2604 = vmatprep.subr.bf16.mxu0 0
  %2605 = vmatpush1.bf16.msra.mxu0 %v2583
  %2606 = vmatprep.subr.bf16.mxu0 0
  %2607 = vmatpush1.bf16.msra.mxu0 %v2584
  %2608 = vmatprep.subr.bf16.mxu0 0
  %2609 = vmatpush1.bf16.msra.mxu0 %v2585
  %2610 = vmatprep.subr.bf16.mxu0 0
  %2611 = vmatpush1.bf16.msra.mxu0 0
  %2612 = vmatprep.subr.bf16.mxu0 0
  %2613 = vmatpush1.bf16.msra.mxu0 0
  %2614 = vmatprep.subr.bf16.mxu0 0
  %2615 = vmatpush1.bf16.msra.mxu0 0
  %2616 = vmatprep.subr.bf16.mxu0 0
  %2617 = vmatpush1.bf16.msra.mxu0 0
  %2618 = vmatprep.subr.bf16.mxu0 0
  %2619 = vmatpush1.bf16.msra.mxu0 0
  %2620 = vmatprep.subr.bf16.mxu0 0
  %2621 = vmatpush1.bf16.msra.mxu0 0
  %2622 = vmatprep.subr.bf16.mxu0 0
  %2623 = vmatpush1.bf16.msra.mxu0 0
  %2624 = vmatprep.subr.bf16.mxu0 0
  %2625 = vmatpush1.bf16.msra.mxu0 0
  %2626 = vmatprep.mubr.bf16.mxu0 0
  %2627 = vmatmul.mubr.bf16.gmra.mrb[0].mxu0 %v2067
  %v2628 = vpop.f32.mrb[0].mxu0
  %v2629 = vadd.f32 0.0, %v2628
  %v2630 = vpop.f32.mrb[0].mxu0
  %v2631 = vpop.f32.mrb[0].mxu0
  %v2632 = vadd.f32 0.0, %v2631
  %v2633 = vpop.f32.mrb[0].mxu0
  %2634 = vmatprep.mubr.bf16.mxu0 0
  %2635 = vmatmul.mubr.bf16.gmra.mrb[0].mxu0 %v2068
  %v2636 = vpop.f32.mrb[0].mxu0
  %v2637 = vadd.f32 0.0, %v2636
  %v2638 = vpop.f32.mrb[0].mxu0
  %v2639 = vpop.f32.mrb[0].mxu0
  %v2640 = vadd.f32 0.0, %v2639
  %v2641 = vpop.f32.mrb[0].mxu0
  %2642 = vmatprep.mubr.bf16.mxu0 0
  %2643 = vmatmul.mubr.bf16.gmra.mrb[0].mxu0 %v2069
  %v2644 = vpop.f32.mrb[0].mxu0
  %v2645 = vadd.f32 0.0, %v2644
  %v2646 = vpop.f32.mrb[0].mxu0
  %v2647 = vpop.f32.mrb[0].mxu0
  %v2648 = vadd.f32 0.0, %v2647
  %v2649 = vpop.f32.mrb[0].mxu0
  %2650 = vmatprep.mubr.bf16.mxu0 0
  %2651 = vmatmul.mubr.bf16.gmra.mrb[0].mxu0 %v2070
  %v2652 = vpop.f32.mrb[0].mxu0
  %v2653 = vadd.f32 0.0, %v2652
  %v2654 = vpop.f32.mrb[0].mxu0
  %v2655 = vpop.f32.mrb[0].mxu0
  %v2656 = vadd.f32 0.0, %v2655
  %v2657 = vpop.f32.mrb[0].mxu0
  %2658 = vmatprep.mubr.bf16.mxu0 0
  %2659 = vmatmul.mubr.bf16.gmra.mrb[0].mxu0 %v2071
  %v2660 = vpop.f32.mrb[0].mxu0
  %v2661 = vadd.f32 0.0, %v2660
  %v2662 = vpop.f32.mrb[0].mxu0
  %v2663 = vpop.f32.mrb[0].mxu0
  %v2664 = vadd.f32 0.0, %v2663
  %v2665 = vpop.f32.mrb[0].mxu0
  %2666 = vmatprep.mubr.bf16.mxu0 0
  %2667 = vmatmul.mubr.bf16.gmra.mrb[0].mxu0 %v2072
  %v2668 = vpop.f32.mrb[0].mxu0
  %v2669 = vadd.f32 0.0, %v2668
  %v2670 = vpop.f32.mrb[0].mxu0
  %v2671 = vpop.f32.mrb[0].mxu0
  %v2672 = vadd.f32 0.0, %v2671
  %v2673 = vpop.f32.mrb[0].mxu0
  %2674 = vmatprep.mubr.bf16.mxu0 0
  %2675 = vmatmul.mubr.bf16.gmra.mrb[0].mxu0 %v2073
  %v2676 = vpop.f32.mrb[0].mxu0
  %v2677 = vadd.f32 0.0, %v2676
  %v2678 = vpop.f32.mrb[0].mxu0
  %v2679 = vpop.f32.mrb[0].mxu0
  %v2680 = vadd.f32 0.0, %v2679
  %v2681 = vpop.f32.mrb[0].mxu0
  %2682 = vmatprep.mubr.bf16.mxu0 0
  %2683 = vmatmul.mubr.bf16.gmra.mrb[0].mxu0 %v2074
  %v2684 = vpop.f32.mrb[0].mxu0
  %v2685 = vadd.f32 0.0, %v2684
  %v2686 = vpop.f32.mrb[0].mxu0
  %v2687 = vpop.f32.mrb[0].mxu0
  %v2688 = vadd.f32 0.0, %v2687
  %v2689 = vpop.f32.mrb[0].mxu0
  %2690 = vdwg.mxu0
  %v2707 = vunpack.c.l.b16 %v2514
  %v2708 = vunpack.c.l.b16 %v2515
  %v2709 = vunpack.c.l.b16 %v2516
  %v2710 = vunpack.c.l.b16 %v2517
  %v2711 = vunpack.c.l.b16 %v2518
  %v2712 = vunpack.c.l.b16 %v2519
  %v2713 = vunpack.c.l.b16 %v2520
  %v2714 = vunpack.c.l.b16 %v2521
  %v2715 = vunpack.c.l.b16 %v2522
  %v2716 = vunpack.c.l.b16 %v2523
  %v2717 = vunpack.c.l.b16 %v2524
  %v2718 = vunpack.c.l.b16 %v2525
  %v2719 = vunpack.c.l.b16 %v2526
  %v2720 = vunpack.c.l.b16 %v2527
  %v2721 = vunpack.c.l.b16 %v2528
  %v2722 = vunpack.c.l.b16 %v2529
  %v2723 = vpack.c.b16 %v2708, %v2707
  %v2724 = vpack.c.b16 %v2710, %v2709
  %v2725 = vpack.c.b16 %v2712, %v2711
  %v2726 = vpack.c.b16 %v2714, %v2713
  %v2727 = vpack.c.b16 %v2716, %v2715
  %v2728 = vpack.c.b16 %v2718, %v2717
  %v2729 = vpack.c.b16 %v2720, %v2719
  %v2730 = vpack.c.b16 %v2722, %v2721
  %2739 = vmatprep.subr.bf16.mxu0 0
  %2740 = vmatpush1.bf16.msra.mxu0 %v2723
  %2741 = vmatprep.subr.bf16.mxu0 0
  %2742 = vmatpush1.bf16.msra.mxu0 %v2724
  %2743 = vmatprep.subr.bf16.mxu0 0
  %2744 = vmatpush1.bf16.msra.mxu0 %v2725
  %2745 = vmatprep.subr.bf16.mxu0 0
  %2746 = vmatpush1.bf16.msra.mxu0 %v2726
  %2747 = vmatprep.subr.bf16.mxu0 0
  %2748 = vmatpush1.bf16.msra.mxu0 %v2727
  %2749 = vmatprep.subr.bf16.mxu0 0
  %2750 = vmatpush1.bf16.msra.mxu0 %v2728
  %2751 = vmatprep.subr.bf16.mxu0 0
  %2752 = vmatpush1.bf16.msra.mxu0 %v2729
  %2753 = vmatprep.subr.bf16.mxu0 0
  %2754 = vmatpush1.bf16.msra.mxu0 %v2730
  %2755 = vmatprep.subr.bf16.mxu0 0
  %2756 = vmatpush1.bf16.msra.mxu0 0
  %2757 = vmatprep.subr.bf16.mxu0 0
  %2758 = vmatpush1.bf16.msra.mxu0 0
  %2759 = vmatprep.subr.bf16.mxu0 0
  %2760 = vmatpush1.bf16.msra.mxu0 0
  %2761 = vmatprep.subr.bf16.mxu0 0
  %2762 = vmatpush1.bf16.msra.mxu0 0
  %2763 = vmatprep.subr.bf16.mxu0 0
  %2764 = vmatpush1.bf16.msra.mxu0 0
  %2765 = vmatprep.subr.bf16.mxu0 0
  %2766 = vmatpush1.bf16.msra.mxu0 0
  %2767 = vmatprep.subr.bf16.mxu0 0
  %2768 = vmatpush1.bf16.msra.mxu0 0
  %2769 = vmatprep.subr.bf16.mxu0 0
  %2770 = vmatpush1.bf16.msra.mxu0 0
  %2771 = vmatprep.mubr.bf16.mxu0 0
  %2772 = vmatmul.mubr.bf16.gmra.mrb[0].mxu0 %v2506
  %v2773 = vpop.f32.mrb[0].mxu0
  %v2774 = vadd.f32 %v2629, %v2773
  %v2775 = vpop.f32.mrb[0].mxu0
  %v2776 = vpop.f32.mrb[0].mxu0
  %v2777 = vadd.f32 %v2632, %v2776
  %v2778 = vpop.f32.mrb[0].mxu0
  %2779 = vmatprep.mubr.bf16.mxu0 0
  %2780 = vmatmul.mubr.bf16.gmra.mrb[0].mxu0 %v2507
  %v2781 = vpop.f32.mrb[0].mxu0
  %v2782 = vadd.f32 %v2637, %v2781
  %v2783 = vpop.f32.mrb[0].mxu0
  %v2784 = vpop.f32.mrb[0].mxu0
  %v2785 = vadd.f32 %v2640, %v2784
  %v2786 = vpop.f32.mrb[0].mxu0
  %2787 = vmatprep.mubr.bf16.mxu0 0
  %2788 = vmatmul.mubr.bf16.gmra.mrb[0].mxu0 %v2508
  %v2789 = vpop.f32.mrb[0].mxu0
  %v2790 = vadd.f32 %v2645, %v2789
  %v2791 = vpop.f32.mrb[0].mxu0
  %v2792 = vpop.f32.mrb[0].mxu0
  %v2793 = vadd.f32 %v2648, %v2792
  %v2794 = vpop.f32.mrb[0].mxu0
  %2795 = vmatprep.mubr.bf16.mxu0 0
  %2796 = vmatmul.mubr.bf16.gmra.mrb[0].mxu0 %v2509
  %v2797 = vpop.f32.mrb[0].mxu0
  %v2798 = vadd.f32 %v2653, %v2797
  %v2799 = vpop.f32.mrb[0].mxu0
  %v2800 = vpop.f32.mrb[0].mxu0
  %v2801 = vadd.f32 %v2656, %v2800
  %v2802 = vpop.f32.mrb[0].mxu0
  %2803 = vmatprep.mubr.bf16.mxu0 0
  %2804 = vmatmul.mubr.bf16.gmra.mrb[0].mxu0 %v2510
  %v2805 = vpop.f32.mrb[0].mxu0
  %v2806 = vadd.f32 %v2661, %v2805
  %v2807 = vpop.f32.mrb[0].mxu0
  %v2808 = vpop.f32.mrb[0].mxu0
  %v2809 = vadd.f32 %v2664, %v2808
  %v2810 = vpop.f32.mrb[0].mxu0
  %2811 = vmatprep.mubr.bf16.mxu0 0
  %2812 = vmatmul.mubr.bf16.gmra.mrb[0].mxu0 %v2511
  %v2813 = vpop.f32.mrb[0].mxu0
  %v2814 = vadd.f32 %v2669, %v2813
  %v2815 = vpop.f32.mrb[0].mxu0
  %v2816 = vpop.f32.mrb[0].mxu0
  %v2817 = vadd.f32 %v2672, %v2816
  %v2818 = vpop.f32.mrb[0].mxu0
  %2819 = vmatprep.mubr.bf16.mxu0 0
  %2820 = vmatmul.mubr.bf16.gmra.mrb[0].mxu0 %v2512
  %v2821 = vpop.f32.mrb[0].mxu0
  %v2822 = vadd.f32 %v2677, %v2821
  %v2823 = vpop.f32.mrb[0].mxu0
  %v2824 = vpop.f32.mrb[0].mxu0
  %v2825 = vadd.f32 %v2680, %v2824
  %v2826 = vpop.f32.mrb[0].mxu0
  %2827 = vmatprep.mubr.bf16.mxu0 0
  %2828 = vmatmul.mubr.bf16.gmra.mrb[0].mxu0 %v2513
  %v2829 = vpop.f32.mrb[0].mxu0
  %v2830 = vadd.f32 %v2685, %v2829
  %v2831 = vpop.f32.mrb[0].mxu0
  %v2832 = vpop.f32.mrb[0].mxu0
  %v2833 = vadd.f32 %v2688, %v2832
  %v2834 = vpop.f32.mrb[0].mxu0
  %2835 = vdwg.mxu0
  %v2836 = vld [vmem:[%s20] sm:$0x1]
  %v2838 = vlaneseq
  %v2839 = vshrl.u32 %v2838, 7
  %v2840 = vsub.s32 0, %v2839
  %v2841 = vrot.slane %v2836, %v2840
  %v2843 = vadd.f32 %v2774, %v2841
  %v2844 = vadd.f32 %v2777, %v2841
  %v2845 = vadd.f32 %v2782, %v2841
  %v2846 = vadd.f32 %v2785, %v2841
  %v2847 = vadd.f32 %v2790, %v2841
  %v2848 = vadd.f32 %v2793, %v2841
  %v2849 = vadd.f32 %v2798, %v2841
  %v2850 = vadd.f32 %v2801, %v2841
  %v2851 = vadd.f32 %v2806, %v2841
  %v2852 = vadd.f32 %v2809, %v2841
  %v2853 = vadd.f32 %v2814, %v2841
  %v2854 = vadd.f32 %v2817, %v2841
  %v2855 = vadd.f32 %v2822, %v2841
  %v2856 = vadd.f32 %v2825, %v2841
  %v2857 = vadd.f32 %v2830, %v2841
  %v2858 = vadd.f32 %v2833, %v2841
  %v2859 = vmax.f32 %v2843, 0.0
  %v2860 = vmax.f32 %v2844, 0.0
  %v2861 = vmax.f32 %v2845, 0.0
  %v2862 = vmax.f32 %v2846, 0.0
  %v2863 = vmax.f32 %v2847, 0.0
  %v2864 = vmax.f32 %v2848, 0.0
  %v2865 = vmax.f32 %v2849, 0.0
  %v2866 = vmax.f32 %v2850, 0.0
  %v2867 = vmax.f32 %v2851, 0.0
  %v2868 = vmax.f32 %v2852, 0.0
  %v2869 = vmax.f32 %v2853, 0.0
  %v2870 = vmax.f32 %v2854, 0.0
  %v2871 = vmax.f32 %v2855, 0.0
  %v2872 = vmax.f32 %v2856, 0.0
  %v2873 = vmax.f32 %v2857, 0.0
  %v2874 = vmax.f32 %v2858, 0.0
  %v2875 = vld [vmem:[%s22] sm:$0x1]
  %v2877 = vlaneseq
  %v2878 = vshrl.u32 %v2877, 7
  %v2879 = vsub.s32 0, %v2878
  %v2880 = vrot.slane %v2875, %v2879
  %v2882 = vmul.f32 %v2859, %v2880
  %v2883 = vmul.f32 %v2860, %v2880
  %v2884 = vmul.f32 %v2861, %v2880
  %v2885 = vmul.f32 %v2862, %v2880
  %v2886 = vmul.f32 %v2863, %v2880
  %v2887 = vmul.f32 %v2864, %v2880
  %v2888 = vmul.f32 %v2865, %v2880
  %v2889 = vmul.f32 %v2866, %v2880
  %v2890 = vmul.f32 %v2867, %v2880
  %v2891 = vmul.f32 %v2868, %v2880
  %v2892 = vmul.f32 %v2869, %v2880
  %v2893 = vmul.f32 %v2870, %v2880
  %v2894 = vmul.f32 %v2871, %v2880
  %v2895 = vmul.f32 %v2872, %v2880
  %v2896 = vmul.f32 %v2873, %v2880
  %v2897 = vmul.f32 %v2874, %v2880
  %v2898 = vld [vmem:[%s23] sm:$0x1]
  %v2900 = vlaneseq
  %v2901 = vshrl.u32 %v2900, 7
  %v2902 = vsub.s32 0, %v2901
  %v2903 = vrot.slane %v2898, %v2902
  %v2905 = vadd.f32 %v2882, %v2903
  %v2906 = vadd.f32 %v2883, %v2903
  %v2907 = vadd.f32 %v2884, %v2903
  %v2908 = vadd.f32 %v2885, %v2903
  %v2909 = vadd.f32 %v2886, %v2903
  %v2910 = vadd.f32 %v2887, %v2903
  %v2911 = vadd.f32 %v2888, %v2903
  %v2912 = vadd.f32 %v2889, %v2903
  %v2913 = vadd.f32 %v2890, %v2903
  %v2914 = vadd.f32 %v2891, %v2903
  %v2915 = vadd.f32 %v2892, %v2903
  %v2916 = vadd.f32 %v2893, %v2903
  %v2917 = vadd.f32 %v2894, %v2903
  %v2918 = vadd.f32 %v2895, %v2903
  %v2919 = vadd.f32 %v2896, %v2903
  %v2920 = vadd.f32 %v2897, %v2903
  %2921 = vst [vmem:[%s24] sm:$0xff] %v2905
  %2922 = vst [vmem:[%s24 + $0x8] sm:$0xff] %v2906
  %2923 = vst [vmem:[%s24 + $0x10] sm:$0xff] %v2907
  %2924 = vst [vmem:[%s24 + $0x18] sm:$0xff] %v2908
  %2925 = vst [vmem:[%s24 + $0x20] sm:$0xff] %v2909
  %2926 = vst [vmem:[%s24 + $0x28] sm:$0xff] %v2910
  %2927 = vst [vmem:[%s24 + $0x30] sm:$0xff] %v2911
  %2928 = vst [vmem:[%s24 + $0x38] sm:$0xff] %v2912
  %2929 = vst [vmem:[%s24 + $0x40] sm:$0xff] %v2913
  %2930 = vst [vmem:[%s24 + $0x48] sm:$0xff] %v2914
  %2931 = vst [vmem:[%s24 + $0x50] sm:$0xff] %v2915
  %2932 = vst [vmem:[%s24 + $0x58] sm:$0xff] %v2916
  %2933 = vst [vmem:[%s24 + $0x60] sm:$0xff] %v2917
  %2934 = vst [vmem:[%s24 + $0x68] sm:$0xff] %v2918
  %2935 = vst [vmem:[%s24 + $0x70] sm:$0xff] %v2919
  %2936 = vst [vmem:[%s24 + $0x78] sm:$0xff] %v2920
  // Predicated region
  $region98: #{gnn_encoder_forward.1} parent=0 // pred_check
    _
  $region99: #{gnn_encoder_forward.1} parent=0 // pred_check_branch
    %2938 = sbr.rel (0) target = $region101
  $region100: #{gnn_encoder_forward.1} parent=0 // pred_region
    _
  $region101: #{gnn_encoder_forward.1} parent=0 // pred_fallthru
    _
  // Predicated region
  $region102: #{gnn_encoder_forward.1} parent=0 // pred_check
    _
  $region103: #{gnn_encoder_forward.1} parent=0 // pred_check_branch
    %2940 = sbr.rel (0) target = $region105
  $region104: #{gnn_encoder_forward.1} parent=0 // pred_region
    _
  $region105: #{gnn_encoder_forward.1} parent=0 // pred_fallthru
    _

</llo_original>
